<compile_context>
chip_gen: v7x
topology: tpu7x:2x2x1
jax: 0.10.0
libtpu: 0.0.40
codegen_flags: <defaults>
</compile_context>

<pallas_src>
import functools

import numpy as np
import jax
import jax.numpy as jnp
from jax.experimental import pallas as pl
from jax.experimental.pallas import tpu as pltpu

TILE_B = 8  # images processed per grid step


# -----------------------------------------------------------------------------
# Fused kernel: one grid step runs TILE_B images end-to-end entirely in VMEM.
# -----------------------------------------------------------------------------
def _net_kernel(x_ref, cw1_ref, cb1_ref, p1r_ref, p1l_ref, rsel2_ref,
                cw2_ref, cb2_ref, p2r_ref, p2l_ref, rflat_ref,
                wf1_ref, bf1_ref, wf2_ref, bf2_ref, out_ref):
    tb = x_ref.shape[0]

    def mm(a, b):
        return jnp.dot(a, b, preferred_element_type=jnp.float32)

    # ---- conv1: rows (b, y) in [0, tb*24), lanes (x*10 + c) in [0, 240)
    acc1 = jnp.zeros((tb * 24, 240), jnp.float32)
    for kh in range(5):
        xs = x_ref[:, kh:kh + 24, :].reshape(tb * 24, 28)
        acc1 = acc1 + mm(xs, cw1_ref[kh])
    acc1 = acc1 + cb1_ref[...]

    # ---- maxpool 2x2 + relu (H pool = row-selection matmuls, W = lane-selection)
    hr1 = jnp.maximum(mm(p1r_ref[0], acc1), mm(p1r_ref[1], acc1))          # (tb*12, 240)
    h1 = jnp.maximum(jnp.maximum(mm(hr1, p1l_ref[0]), mm(hr1, p1l_ref[1])), 0.0)
    # h1: (tb*12, 120) == relu(maxpool(conv1)), lanes (x*10 + c)

    # ---- conv2
    # TODO(synk): Dropout2d / F.dropout are stochastic train-time ops; eval-mode
    # (identity) semantics are implemented here.
    acc2 = jnp.zeros((tb * 8, 160), jnp.float32)
    for kh in range(5):
        xs = mm(rsel2_ref[kh], h1)                                         # (tb*8, 120)
        acc2 = acc2 + mm(xs, cw2_ref[kh])
    acc2 = acc2 + cb2_ref[...]

    hr2 = jnp.maximum(mm(p2r_ref[0], acc2), mm(p2r_ref[1], acc2))          # (tb*4, 160)
    h2 = jnp.maximum(jnp.maximum(mm(hr2, p2l_ref[0]), mm(hr2, p2l_ref[1])), 0.0)
    # h2: (tb*4, 80) == relu(maxpool(conv2)), lanes (x*20 + oc)

    # ---- x.view(-1, 320) + fc1 + relu (NCHW flatten folded into wf1 blocks)
    z = jnp.zeros((tb, 50), jnp.float32)
    for i in range(4):
        z = z + mm(mm(rflat_ref[i], h2), wf1_ref[i])
    f1 = jnp.maximum(z + bf1_ref[...], 0.0)

    # ---- fc2 + log_softmax(dim=1)
    f2 = mm(f1, wf2_ref[...]) + bf2_ref[...]                               # (tb, 10)
    m = jnp.max(f2, axis=-1, keepdims=True)
    s = f2 - m
    lse = jnp.log(jnp.sum(jnp.exp(s), axis=-1, keepdims=True))
    out_ref[...] = (s - lse).astype(out_ref.dtype)


# -----------------------------------------------------------------------------
# Constant 0/1 selection matrices (depend only on the batch tile size).
# -----------------------------------------------------------------------------
@functools.lru_cache(maxsize=None)
def _selection_matrices(tb):
    def hpool_rows(h):                                   # (2, tb*h/2, tb*h)
        m = np.zeros((2, tb * (h // 2), tb * h), np.float32)
        for b in range(tb):
            for y2 in range(h // 2):
                m[0, b * (h // 2) + y2, b * h + 2 * y2] = 1.0
                m[1, b * (h // 2) + y2, b * h + 2 * y2 + 1] = 1.0
        return m

    def wpool_lanes(w, c):                               # (2, w*c, (w//2)*c)
        m = np.zeros((2, w * c, (w // 2) * c), np.float32)
        for x2 in range(w // 2):
            for ch in range(c):
                m[0, (2 * x2) * c + ch, x2 * c + ch] = 1.0
                m[1, (2 * x2 + 1) * c + ch, x2 * c + ch] = 1.0
        return m

    rsel2 = np.zeros((5, tb * 8, tb * 12), np.float32)   # conv2 row windows
    for kh in range(5):
        for b in range(tb):
            for y in range(8):
                rsel2[kh, b * 8 + y, b * 12 + y + kh] = 1.0

    rflat = np.zeros((4, tb, tb * 4), np.float32)        # flatten row selection
    for i in range(4):
        for b in range(tb):
            rflat[i, b, b * 4 + i] = 1.0

    return (hpool_rows(24), wpool_lanes(24, 10), rsel2,
            hpool_rows(8), wpool_lanes(8, 20), rflat)


def _pack_weights(params):
    w1, b1 = params['w1'], params['b1']          # (10,1,5,5), (10,)
    w2, b2 = params['w2'], params['b2']          # (20,10,5,5), (20,)
    wfc1, bfc1 = params['wfc1'], params['bfc1']  # (50,320), (50,)
    wfc2, bfc2 = params['wfc2'], params['bfc2']  # (10,50), (10,)

    # conv1 as banded matmul over width: cw1[kh, w_in, x*10+c] = w1[c,0,kh,w_in-x]
    band1 = np.stack([np.eye(28, 24, k=-d, dtype=np.float32) for d in range(5)])
    w1k = jnp.transpose(w1[:, 0, :, :], (1, 2, 0))                # (kh, d, c)
    cw1 = jnp.einsum('dwx,kdc->kwxc', band1, w1k).reshape(5, 28, 240)
    cb1 = jnp.tile(b1, 24).reshape(1, 240)

    # conv2: cw2[kh, j*10+ci, x*20+oc] = w2[oc, ci, kh, j-x]
    band2 = np.stack([np.eye(12, 8, k=-d, dtype=np.float32) for d in range(5)])
    w2k = jnp.transpose(w2, (2, 3, 1, 0))                         # (kh, d, ci, oc)
    cw2 = jnp.einsum('djx,kdco->kjcxo', band2, w2k).reshape(5, 120, 160)
    cb2 = jnp.tile(b2, 8).reshape(1, 160)

    # fc1: fold PyTorch NCHW flatten order (k = oc*16 + y2*4 + x2) into weights;
    # kernel flat order is m = y2*80 + x2*20 + oc.
    kidx = np.zeros(320, np.int32)
    for y2 in range(4):
        for x2 in range(4):
            for oc in range(20):
                kidx[y2 * 80 + x2 * 20 + oc] = oc * 16 + y2 * 4 + x2
    wf1 = jnp.transpose(wfc1[:, kidx]).reshape(4, 80, 50)
    bf1 = bfc1.reshape(1, 50)
    wf2 = jnp.transpose(wfc2)                                     # (50, 10)
    bf2 = bfc2.reshape(1, 10)
    return cw1, cb1, cw2, cb2, wf1, bf1, wf2, bf2


@functools.partial(jax.jit, static_argnames=('tile_b',))
def net_forward(x, params, tile_b=TILE_B):
    B = x.shape[0]
    x3 = x.reshape(B, 28, 28).astype(jnp.float32)                 # IC == 1
    Bp = ((B + tile_b - 1) // tile_b) * tile_b
    if Bp != B:
        x3 = jnp.concatenate(
            [x3, jnp.zeros((Bp - B, 28, 28), jnp.float32)], axis=0)

    p1r, p1l, rsel2, p2r, p2l, rflat = _selection_matrices(tile_b)
    cw1, cb1, cw2, cb2, wf1, bf1, wf2, bf2 = _pack_weights(params)

    full = lambda a: pl.BlockSpec(a.shape, lambda i, a=a: (0,) * a.ndim)

    out = pl.pallas_call(
        _net_kernel,
        out_shape=jax.ShapeDtypeStruct((Bp, 10), jnp.float32),
        grid=(Bp // tile_b,),
        in_specs=[
            pl.BlockSpec((tile_b, 28, 28), lambda i: (i, 0, 0)),
            full(cw1), full(cb1), full(p1r), full(p1l), full(rsel2),
            full(cw2), full(cb2), full(p2r), full(p2l), full(rflat),
            full(wf1), full(bf1), full(wf2), full(bf2),
        ],
        out_specs=pl.BlockSpec((tile_b, 10), lambda i: (i, 0)),
        compiler_params=pltpu.CompilerParams(
            dimension_semantics=("parallel",),
            vmem_limit_bytes=32 * 1024 * 1024),
    )(x3, cw1, cb1, p1r, p1l, rsel2, cw2, cb2, p2r, p2l, rflat,
      wf1, bf1, wf2, bf2)
    return out[:B]


# -----------------------------------------------------------------------------
# Helpers for the self-test
# -----------------------------------------------------------------------------
def init_params(key):
    def uniform(k, shape, fan_in):
        bound = float(fan_in) ** -0.5          # PyTorch default-init-like
        return jax.random.uniform(k, shape, jnp.float32, -bound, bound)
    ks = jax.random.split(key, 8)
    return dict(
        w1=uniform(ks[0], (10, 1, 5, 5), 25),   b1=uniform(ks[1], (10,), 25),
        w2=uniform(ks[2], (20, 10, 5, 5), 250), b2=uniform(ks[3], (20,), 250),
        wfc1=uniform(ks[4], (50, 320), 320),    bfc1=uniform(ks[5], (50,), 320),
        wfc2=uniform(ks[6], (10, 50), 50),      bfc2=uniform(ks[7], (10,), 50),
    )


def _reference_forward(x, params):
    def conv(inp, w, b):
        out = jax.lax.conv_general_dilated(
            inp, w, window_strides=(1, 1), padding='VALID',
            dimension_numbers=('NCHW', 'OIHW', 'NCHW'))
        return out + b[None, :, None, None]

    def pool_relu(inp):
        B, C, H, W = inp.shape
        r = inp.reshape(B, C, H // 2, 2, W // 2, 2).max(axis=(3, 5))
        return jnp.maximum(r, 0.0)

    h = pool_relu(conv(x, params['w1'], params['b1']))
    h = pool_relu(conv(h, params['w2'], params['b2']))
    flat = h.reshape(x.shape[0], 320)
    f1 = jnp.maximum(flat @ params['wfc1'].T + params['bfc1'], 0.0)
    f2 = f1 @ params['wfc2'].T + params['bfc2']
    return jax.nn.log_softmax(f2, axis=-1)


if __name__ == "__main__":
    key = jax.random.PRNGKey(0)
    kx, kp = jax.random.split(key)
    x = jax.random.normal(kx, (2, 1, 28, 28), jnp.float32)   # MNIST-shaped input
    params = init_params(kp)

    out = jax.block_until_ready(net_forward(x, params))
    assert out.shape == (2, 10) and out.dtype == jnp.float32

    # rows of log_softmax must exp-sum to 1
    assert bool(jnp.allclose(jnp.sum(jnp.exp(out), axis=-1), 1.0, atol=1e-4))

    # numerical check against a plain-XLA reference of the same forward pass
    ref = _reference_forward(x, params)
    assert bool(jnp.allclose(out, ref, rtol=2e-2, atol=2e-2)), \
        float(jnp.max(jnp.abs(out - ref)))

    print("KERNEL_OK")
</pallas_src>

<mosaic_0001>
module attributes {stable_mosaic.version = 11 : i64} {
  func.func @_net_kernel(%arg0: i32, %arg1: memref<8x28x28xf32, #tpu.memory_space<vmem>>, %arg2: memref<5x28x240xf32, #tpu.memory_space<vmem>>, %arg3: memref<1x240xf32, #tpu.memory_space<vmem>>, %arg4: memref<2x96x192xf32, #tpu.memory_space<vmem>>, %arg5: memref<2x240x120xf32, #tpu.memory_space<vmem>>, %arg6: memref<5x64x96xf32, #tpu.memory_space<vmem>>, %arg7: memref<5x120x160xf32, #tpu.memory_space<vmem>>, %arg8: memref<1x160xf32, #tpu.memory_space<vmem>>, %arg9: memref<2x32x64xf32, #tpu.memory_space<vmem>>, %arg10: memref<2x160x80xf32, #tpu.memory_space<vmem>>, %arg11: memref<4x8x32xf32, #tpu.memory_space<vmem>>, %arg12: memref<4x80x50xf32, #tpu.memory_space<vmem>>, %arg13: memref<1x50xf32, #tpu.memory_space<vmem>>, %arg14: memref<50x10xf32, #tpu.memory_space<vmem>>, %arg15: memref<1x10xf32, #tpu.memory_space<vmem>>, %arg16: memref<8x10xf32, #tpu.memory_space<vmem>>) attributes {dimension_semantics = [#tpu.dimension_semantics<parallel>], iteration_bounds = array<i64: 1>, scalar_prefetch = 0 : i64, scratch_operands = 0 : i64, tpu.core_type = #tpu.core_type<tc>, window_params = [{transform_indices = @transform_0, window_bounds = array<i64: 8, 28, 28>}, {pipeline_mode = #tpu.pipeline_mode<synchronous>, transform_indices = @transform_1, window_bounds = array<i64: 5, 28, 240>}, {pipeline_mode = #tpu.pipeline_mode<synchronous>, transform_indices = @transform_2, window_bounds = array<i64: 1, 240>}, {pipeline_mode = #tpu.pipeline_mode<synchronous>, transform_indices = @transform_3, window_bounds = array<i64: 2, 96, 192>}, {pipeline_mode = #tpu.pipeline_mode<synchronous>, transform_indices = @transform_4, window_bounds = array<i64: 2, 240, 120>}, {pipeline_mode = #tpu.pipeline_mode<synchronous>, transform_indices = @transform_5, window_bounds = array<i64: 5, 64, 96>}, {pipeline_mode = #tpu.pipeline_mode<synchronous>, transform_indices = @transform_6, window_bounds = array<i64: 5, 120, 160>}, {pipeline_mode = #tpu.pipeline_mode<synchronous>, transform_indices = @transform_7, window_bounds = array<i64: 1, 160>}, {pipeline_mode = #tpu.pipeline_mode<synchronous>, transform_indices = @transform_8, window_bounds = array<i64: 2, 32, 64>}, {pipeline_mode = #tpu.pipeline_mode<synchronous>, transform_indices = @transform_9, window_bounds = array<i64: 2, 160, 80>}, {pipeline_mode = #tpu.pipeline_mode<synchronous>, transform_indices = @transform_10, window_bounds = array<i64: 4, 8, 32>}, {pipeline_mode = #tpu.pipeline_mode<synchronous>, transform_indices = @transform_11, window_bounds = array<i64: 4, 80, 50>}, {pipeline_mode = #tpu.pipeline_mode<synchronous>, transform_indices = @transform_12, window_bounds = array<i64: 1, 50>}, {pipeline_mode = #tpu.pipeline_mode<synchronous>, transform_indices = @transform_13, window_bounds = array<i64: 50, 10>}, {pipeline_mode = #tpu.pipeline_mode<synchronous>, transform_indices = @transform_14, window_bounds = array<i64: 1, 10>}, {transform_indices = @transform_15, window_bounds = array<i64: 8, 10>}]} {
    %cst = arith.constant 0.000000e+00 : f32
    %0 = vector.broadcast %cst : f32 to vector<192x240xf32>
    %c0 = arith.constant 0 : index
    %c0_0 = arith.constant 0 : index
    %c0_1 = arith.constant 0 : index
    %1 = vector.load %arg1[%c0, %c0_0, %c0_1] : memref<8x28x28xf32, #tpu.memory_space<vmem>>, vector<8x24x28xf32>
    %2 = vector.shape_cast %1 : vector<8x24x28xf32> to vector<192x28xf32>
    %c0_2 = arith.constant 0 : index
    %c0_3 = arith.constant 0 : index
    %c0_4 = arith.constant 0 : index
    %3 = vector.load %arg2[%c0_2, %c0_3, %c0_4] : memref<5x28x240xf32, #tpu.memory_space<vmem>>, vector<1x28x240xf32>
    %4 = vector.shape_cast %3 : vector<1x28x240xf32> to vector<28x240xf32>
    %cst_5 = arith.constant dense<0.000000e+00> : vector<192x240xf32>
    %5 = tpu.matmul %2, %4, %cst_5 {dimension_numbers = #tpu.dot_dimension_numbers<[1], [0], [0], [1], [0, 0, 1, 1], [], []>} : vector<192x28xf32>, vector<28x240xf32>, vector<192x240xf32> -> vector<192x240xf32>
    %6 = arith.addf %0, %5 : vector<192x240xf32>
    %c0_6 = arith.constant 0 : index
    %c1 = arith.constant 1 : index
    %c0_7 = arith.constant 0 : index
    %7 = vector.load %arg1[%c0_6, %c1, %c0_7] : memref<8x28x28xf32, #tpu.memory_space<vmem>>, vector<8x24x28xf32>
    %8 = vector.shape_cast %7 : vector<8x24x28xf32> to vector<192x28xf32>
    %c1_8 = arith.constant 1 : index
    %c0_9 = arith.constant 0 : index
    %c0_10 = arith.constant 0 : index
    %9 = vector.load %arg2[%c1_8, %c0_9, %c0_10] : memref<5x28x240xf32, #tpu.memory_space<vmem>>, vector<1x28x240xf32>
    %10 = vector.shape_cast %9 : vector<1x28x240xf32> to vector<28x240xf32>
    %cst_11 = arith.constant dense<0.000000e+00> : vector<192x240xf32>
    %11 = tpu.matmul %8, %10, %cst_11 {dimension_numbers = #tpu.dot_dimension_numbers<[1], [0], [0], [1], [0, 0, 1, 1], [], []>} : vector<192x28xf32>, vector<28x240xf32>, vector<192x240xf32> -> vector<192x240xf32>
    %12 = arith.addf %6, %11 : vector<192x240xf32>
    %c0_12 = arith.constant 0 : index
    %c2 = arith.constant 2 : index
    %c0_13 = arith.constant 0 : index
    %13 = vector.load %arg1[%c0_12, %c2, %c0_13] : memref<8x28x28xf32, #tpu.memory_space<vmem>>, vector<8x24x28xf32>
    %14 = vector.shape_cast %13 : vector<8x24x28xf32> to vector<192x28xf32>
    %c2_14 = arith.constant 2 : index
    %c0_15 = arith.constant 0 : index
    %c0_16 = arith.constant 0 : index
    %15 = vector.load %arg2[%c2_14, %c0_15, %c0_16] : memref<5x28x240xf32, #tpu.memory_space<vmem>>, vector<1x28x240xf32>
    %16 = vector.shape_cast %15 : vector<1x28x240xf32> to vector<28x240xf32>
    %cst_17 = arith.constant dense<0.000000e+00> : vector<192x240xf32>
    %17 = tpu.matmul %14, %16, %cst_17 {dimension_numbers = #tpu.dot_dimension_numbers<[1], [0], [0], [1], [0, 0, 1, 1], [], []>} : vector<192x28xf32>, vector<28x240xf32>, vector<192x240xf32> -> vector<192x240xf32>
    %18 = arith.addf %12, %17 : vector<192x240xf32>
    %c0_18 = arith.constant 0 : index
    %c3 = arith.constant 3 : index
    %c0_19 = arith.constant 0 : index
    %19 = vector.load %arg1[%c0_18, %c3, %c0_19] : memref<8x28x28xf32, #tpu.memory_space<vmem>>, vector<8x24x28xf32>
    %20 = vector.shape_cast %19 : vector<8x24x28xf32> to vector<192x28xf32>
    %c3_20 = arith.constant 3 : index
    %c0_21 = arith.constant 0 : index
    %c0_22 = arith.constant 0 : index
    %21 = vector.load %arg2[%c3_20, %c0_21, %c0_22] : memref<5x28x240xf32, #tpu.memory_space<vmem>>, vector<1x28x240xf32>
    %22 = vector.shape_cast %21 : vector<1x28x240xf32> to vector<28x240xf32>
    %cst_23 = arith.constant dense<0.000000e+00> : vector<192x240xf32>
    %23 = tpu.matmul %20, %22, %cst_23 {dimension_numbers = #tpu.dot_dimension_numbers<[1], [0], [0], [1], [0, 0, 1, 1], [], []>} : vector<192x28xf32>, vector<28x240xf32>, vector<192x240xf32> -> vector<192x240xf32>
    %24 = arith.addf %18, %23 : vector<192x240xf32>
    %c0_24 = arith.constant 0 : index
    %c4 = arith.constant 4 : index
    %c0_25 = arith.constant 0 : index
    %25 = vector.load %arg1[%c0_24, %c4, %c0_25] : memref<8x28x28xf32, #tpu.memory_space<vmem>>, vector<8x24x28xf32>
    %26 = vector.shape_cast %25 : vector<8x24x28xf32> to vector<192x28xf32>
    %c4_26 = arith.constant 4 : index
    %c0_27 = arith.constant 0 : index
    %c0_28 = arith.constant 0 : index
    %27 = vector.load %arg2[%c4_26, %c0_27, %c0_28] : memref<5x28x240xf32, #tpu.memory_space<vmem>>, vector<1x28x240xf32>
    %28 = vector.shape_cast %27 : vector<1x28x240xf32> to vector<28x240xf32>
    %cst_29 = arith.constant dense<0.000000e+00> : vector<192x240xf32>
    %29 = tpu.matmul %26, %28, %cst_29 {dimension_numbers = #tpu.dot_dimension_numbers<[1], [0], [0], [1], [0, 0, 1, 1], [], []>} : vector<192x28xf32>, vector<28x240xf32>, vector<192x240xf32> -> vector<192x240xf32>
    %30 = arith.addf %24, %29 : vector<192x240xf32>
    %c0_30 = arith.constant 0 : index
    %c0_31 = arith.constant 0 : index
    %31 = vector.load %arg3[%c0_30, %c0_31] : memref<1x240xf32, #tpu.memory_space<vmem>>, vector<1x240xf32>
    %32 = vector.broadcast %31 : vector<1x240xf32> to vector<192x240xf32>
    %33 = arith.addf %30, %32 : vector<192x240xf32>
    %c0_32 = arith.constant 0 : index
    %c0_33 = arith.constant 0 : index
    %c0_34 = arith.constant 0 : index
    %34 = vector.load %arg4[%c0_32, %c0_33, %c0_34] : memref<2x96x192xf32, #tpu.memory_space<vmem>>, vector<1x96x192xf32>
    %35 = vector.shape_cast %34 : vector<1x96x192xf32> to vector<96x192xf32>
    %cst_35 = arith.constant dense<0.000000e+00> : vector<96x240xf32>
    %36 = tpu.matmul %35, %33, %cst_35 {dimension_numbers = #tpu.dot_dimension_numbers<[1], [0], [0], [1], [0, 0, 1, 1], [], []>} : vector<96x192xf32>, vector<192x240xf32>, vector<96x240xf32> -> vector<96x240xf32>
    %c1_36 = arith.constant 1 : index
    %c0_37 = arith.constant 0 : index
    %c0_38 = arith.constant 0 : index
    %37 = vector.load %arg4[%c1_36, %c0_37, %c0_38] : memref<2x96x192xf32, #tpu.memory_space<vmem>>, vector<1x96x192xf32>
    %38 = vector.shape_cast %37 : vector<1x96x192xf32> to vector<96x192xf32>
    %cst_39 = arith.constant dense<0.000000e+00> : vector<96x240xf32>
    %39 = tpu.matmul %38, %33, %cst_39 {dimension_numbers = #tpu.dot_dimension_numbers<[1], [0], [0], [1], [0, 0, 1, 1], [], []>} : vector<96x192xf32>, vector<192x240xf32>, vector<96x240xf32> -> vector<96x240xf32>
    %40 = arith.maximumf %36, %39 : vector<96x240xf32>
    %c0_40 = arith.constant 0 : index
    %c0_41 = arith.constant 0 : index
    %c0_42 = arith.constant 0 : index
    %41 = vector.load %arg5[%c0_40, %c0_41, %c0_42] : memref<2x240x120xf32, #tpu.memory_space<vmem>>, vector<1x240x120xf32>
    %42 = vector.shape_cast %41 : vector<1x240x120xf32> to vector<240x120xf32>
    %cst_43 = arith.constant dense<0.000000e+00> : vector<96x120xf32>
    %43 = tpu.matmul %40, %42, %cst_43 {dimension_numbers = #tpu.dot_dimension_numbers<[1], [0], [0], [1], [0, 0, 1, 1], [], []>} : vector<96x240xf32>, vector<240x120xf32>, vector<96x120xf32> -> vector<96x120xf32>
    %c1_44 = arith.constant 1 : index
    %c0_45 = arith.constant 0 : index
    %c0_46 = arith.constant 0 : index
    %44 = vector.load %arg5[%c1_44, %c0_45, %c0_46] : memref<2x240x120xf32, #tpu.memory_space<vmem>>, vector<1x240x120xf32>
    %45 = vector.shape_cast %44 : vector<1x240x120xf32> to vector<240x120xf32>
    %cst_47 = arith.constant dense<0.000000e+00> : vector<96x120xf32>
    %46 = tpu.matmul %40, %45, %cst_47 {dimension_numbers = #tpu.dot_dimension_numbers<[1], [0], [0], [1], [0, 0, 1, 1], [], []>} : vector<96x240xf32>, vector<240x120xf32>, vector<96x120xf32> -> vector<96x120xf32>
    %47 = arith.maximumf %43, %46 : vector<96x120xf32>
    %cst_48 = arith.constant 0.000000e+00 : f32
    %48 = vector.broadcast %cst_48 : f32 to vector<96x120xf32>
    %49 = arith.maximumf %47, %48 : vector<96x120xf32>
    %cst_49 = arith.constant 0.000000e+00 : f32
    %50 = vector.broadcast %cst_49 : f32 to vector<64x160xf32>
    %c0_50 = arith.constant 0 : index
    %c0_51 = arith.constant 0 : index
    %c0_52 = arith.constant 0 : index
    %51 = vector.load %arg6[%c0_50, %c0_51, %c0_52] : memref<5x64x96xf32, #tpu.memory_space<vmem>>, vector<1x64x96xf32>
    %52 = vector.shape_cast %51 : vector<1x64x96xf32> to vector<64x96xf32>
    %cst_53 = arith.constant dense<0.000000e+00> : vector<64x120xf32>
    %53 = tpu.matmul %52, %49, %cst_53 {dimension_numbers = #tpu.dot_dimension_numbers<[1], [0], [0], [1], [0, 0, 1, 1], [], []>} : vector<64x96xf32>, vector<96x120xf32>, vector<64x120xf32> -> vector<64x120xf32>
    %c0_54 = arith.constant 0 : index
    %c0_55 = arith.constant 0 : index
    %c0_56 = arith.constant 0 : index
    %54 = vector.load %arg7[%c0_54, %c0_55, %c0_56] : memref<5x120x160xf32, #tpu.memory_space<vmem>>, vector<1x120x160xf32>
    %55 = vector.shape_cast %54 : vector<1x120x160xf32> to vector<120x160xf32>
    %cst_57 = arith.constant dense<0.000000e+00> : vector<64x160xf32>
    %56 = tpu.matmul %53, %55, %cst_57 {dimension_numbers = #tpu.dot_dimension_numbers<[1], [0], [0], [1], [0, 0, 1, 1], [], []>} : vector<64x120xf32>, vector<120x160xf32>, vector<64x160xf32> -> vector<64x160xf32>
    %57 = arith.addf %50, %56 : vector<64x160xf32>
    %c1_58 = arith.constant 1 : index
    %c0_59 = arith.constant 0 : index
    %c0_60 = arith.constant 0 : index
    %58 = vector.load %arg6[%c1_58, %c0_59, %c0_60] : memref<5x64x96xf32, #tpu.memory_space<vmem>>, vector<1x64x96xf32>
    %59 = vector.shape_cast %58 : vector<1x64x96xf32> to vector<64x96xf32>
    %cst_61 = arith.constant dense<0.000000e+00> : vector<64x120xf32>
    %60 = tpu.matmul %59, %49, %cst_61 {dimension_numbers = #tpu.dot_dimension_numbers<[1], [0], [0], [1], [0, 0, 1, 1], [], []>} : vector<64x96xf32>, vector<96x120xf32>, vector<64x120xf32> -> vector<64x120xf32>
    %c1_62 = arith.constant 1 : index
    %c0_63 = arith.constant 0 : index
    %c0_64 = arith.constant 0 : index
    %61 = vector.load %arg7[%c1_62, %c0_63, %c0_64] : memref<5x120x160xf32, #tpu.memory_space<vmem>>, vector<1x120x160xf32>
    %62 = vector.shape_cast %61 : vector<1x120x160xf32> to vector<120x160xf32>
    %cst_65 = arith.constant dense<0.000000e+00> : vector<64x160xf32>
    %63 = tpu.matmul %60, %62, %cst_65 {dimension_numbers = #tpu.dot_dimension_numbers<[1], [0], [0], [1], [0, 0, 1, 1], [], []>} : vector<64x120xf32>, vector<120x160xf32>, vector<64x160xf32> -> vector<64x160xf32>
    %64 = arith.addf %57, %63 : vector<64x160xf32>
    %c2_66 = arith.constant 2 : index
    %c0_67 = arith.constant 0 : index
    %c0_68 = arith.constant 0 : index
    %65 = vector.load %arg6[%c2_66, %c0_67, %c0_68] : memref<5x64x96xf32, #tpu.memory_space<vmem>>, vector<1x64x96xf32>
    %66 = vector.shape_cast %65 : vector<1x64x96xf32> to vector<64x96xf32>
    %cst_69 = arith.constant dense<0.000000e+00> : vector<64x120xf32>
    %67 = tpu.matmul %66, %49, %cst_69 {dimension_numbers = #tpu.dot_dimension_numbers<[1], [0], [0], [1], [0, 0, 1, 1], [], []>} : vector<64x96xf32>, vector<96x120xf32>, vector<64x120xf32> -> vector<64x120xf32>
    %c2_70 = arith.constant 2 : index
    %c0_71 = arith.constant 0 : index
    %c0_72 = arith.constant 0 : index
    %68 = vector.load %arg7[%c2_70, %c0_71, %c0_72] : memref<5x120x160xf32, #tpu.memory_space<vmem>>, vector<1x120x160xf32>
    %69 = vector.shape_cast %68 : vector<1x120x160xf32> to vector<120x160xf32>
    %cst_73 = arith.constant dense<0.000000e+00> : vector<64x160xf32>
    %70 = tpu.matmul %67, %69, %cst_73 {dimension_numbers = #tpu.dot_dimension_numbers<[1], [0], [0], [1], [0, 0, 1, 1], [], []>} : vector<64x120xf32>, vector<120x160xf32>, vector<64x160xf32> -> vector<64x160xf32>
    %71 = arith.addf %64, %70 : vector<64x160xf32>
    %c3_74 = arith.constant 3 : index
    %c0_75 = arith.constant 0 : index
    %c0_76 = arith.constant 0 : index
    %72 = vector.load %arg6[%c3_74, %c0_75, %c0_76] : memref<5x64x96xf32, #tpu.memory_space<vmem>>, vector<1x64x96xf32>
    %73 = vector.shape_cast %72 : vector<1x64x96xf32> to vector<64x96xf32>
    %cst_77 = arith.constant dense<0.000000e+00> : vector<64x120xf32>
    %74 = tpu.matmul %73, %49, %cst_77 {dimension_numbers = #tpu.dot_dimension_numbers<[1], [0], [0], [1], [0, 0, 1, 1], [], []>} : vector<64x96xf32>, vector<96x120xf32>, vector<64x120xf32> -> vector<64x120xf32>
    %c3_78 = arith.constant 3 : index
    %c0_79 = arith.constant 0 : index
    %c0_80 = arith.constant 0 : index
    %75 = vector.load %arg7[%c3_78, %c0_79, %c0_80] : memref<5x120x160xf32, #tpu.memory_space<vmem>>, vector<1x120x160xf32>
    %76 = vector.shape_cast %75 : vector<1x120x160xf32> to vector<120x160xf32>
    %cst_81 = arith.constant dense<0.000000e+00> : vector<64x160xf32>
    %77 = tpu.matmul %74, %76, %cst_81 {dimension_numbers = #tpu.dot_dimension_numbers<[1], [0], [0], [1], [0, 0, 1, 1], [], []>} : vector<64x120xf32>, vector<120x160xf32>, vector<64x160xf32> -> vector<64x160xf32>
    %78 = arith.addf %71, %77 : vector<64x160xf32>
    %c4_82 = arith.constant 4 : index
    %c0_83 = arith.constant 0 : index
    %c0_84 = arith.constant 0 : index
    %79 = vector.load %arg6[%c4_82, %c0_83, %c0_84] : memref<5x64x96xf32, #tpu.memory_space<vmem>>, vector<1x64x96xf32>
    %80 = vector.shape_cast %79 : vector<1x64x96xf32> to vector<64x96xf32>
    %cst_85 = arith.constant dense<0.000000e+00> : vector<64x120xf32>
    %81 = tpu.matmul %80, %49, %cst_85 {dimension_numbers = #tpu.dot_dimension_numbers<[1], [0], [0], [1], [0, 0, 1, 1], [], []>} : vector<64x96xf32>, vector<96x120xf32>, vector<64x120xf32> -> vector<64x120xf32>
    %c4_86 = arith.constant 4 : index
    %c0_87 = arith.constant 0 : index
    %c0_88 = arith.constant 0 : index
    %82 = vector.load %arg7[%c4_86, %c0_87, %c0_88] : memref<5x120x160xf32, #tpu.memory_space<vmem>>, vector<1x120x160xf32>
    %83 = vector.shape_cast %82 : vector<1x120x160xf32> to vector<120x160xf32>
    %cst_89 = arith.constant dense<0.000000e+00> : vector<64x160xf32>
    %84 = tpu.matmul %81, %83, %cst_89 {dimension_numbers = #tpu.dot_dimension_numbers<[1], [0], [0], [1], [0, 0, 1, 1], [], []>} : vector<64x120xf32>, vector<120x160xf32>, vector<64x160xf32> -> vector<64x160xf32>
    %85 = arith.addf %78, %84 : vector<64x160xf32>
    %c0_90 = arith.constant 0 : index
    %c0_91 = arith.constant 0 : index
    %86 = vector.load %arg8[%c0_90, %c0_91] : memref<1x160xf32, #tpu.memory_space<vmem>>, vector<1x160xf32>
    %87 = vector.broadcast %86 : vector<1x160xf32> to vector<64x160xf32>
    %88 = arith.addf %85, %87 : vector<64x160xf32>
    %c0_92 = arith.constant 0 : index
    %c0_93 = arith.constant 0 : index
    %c0_94 = arith.constant 0 : index
    %89 = vector.load %arg9[%c0_92, %c0_93, %c0_94] : memref<2x32x64xf32, #tpu.memory_space<vmem>>, vector<1x32x64xf32>
    %90 = vector.shape_cast %89 : vector<1x32x64xf32> to vector<32x64xf32>
    %cst_95 = arith.constant dense<0.000000e+00> : vector<32x160xf32>
    %91 = tpu.matmul %90, %88, %cst_95 {dimension_numbers = #tpu.dot_dimension_numbers<[1], [0], [0], [1], [0, 0, 1, 1], [], []>} : vector<32x64xf32>, vector<64x160xf32>, vector<32x160xf32> -> vector<32x160xf32>
    %c1_96 = arith.constant 1 : index
    %c0_97 = arith.constant 0 : index
    %c0_98 = arith.constant 0 : index
    %92 = vector.load %arg9[%c1_96, %c0_97, %c0_98] : memref<2x32x64xf32, #tpu.memory_space<vmem>>, vector<1x32x64xf32>
    %93 = vector.shape_cast %92 : vector<1x32x64xf32> to vector<32x64xf32>
    %cst_99 = arith.constant dense<0.000000e+00> : vector<32x160xf32>
    %94 = tpu.matmul %93, %88, %cst_99 {dimension_numbers = #tpu.dot_dimension_numbers<[1], [0], [0], [1], [0, 0, 1, 1], [], []>} : vector<32x64xf32>, vector<64x160xf32>, vector<32x160xf32> -> vector<32x160xf32>
    %95 = arith.maximumf %91, %94 : vector<32x160xf32>
    %c0_100 = arith.constant 0 : index
    %c0_101 = arith.constant 0 : index
    %c0_102 = arith.constant 0 : index
    %96 = vector.load %arg10[%c0_100, %c0_101, %c0_102] : memref<2x160x80xf32, #tpu.memory_space<vmem>>, vector<1x160x80xf32>
    %97 = vector.shape_cast %96 : vector<1x160x80xf32> to vector<160x80xf32>
    %cst_103 = arith.constant dense<0.000000e+00> : vector<32x80xf32>
    %98 = tpu.matmul %95, %97, %cst_103 {dimension_numbers = #tpu.dot_dimension_numbers<[1], [0], [0], [1], [0, 0, 1, 1], [], []>} : vector<32x160xf32>, vector<160x80xf32>, vector<32x80xf32> -> vector<32x80xf32>
    %c1_104 = arith.constant 1 : index
    %c0_105 = arith.constant 0 : index
    %c0_106 = arith.constant 0 : index
    %99 = vector.load %arg10[%c1_104, %c0_105, %c0_106] : memref<2x160x80xf32, #tpu.memory_space<vmem>>, vector<1x160x80xf32>
    %100 = vector.shape_cast %99 : vector<1x160x80xf32> to vector<160x80xf32>
    %cst_107 = arith.constant dense<0.000000e+00> : vector<32x80xf32>
    %101 = tpu.matmul %95, %100, %cst_107 {dimension_numbers = #tpu.dot_dimension_numbers<[1], [0], [0], [1], [0, 0, 1, 1], [], []>} : vector<32x160xf32>, vector<160x80xf32>, vector<32x80xf32> -> vector<32x80xf32>
    %102 = arith.maximumf %98, %101 : vector<32x80xf32>
    %cst_108 = arith.constant 0.000000e+00 : f32
    %103 = vector.broadcast %cst_108 : f32 to vector<32x80xf32>
    %104 = arith.maximumf %102, %103 : vector<32x80xf32>
    %cst_109 = arith.constant 0.000000e+00 : f32
    %105 = vector.broadcast %cst_109 : f32 to vector<8x50xf32>
    %c0_110 = arith.constant 0 : index
    %c0_111 = arith.constant 0 : index
    %c0_112 = arith.constant 0 : index
    %106 = vector.load %arg11[%c0_110, %c0_111, %c0_112] : memref<4x8x32xf32, #tpu.memory_space<vmem>>, vector<1x8x32xf32>
    %107 = vector.shape_cast %106 : vector<1x8x32xf32> to vector<8x32xf32>
    %cst_113 = arith.constant dense<0.000000e+00> : vector<8x80xf32>
    %108 = tpu.matmul %107, %104, %cst_113 {dimension_numbers = #tpu.dot_dimension_numbers<[1], [0], [0], [1], [0, 0, 1, 1], [], []>} : vector<8x32xf32>, vector<32x80xf32>, vector<8x80xf32> -> vector<8x80xf32>
    %c0_114 = arith.constant 0 : index
    %c0_115 = arith.constant 0 : index
    %c0_116 = arith.constant 0 : index
    %109 = vector.load %arg12[%c0_114, %c0_115, %c0_116] : memref<4x80x50xf32, #tpu.memory_space<vmem>>, vector<1x80x50xf32>
    %110 = vector.shape_cast %109 : vector<1x80x50xf32> to vector<80x50xf32>
    %cst_117 = arith.constant dense<0.000000e+00> : vector<8x50xf32>
    %111 = tpu.matmul %108, %110, %cst_117 {dimension_numbers = #tpu.dot_dimension_numbers<[1], [0], [0], [1], [0, 0, 1, 1], [], []>} : vector<8x80xf32>, vector<80x50xf32>, vector<8x50xf32> -> vector<8x50xf32>
    %112 = arith.addf %105, %111 : vector<8x50xf32>
    %c1_118 = arith.constant 1 : index
    %c0_119 = arith.constant 0 : index
    %c0_120 = arith.constant 0 : index
    %113 = vector.load %arg11[%c1_118, %c0_119, %c0_120] : memref<4x8x32xf32, #tpu.memory_space<vmem>>, vector<1x8x32xf32>
    %114 = vector.shape_cast %113 : vector<1x8x32xf32> to vector<8x32xf32>
    %cst_121 = arith.constant dense<0.000000e+00> : vector<8x80xf32>
    %115 = tpu.matmul %114, %104, %cst_121 {dimension_numbers = #tpu.dot_dimension_numbers<[1], [0], [0], [1], [0, 0, 1, 1], [], []>} : vector<8x32xf32>, vector<32x80xf32>, vector<8x80xf32> -> vector<8x80xf32>
    %c1_122 = arith.constant 1 : index
    %c0_123 = arith.constant 0 : index
    %c0_124 = arith.constant 0 : index
    %116 = vector.load %arg12[%c1_122, %c0_123, %c0_124] : memref<4x80x50xf32, #tpu.memory_space<vmem>>, vector<1x80x50xf32>
    %117 = vector.shape_cast %116 : vector<1x80x50xf32> to vector<80x50xf32>
    %cst_125 = arith.constant dense<0.000000e+00> : vector<8x50xf32>
    %118 = tpu.matmul %115, %117, %cst_125 {dimension_numbers = #tpu.dot_dimension_numbers<[1], [0], [0], [1], [0, 0, 1, 1], [], []>} : vector<8x80xf32>, vector<80x50xf32>, vector<8x50xf32> -> vector<8x50xf32>
    %119 = arith.addf %112, %118 : vector<8x50xf32>
    %c2_126 = arith.constant 2 : index
    %c0_127 = arith.constant 0 : index
    %c0_128 = arith.constant 0 : index
    %120 = vector.load %arg11[%c2_126, %c0_127, %c0_128] : memref<4x8x32xf32, #tpu.memory_space<vmem>>, vector<1x8x32xf32>
    %121 = vector.shape_cast %120 : vector<1x8x32xf32> to vector<8x32xf32>
    %cst_129 = arith.constant dense<0.000000e+00> : vector<8x80xf32>
    %122 = tpu.matmul %121, %104, %cst_129 {dimension_numbers = #tpu.dot_dimension_numbers<[1], [0], [0], [1], [0, 0, 1, 1], [], []>} : vector<8x32xf32>, vector<32x80xf32>, vector<8x80xf32> -> vector<8x80xf32>
    %c2_130 = arith.constant 2 : index
    %c0_131 = arith.constant 0 : index
    %c0_132 = arith.constant 0 : index
    %123 = vector.load %arg12[%c2_130, %c0_131, %c0_132] : memref<4x80x50xf32, #tpu.memory_space<vmem>>, vector<1x80x50xf32>
    %124 = vector.shape_cast %123 : vector<1x80x50xf32> to vector<80x50xf32>
    %cst_133 = arith.constant dense<0.000000e+00> : vector<8x50xf32>
    %125 = tpu.matmul %122, %124, %cst_133 {dimension_numbers = #tpu.dot_dimension_numbers<[1], [0], [0], [1], [0, 0, 1, 1], [], []>} : vector<8x80xf32>, vector<80x50xf32>, vector<8x50xf32> -> vector<8x50xf32>
    %126 = arith.addf %119, %125 : vector<8x50xf32>
    %c3_134 = arith.constant 3 : index
    %c0_135 = arith.constant 0 : index
    %c0_136 = arith.constant 0 : index
    %127 = vector.load %arg11[%c3_134, %c0_135, %c0_136] : memref<4x8x32xf32, #tpu.memory_space<vmem>>, vector<1x8x32xf32>
    %128 = vector.shape_cast %127 : vector<1x8x32xf32> to vector<8x32xf32>
    %cst_137 = arith.constant dense<0.000000e+00> : vector<8x80xf32>
    %129 = tpu.matmul %128, %104, %cst_137 {dimension_numbers = #tpu.dot_dimension_numbers<[1], [0], [0], [1], [0, 0, 1, 1], [], []>} : vector<8x32xf32>, vector<32x80xf32>, vector<8x80xf32> -> vector<8x80xf32>
    %c3_138 = arith.constant 3 : index
    %c0_139 = arith.constant 0 : index
    %c0_140 = arith.constant 0 : index
    %130 = vector.load %arg12[%c3_138, %c0_139, %c0_140] : memref<4x80x50xf32, #tpu.memory_space<vmem>>, vector<1x80x50xf32>
    %131 = vector.shape_cast %130 : vector<1x80x50xf32> to vector<80x50xf32>
    %cst_141 = arith.constant dense<0.000000e+00> : vector<8x50xf32>
    %132 = tpu.matmul %129, %131, %cst_141 {dimension_numbers = #tpu.dot_dimension_numbers<[1], [0], [0], [1], [0, 0, 1, 1], [], []>} : vector<8x80xf32>, vector<80x50xf32>, vector<8x50xf32> -> vector<8x50xf32>
    %133 = arith.addf %126, %132 : vector<8x50xf32>
    %c0_142 = arith.constant 0 : index
    %c0_143 = arith.constant 0 : index
    %134 = vector.load %arg13[%c0_142, %c0_143] : memref<1x50xf32, #tpu.memory_space<vmem>>, vector<1x50xf32>
    %135 = vector.broadcast %134 : vector<1x50xf32> to vector<8x50xf32>
    %136 = arith.addf %133, %135 : vector<8x50xf32>
    %cst_144 = arith.constant 0.000000e+00 : f32
    %137 = vector.broadcast %cst_144 : f32 to vector<8x50xf32>
    %138 = arith.maximumf %136, %137 : vector<8x50xf32>
    %c0_145 = arith.constant 0 : index
    %c0_146 = arith.constant 0 : index
    %139 = vector.load %arg14[%c0_145, %c0_146] : memref<50x10xf32, #tpu.memory_space<vmem>>, vector<50x10xf32>
    %cst_147 = arith.constant dense<0.000000e+00> : vector<8x10xf32>
    %140 = tpu.matmul %138, %139, %cst_147 {dimension_numbers = #tpu.dot_dimension_numbers<[1], [0], [0], [1], [0, 0, 1, 1], [], []>} : vector<8x50xf32>, vector<50x10xf32>, vector<8x10xf32> -> vector<8x10xf32>
    %c0_148 = arith.constant 0 : index
    %c0_149 = arith.constant 0 : index
    %141 = vector.load %arg15[%c0_148, %c0_149] : memref<1x10xf32, #tpu.memory_space<vmem>>, vector<1x10xf32>
    %142 = vector.broadcast %141 : vector<1x10xf32> to vector<8x10xf32>
    %143 = arith.addf %140, %142 : vector<8x10xf32>
    %cst_150 = arith.constant dense<0xFF800000> : vector<8xf32>
    %144 = vector.multi_reduction <maximumf>, %143, %cst_150 [1] : vector<8x10xf32> to vector<8xf32>
    %145 = vector.shape_cast %144 : vector<8xf32> to vector<8x1xf32>
    %146 = vector.broadcast %145 : vector<8x1xf32> to vector<8x10xf32>
    %147 = arith.subf %143, %146 : vector<8x10xf32>
    %148 = math.exp %147 : vector<8x10xf32>
    %cst_151 = arith.constant dense<0.000000e+00> : vector<8xf32>
    %149 = vector.multi_reduction <add>, %148, %cst_151 [1] : vector<8x10xf32> to vector<8xf32>
    %150 = vector.shape_cast %149 : vector<8xf32> to vector<8x1xf32>
    %151 = math.log %150 : vector<8x1xf32>
    %152 = vector.broadcast %151 : vector<8x1xf32> to vector<8x10xf32>
    %153 = arith.subf %147, %152 : vector<8x10xf32>
    %c0_152 = arith.constant 0 : index
    %c0_153 = arith.constant 0 : index
    %154 = vector.load %arg16[%c0_152, %c0_153] : memref<8x10xf32, #tpu.memory_space<vmem>>, vector<8x10xf32>
    tpu.vector_store %arg16[%c0_152, %c0_153], %153 {strides = array<i32>} : memref<8x10xf32, #tpu.memory_space<vmem>>, vector<8x10xf32>,
    return
  }
  func.func @transform_0(%arg0: i32) -> (i32, i32, i32) {
    %c0_i32 = arith.constant 0 : i32
    %c0_i32_0 = arith.constant 0 : i32
    %c0_i32_1 = arith.constant 0 : i32
    return %arg0, %c0_i32, %c0_i32_0 : i32, i32, i32
  }
  func.func @transform_1(%arg0: i32) -> (i32, i32, i32) {
    %c0_i32 = arith.constant 0 : i32
    %c0_i32_0 = arith.constant 0 : i32
    %c0_i32_1 = arith.constant 0 : i32
    %c0_i32_2 = arith.constant 0 : i32
    return %c0_i32, %c0_i32_0, %c0_i32_1 : i32, i32, i32
  }
  func.func @transform_2(%arg0: i32) -> (i32, i32) {
    %c0_i32 = arith.constant 0 : i32
    %c0_i32_0 = arith.constant 0 : i32
    %c0_i32_1 = arith.constant 0 : i32
    return %c0_i32, %c0_i32_0 : i32, i32
  }
  func.func @transform_3(%arg0: i32) -> (i32, i32, i32) {
    %c0_i32 = arith.constant 0 : i32
    %c0_i32_0 = arith.constant 0 : i32
    %c0_i32_1 = arith.constant 0 : i32
    %c0_i32_2 = arith.constant 0 : i32
    return %c0_i32, %c0_i32_0, %c0_i32_1 : i32, i32, i32
  }
  func.func @transform_4(%arg0: i32) -> (i32, i32, i32) {
    %c0_i32 = arith.constant 0 : i32
    %c0_i32_0 = arith.constant 0 : i32
    %c0_i32_1 = arith.constant 0 : i32
    %c0_i32_2 = arith.constant 0 : i32
    return %c0_i32, %c0_i32_0, %c0_i32_1 : i32, i32, i32
  }
  func.func @transform_5(%arg0: i32) -> (i32, i32, i32) {
    %c0_i32 = arith.constant 0 : i32
    %c0_i32_0 = arith.constant 0 : i32
    %c0_i32_1 = arith.constant 0 : i32
    %c0_i32_2 = arith.constant 0 : i32
    return %c0_i32, %c0_i32_0, %c0_i32_1 : i32, i32, i32
  }
  func.func @transform_6(%arg0: i32) -> (i32, i32, i32) {
    %c0_i32 = arith.constant 0 : i32
    %c0_i32_0 = arith.constant 0 : i32
    %c0_i32_1 = arith.constant 0 : i32
    %c0_i32_2 = arith.constant 0 : i32
    return %c0_i32, %c0_i32_0, %c0_i32_1 : i32, i32, i32
  }
  func.func @transform_7(%arg0: i32) -> (i32, i32) {
    %c0_i32 = arith.constant 0 : i32
    %c0_i32_0 = arith.constant 0 : i32
    %c0_i32_1 = arith.constant 0 : i32
    return %c0_i32, %c0_i32_0 : i32, i32
  }
  func.func @transform_8(%arg0: i32) -> (i32, i32, i32) {
    %c0_i32 = arith.constant 0 : i32
    %c0_i32_0 = arith.constant 0 : i32
    %c0_i32_1 = arith.constant 0 : i32
    %c0_i32_2 = arith.constant 0 : i32
    return %c0_i32, %c0_i32_0, %c0_i32_1 : i32, i32, i32
  }
  func.func @transform_9(%arg0: i32) -> (i32, i32, i32) {
    %c0_i32 = arith.constant 0 : i32
    %c0_i32_0 = arith.constant 0 : i32
    %c0_i32_1 = arith.constant 0 : i32
    %c0_i32_2 = arith.constant 0 : i32
    return %c0_i32, %c0_i32_0, %c0_i32_1 : i32, i32, i32
  }
  func.func @transform_10(%arg0: i32) -> (i32, i32, i32) {
    %c0_i32 = arith.constant 0 : i32
    %c0_i32_0 = arith.constant 0 : i32
    %c0_i32_1 = arith.constant 0 : i32
    %c0_i32_2 = arith.constant 0 : i32
    return %c0_i32, %c0_i32_0, %c0_i32_1 : i32, i32, i32
  }
  func.func @transform_11(%arg0: i32) -> (i32, i32, i32) {
    %c0_i32 = arith.constant 0 : i32
    %c0_i32_0 = arith.constant 0 : i32
    %c0_i32_1 = arith.constant 0 : i32
    %c0_i32_2 = arith.constant 0 : i32
    return %c0_i32, %c0_i32_0, %c0_i32_1 : i32, i32, i32
  }
  func.func @transform_12(%arg0: i32) -> (i32, i32) {
    %c0_i32 = arith.constant 0 : i32
    %c0_i32_0 = arith.constant 0 : i32
    %c0_i32_1 = arith.constant 0 : i32
    return %c0_i32, %c0_i32_0 : i32, i32
  }
  func.func @transform_13(%arg0: i32) -> (i32, i32) {
    %c0_i32 = arith.constant 0 : i32
    %c0_i32_0 = arith.constant 0 : i32
    %c0_i32_1 = arith.constant 0 : i32
    return %c0_i32, %c0_i32_0 : i32, i32
  }
  func.func @transform_14(%arg0: i32) -> (i32, i32) {
    %c0_i32 = arith.constant 0 : i32
    %c0_i32_0 = arith.constant 0 : i32
    %c0_i32_1 = arith.constant 0 : i32
    return %c0_i32, %c0_i32_0 : i32, i32
  }
  func.func @transform_15(%arg0: i32) -> (i32, i32) {
    %c0_i32 = arith.constant 0 : i32
    %c0_i32_0 = arith.constant 0 : i32
    return %arg0, %c0_i32 : i32, i32
  }
}

</mosaic_0001>

<llo_original>
// kernel: tile.13
$region0: #{tile.13}
  #allocation0 [shape = 's32[1]{0}', space=sflag, size = 0x4, scoped, tag = 'scoped memory for tile.13']
  %s0 = inlined_call_operand.vmem [shape: f32[10], index: 0, kind: input, shape index: {}]
  %s1 = inlined_call_operand.vmem [shape: f32[24,10], index: 1, kind: output, shape index: {}]
  // Predicated region
  $region2: #{tile.13} parent=0 // pred_check
    _
  $region3: #{tile.13} parent=0 // pred_check_branch
    %3 = sbr.rel (0) target = $region5
  $region4: #{tile.13} parent=0 // pred_region
    _
  $region5: #{tile.13} parent=0 // pred_fallthru
    _
  %v4 = vld [vmem:[%s0] ss:$0 sm:$0xff]
  %5 = vst [vmem:[%s1] sm:$0xff] %v4
  %s6 = scalar_lea.vmem %s1, 8
  %7 = vst [vmem:[%s6] sm:$0xff] %v4
  %s8 = scalar_lea.vmem %s1, 16
  %9 = vst [vmem:[%s8] sm:$0xff] %v4

// kernel: tile.14
$region0: #{tile.14}
  %s0 = inlined_call_operand.vmem [shape: f32[24,10], index: 0, kind: input, shape index: {}]
  %s1 = inlined_call_operand.vmem [shape: f32[1,240], index: 1, kind: output, shape index: {}]
  $region1: #{tile.14} parent=0
    #allocation0 [shape = 'u8[8192]{0}', space=vmem, size = 0x2000, scoped, tag = 'scoped mem for output reshape']
    %v2 = vld [vmem:[%s0] sm:$0x1]
    %vm3 = vcmask 80896
    %4 = vst.msk [vmem:[#allocation0] sm:$0x1] %vm3, %v2
    %s5 = scalar_lea.vmem %s0, 12
    %v6 = vld [vmem:[%s5] sm:$0x1]
    %s7 = scalar_lea.vmem %s0, 12
    %v8 = vld [vmem:[%s7] sm:$0x1]
    %vm9 = vcmask 64512
    %v10 = vsel %vm9, %v8, %v6
    %11 = vrot.lane.b32.xlu0 %v10, 120
    %v12 = vpop.permute.xlu0 %11
    %vm13 = vcmask 15360
    %s14 = scalar_lea.vmem [#allocation0], 8
    %15 = vst.msk [vmem:[%s14] sm:$0x1] %vm13, %v12
    %vm16 = vcmask 1048512
    %17 = vst.msk [vmem:[#allocation0] sm:$0x1] %vm16, %v12
    %s18 = scalar_lea.vmem %s0, 11
    %v19 = vld [vmem:[%s18] sm:$0x1]
    %20 = vrot.lane.b32.xlu0 %v19, 110
    %v21 = vpop.permute.xlu0 %20
    %vm22 = vcmask 982896
    %23 = vst.msk [vmem:[#allocation0] sm:$0x1] %vm22, %v21
    %s24 = scalar_lea.vmem %s0, 23
    %v25 = vld [vmem:[%s24] sm:$0x1]
    %26 = vrot.lane.b32.xlu0 %v25, 102
    %v27 = vpop.permute.xlu0 %26
    %vm28 = vcmask 917296
    %s29 = scalar_lea.vmem [#allocation0], 8
    %30 = vst.msk [vmem:[%s29] sm:$0x1] %vm28, %v27
    %s31 = scalar_lea.vmem %s0, 10
    %v32 = vld [vmem:[%s31] sm:$0x1]
    %33 = vrot.lane.b32.xlu0 %v32, 100
    %v34 = vpop.permute.xlu0 %33
    %vm35 = vcmask 900896
    %36 = vst.msk [vmem:[#allocation0] sm:$0x1] %vm35, %v34
    %s37 = scalar_lea.vmem %s0, 22
    %v38 = vld [vmem:[%s37] sm:$0x1]
    %39 = vrot.lane.b32.xlu0 %v38, 92
    %v40 = vpop.permute.xlu0 %39
    %vm41 = vcmask 835296
    %s42 = scalar_lea.vmem [#allocation0], 8
    %43 = vst.msk [vmem:[%s42] sm:$0x1] %vm41, %v40
    %s44 = scalar_lea.vmem %s0, 9
    %v45 = vld [vmem:[%s44] sm:$0x1]
    %46 = vrot.lane.b32.xlu0 %v45, 90
    %v47 = vpop.permute.xlu0 %46
    %vm48 = vcmask 818896
    %49 = vst.msk [vmem:[#allocation0] sm:$0x1] %vm48, %v47
    %s50 = scalar_lea.vmem %s0, 21
    %v51 = vld [vmem:[%s50] sm:$0x1]
    %52 = vrot.lane.b32.xlu0 %v51, 82
    %v53 = vpop.permute.xlu0 %52
    %vm54 = vcmask 753296
    %s55 = scalar_lea.vmem [#allocation0], 8
    %56 = vst.msk [vmem:[%s55] sm:$0x1] %vm54, %v53
    %s57 = scalar_lea.vmem %s0, 8
    %v58 = vld [vmem:[%s57] sm:$0x1]
    %59 = vrot.lane.b32.xlu0 %v58, 80
    %v60 = vpop.permute.xlu0 %59
    %vm61 = vcmask 736896
    %62 = vst.msk [vmem:[#allocation0] sm:$0x1] %vm61, %v60
    %s63 = scalar_lea.vmem %s0, 20
    %v64 = vld [vmem:[%s63] sm:$0x1]
    %65 = vrot.lane.b32.xlu0 %v64, 72
    %v66 = vpop.permute.xlu0 %65
    %vm67 = vcmask 671296
    %s68 = scalar_lea.vmem [#allocation0], 8
    %69 = vst.msk [vmem:[%s68] sm:$0x1] %vm67, %v66
    %s70 = scalar_lea.vmem %s0, 7
    %v71 = vld [vmem:[%s70] sm:$0x1]
    %72 = vrot.lane.b32.xlu0 %v71, 70
    %v73 = vpop.permute.xlu0 %72
    %vm74 = vcmask 654896
    %75 = vst.msk [vmem:[#allocation0] sm:$0x1] %vm74, %v73
    %s76 = scalar_lea.vmem %s0, 19
    %v77 = vld [vmem:[%s76] sm:$0x1]
    %78 = vrot.lane.b32.xlu0 %v77, 62
    %v79 = vpop.permute.xlu0 %78
    %vm80 = vcmask 589296
    %s81 = scalar_lea.vmem [#allocation0], 8
    %82 = vst.msk [vmem:[%s81] sm:$0x1] %vm80, %v79
    %s83 = scalar_lea.vmem %s0, 6
    %v84 = vld [vmem:[%s83] sm:$0x1]
    %85 = vrot.lane.b32.xlu0 %v84, 60
    %v86 = vpop.permute.xlu0 %85
    %vm87 = vcmask 572896
    %88 = vst.msk [vmem:[#allocation0] sm:$0x1] %vm87, %v86
    %s89 = scalar_lea.vmem %s0, 18
    %v90 = vld [vmem:[%s89] sm:$0x1]
    %91 = vrot.lane.b32.xlu0 %v90, 52
    %v92 = vpop.permute.xlu0 %91
    %vm93 = vcmask 507296
    %s94 = scalar_lea.vmem [#allocation0], 8
    %95 = vst.msk [vmem:[%s94] sm:$0x1] %vm93, %v92
    %s96 = scalar_lea.vmem %s0, 5
    %v97 = vld [vmem:[%s96] sm:$0x1]
    %98 = vrot.lane.b32.xlu0 %v97, 50
    %v99 = vpop.permute.xlu0 %98
    %vm100 = vcmask 490896
    %101 = vst.msk [vmem:[#allocation0] sm:$0x1] %vm100, %v99
    %s102 = scalar_lea.vmem %s0, 17
    %v103 = vld [vmem:[%s102] sm:$0x1]
    %104 = vrot.lane.b32.xlu0 %v103, 42
    %v105 = vpop.permute.xlu0 %104
    %vm106 = vcmask 425296
    %s107 = scalar_lea.vmem [#allocation0], 8
    %108 = vst.msk [vmem:[%s107] sm:$0x1] %vm106, %v105
    %s109 = scalar_lea.vmem %s0, 4
    %v110 = vld [vmem:[%s109] sm:$0x1]
    %111 = vrot.lane.b32.xlu0 %v110, 40
    %v112 = vpop.permute.xlu0 %111
    %vm113 = vcmask 408896
    %114 = vst.msk [vmem:[#allocation0] sm:$0x1] %vm113, %v112
    %s115 = scalar_lea.vmem %s0, 16
    %v116 = vld [vmem:[%s115] sm:$0x1]
    %117 = vrot.lane.b32.xlu0 %v116, 32
    %v118 = vpop.permute.xlu0 %117
    %vm119 = vcmask 343296
    %s120 = scalar_lea.vmem [#allocation0], 8
    %121 = vst.msk [vmem:[%s120] sm:$0x1] %vm119, %v118
    %s122 = scalar_lea.vmem %s0, 3
    %v123 = vld [vmem:[%s122] sm:$0x1]
    %124 = vrot.lane.b32.xlu0 %v123, 30
    %v125 = vpop.permute.xlu0 %124
    %vm126 = vcmask 326896
    %127 = vst.msk [vmem:[#allocation0] sm:$0x1] %vm126, %v125
    %s128 = scalar_lea.vmem %s0, 15
    %v129 = vld [vmem:[%s128] sm:$0x1]
    %130 = vrot.lane.b32.xlu0 %v129, 22
    %v131 = vpop.permute.xlu0 %130
    %vm132 = vcmask 261296
    %s133 = scalar_lea.vmem [#allocation0], 8
    %134 = vst.msk [vmem:[%s133] sm:$0x1] %vm132, %v131
    %s135 = scalar_lea.vmem %s0, 2
    %v136 = vld [vmem:[%s135] sm:$0x1]
    %137 = vrot.lane.b32.xlu0 %v136, 20
    %v138 = vpop.permute.xlu0 %137
    %vm139 = vcmask 244896
    %140 = vst.msk [vmem:[#allocation0] sm:$0x1] %vm139, %v138
    %s141 = scalar_lea.vmem %s0, 14
    %v142 = vld [vmem:[%s141] sm:$0x1]
    %143 = vrot.lane.b32.xlu0 %v142, 12
    %v144 = vpop.permute.xlu0 %143
    %vm145 = vcmask 179296
    %s146 = scalar_lea.vmem [#allocation0], 8
    %147 = vst.msk [vmem:[%s146] sm:$0x1] %vm145, %v144
    %s148 = scalar_lea.vmem %s0, 1
    %v149 = vld [vmem:[%s148] sm:$0x1]
    %150 = vrot.lane.b32.xlu0 %v149, 10
    %v151 = vpop.permute.xlu0 %150
    %vm152 = vcmask 162896
    %153 = vst.msk [vmem:[#allocation0] sm:$0x1] %vm152, %v151
    %s154 = scalar_lea.vmem %s0, 13
    %v155 = vld [vmem:[%s154] sm:$0x1]
    %156 = vrot.lane.b32.xlu0 %v155, 2
    %v157 = vpop.permute.xlu0 %156
    %vm158 = vcmask 97296
    %s159 = scalar_lea.vmem [#allocation0], 8
    %160 = vst.msk [vmem:[%s159] sm:$0x1] %vm158, %v157
    %s162 = sshllo.u32 0, 1
    %v164 = vld [vmem:[#allocation0] sm:%s162]
    %s165 = sshllo.u32 0, 1
    %166 = vst [vmem:[%s1] sm:%s165] %v164
    %s167 = scalar_lea.vmem [#allocation0], 8
    %v168 = vld [vmem:[%s167] sm:%s162]
    %s169 = sshllo.u32 0, 1
    %s170 = scalar_lea.vmem %s1, 1
    %171 = vst [vmem:[%s170] sm:%s169] %v168

// kernel: tile.18
$region0: #{tile.18}
  #allocation0 [shape = 's32[1]{0}', space=sflag, size = 0x4, scoped, tag = 'scoped memory for tile.18']
  %s0 = inlined_call_operand.vmem [shape: f32[20], index: 0, kind: input, shape index: {}]
  %s1 = inlined_call_operand.vmem [shape: f32[8,20], index: 1, kind: output, shape index: {}]
  // Predicated region
  $region2: #{tile.18} parent=0 // pred_check
    _
  $region3: #{tile.18} parent=0 // pred_check_branch
    %3 = sbr.rel (0) target = $region5
  $region4: #{tile.18} parent=0 // pred_region
    _
  $region5: #{tile.18} parent=0 // pred_fallthru
    _
  %v4 = vld [vmem:[%s0] ss:$0 sm:$0xff]
  %5 = vst [vmem:[%s1] sm:$0xff] %v4

// kernel: tile.19
$region0: #{tile.19}
  %s0 = inlined_call_operand.vmem [shape: f32[8,20], index: 0, kind: input, shape index: {}]
  %s1 = inlined_call_operand.vmem [shape: f32[1,160], index: 1, kind: output, shape index: {}]
  $region1: #{tile.19} parent=0
    #allocation0 [shape = 'u8[8192]{0}', space=vmem, size = 0x2000, scoped, tag = 'scoped mem for output reshape']
    %v2 = vld [vmem:[%s0] sm:$0x1]
    %vm3 = vcmask 162816
    %4 = vst.msk [vmem:[#allocation0] sm:$0x1] %vm3, %v2
    %s5 = scalar_lea.vmem %s0, 6
    %v6 = vld [vmem:[%s5] sm:$0x1]
    %s7 = scalar_lea.vmem %s0, 6
    %v8 = vld [vmem:[%s7] sm:$0x1]
    %vm9 = vcmask 64512
    %v10 = vsel %vm9, %v8, %v6
    %11 = vrot.lane.b32.xlu0 %v10, 120
    %v12 = vpop.permute.xlu0 %11
    %vm13 = vcmask 97280
    %s14 = scalar_lea.vmem [#allocation0], 8
    %15 = vst.msk [vmem:[%s14] sm:$0x1] %vm13, %v12
    %vm16 = vcmask 1048512
    %17 = vst.msk [vmem:[#allocation0] sm:$0x1] %vm16, %v12
    %s18 = scalar_lea.vmem %s0, 5
    %v19 = vld [vmem:[%s18] sm:$0x1]
    %20 = vrot.lane.b32.xlu0 %v19, 100
    %v21 = vpop.permute.xlu0 %20
    %vm22 = vcmask 982816
    %23 = vst.msk [vmem:[#allocation0] sm:$0x1] %vm22, %v21
    %s24 = scalar_lea.vmem %s0, 4
    %v25 = vld [vmem:[%s24] sm:$0x1]
    %26 = vrot.lane.b32.xlu0 %v25, 80
    %v27 = vpop.permute.xlu0 %26
    %vm28 = vcmask 818816
    %29 = vst.msk [vmem:[#allocation0] sm:$0x1] %vm28, %v27
    %s30 = scalar_lea.vmem %s0, 3
    %v31 = vld [vmem:[%s30] sm:$0x1]
    %32 = vrot.lane.b32.xlu0 %v31, 60
    %v33 = vpop.permute.xlu0 %32
    %vm34 = vcmask 654816
    %35 = vst.msk [vmem:[#allocation0] sm:$0x1] %vm34, %v33
    %s36 = scalar_lea.vmem %s0, 2
    %v37 = vld [vmem:[%s36] sm:$0x1]
    %38 = vrot.lane.b32.xlu0 %v37, 40
    %v39 = vpop.permute.xlu0 %38
    %vm40 = vcmask 490816
    %41 = vst.msk [vmem:[#allocation0] sm:$0x1] %vm40, %v39
    %s42 = scalar_lea.vmem %s0, 1
    %v43 = vld [vmem:[%s42] sm:$0x1]
    %44 = vrot.lane.b32.xlu0 %v43, 20
    %v45 = vpop.permute.xlu0 %44
    %vm46 = vcmask 326816
    %47 = vst.msk [vmem:[#allocation0] sm:$0x1] %vm46, %v45
    %s48 = scalar_lea.vmem %s0, 7
    %v49 = vld [vmem:[%s48] sm:$0x1]
    %50 = vrot.lane.b32.xlu0 %v49, 12
    %v51 = vpop.permute.xlu0 %50
    %vm52 = vcmask 261216
    %s53 = scalar_lea.vmem [#allocation0], 8
    %54 = vst.msk [vmem:[%s53] sm:$0x1] %vm52, %v51
    %s56 = sshllo.u32 0, 1
    %v58 = vld [vmem:[#allocation0] sm:%s56]
    %s59 = sshllo.u32 0, 1
    %60 = vst [vmem:[%s1] sm:%s59] %v58
    %s61 = scalar_lea.vmem [#allocation0], 8
    %v62 = vld [vmem:[%s61] sm:%s56]
    %s63 = sshllo.u32 0, 1
    %s64 = scalar_lea.vmem %s1, 1
    %65 = vst [vmem:[%s64] sm:%s63] %v62

// kernel: net_forward.1
$region0: #{net_forward.1}
  #allocation0 [shape = 'u32[]', space=smem, size = 0x4, offset = 0x4, fixed_abs, tag = 'smem constant byte address 0x4 - core index']
  #allocation1 [shape = 'u32[144,128]{1,0:T(1,128)}', space=vmem, size = 0x12000, scoped, tag = 'internal scratch']
  %s0 = inlined_call_operand.vmem [shape: f32[8,28,28], index: 0, kind: input, shape index: {}]
  %s1 = inlined_call_operand.vmem [shape: f32[5,28,240], index: 1, kind: input, shape index: {}]
  %s2 = inlined_call_operand.vmem [shape: f32[1,240], index: 2, kind: input, shape index: {}]
  %s3 = inlined_call_operand.vmem [shape: f32[2,96,192], index: 3, kind: input, shape index: {}]
  %s4 = inlined_call_operand.vmem [shape: f32[2,240,120], index: 4, kind: input, shape index: {}]
  %s5 = inlined_call_operand.vmem [shape: f32[5,64,96], index: 5, kind: input, shape index: {}]
  %s6 = inlined_call_operand.vmem [shape: f32[5,120,160], index: 6, kind: input, shape index: {}]
  %s7 = inlined_call_operand.vmem [shape: f32[1,160], index: 7, kind: input, shape index: {}]
  %s8 = inlined_call_operand.vmem [shape: f32[2,32,64], index: 8, kind: input, shape index: {}]
  %s9 = inlined_call_operand.vmem [shape: f32[2,160,80], index: 9, kind: input, shape index: {}]
  %s10 = inlined_call_operand.vmem [shape: f32[4,8,32], index: 10, kind: input, shape index: {}]
  %s11 = inlined_call_operand.vmem [shape: f32[4,80,50], index: 11, kind: input, shape index: {}]
  %s12 = inlined_call_operand.vmem [shape: f32[1,50], index: 12, kind: input, shape index: {}]
  %s13 = inlined_call_operand.vmem [shape: f32[50,10], index: 13, kind: input, shape index: {}]
  %s14 = inlined_call_operand.vmem [shape: f32[1,10], index: 14, kind: input, shape index: {}]
  %s15 = inlined_call_operand.vmem [shape: f32[8,10], index: 15, kind: output, shape index: {}]
  %s16 = sld [smem:[#allocation0]]
  $region70: #{net_forward.1} parent=0
    _
  %s18 = ssub.s32 1, %s16
  %s19 = scalar_select 0, %s18, %s16
  // Predicated region
  $region2: #{net_forward.1} parent=0 // pred_check
    _
  $region3: #{net_forward.1} parent=0 // pred_check_branch
    %21 = sbr.rel (0) target = $region5
  $region4: #{net_forward.1} parent=0 // pred_region
    _
  $region5: #{net_forward.1} parent=0 // pred_fallthru
    _
  // Predicated region
  $region6: #{net_forward.1} parent=0 // pred_check
    _
  $region7: #{net_forward.1} parent=0 // pred_check_branch
    %23 = sbr.rel (0) target = $region9
  $region8: #{net_forward.1} parent=0 // pred_region
    _
  $region9: #{net_forward.1} parent=0 // pred_fallthru
    _
  // Predicated region
  $region10: #{net_forward.1} parent=0 // pred_check
    _
  $region11: #{net_forward.1} parent=0 // pred_check_branch
    %25 = sbr.rel (0) target = $region13
  $region12: #{net_forward.1} parent=0 // pred_region
    _
  $region13: #{net_forward.1} parent=0 // pred_fallthru
    _
  // Predicated region
  $region14: #{net_forward.1} parent=0 // pred_check
    _
  $region15: #{net_forward.1} parent=0 // pred_check_branch
    %27 = sbr.rel (0) target = $region17
  $region16: #{net_forward.1} parent=0 // pred_region
    _
  $region17: #{net_forward.1} parent=0 // pred_fallthru
    _
  // Predicated region
  $region18: #{net_forward.1} parent=0 // pred_check
    _
  $region19: #{net_forward.1} parent=0 // pred_check_branch
    %29 = sbr.rel (0) target = $region21
  $region20: #{net_forward.1} parent=0 // pred_region
    _
  $region21: #{net_forward.1} parent=0 // pred_fallthru
    _
  // Predicated region
  $region22: #{net_forward.1} parent=0 // pred_check
    _
  $region23: #{net_forward.1} parent=0 // pred_check_branch
    %31 = sbr.rel (0) target = $region25
  $region24: #{net_forward.1} parent=0 // pred_region
    _
  $region25: #{net_forward.1} parent=0 // pred_fallthru
    _
  // Predicated region
  $region26: #{net_forward.1} parent=0 // pred_check
    _
  $region27: #{net_forward.1} parent=0 // pred_check_branch
    %33 = sbr.rel (0) target = $region29
  $region28: #{net_forward.1} parent=0 // pred_region
    _
  $region29: #{net_forward.1} parent=0 // pred_fallthru
    _
  // Predicated region
  $region30: #{net_forward.1} parent=0 // pred_check
    _
  $region31: #{net_forward.1} parent=0 // pred_check_branch
    %35 = sbr.rel (0) target = $region33
  $region32: #{net_forward.1} parent=0 // pred_region
    _
  $region33: #{net_forward.1} parent=0 // pred_fallthru
    _
  // Predicated region
  $region34: #{net_forward.1} parent=0 // pred_check
    _
  $region35: #{net_forward.1} parent=0 // pred_check_branch
    %37 = sbr.rel (0) target = $region37
  $region36: #{net_forward.1} parent=0 // pred_region
    _
  $region37: #{net_forward.1} parent=0 // pred_fallthru
    _
  // Predicated region
  $region38: #{net_forward.1} parent=0 // pred_check
    _
  $region39: #{net_forward.1} parent=0 // pred_check_branch
    %39 = sbr.rel (0) target = $region41
  $region40: #{net_forward.1} parent=0 // pred_region
    _
  $region41: #{net_forward.1} parent=0 // pred_fallthru
    _
  // Predicated region
  $region42: #{net_forward.1} parent=0 // pred_check
    _
  $region43: #{net_forward.1} parent=0 // pred_check_branch
    %41 = sbr.rel (0) target = $region45
  $region44: #{net_forward.1} parent=0 // pred_region
    _
  $region45: #{net_forward.1} parent=0 // pred_fallthru
    _
  // Predicated region
  $region46: #{net_forward.1} parent=0 // pred_check
    _
  $region47: #{net_forward.1} parent=0 // pred_check_branch
    %43 = sbr.rel (0) target = $region49
  $region48: #{net_forward.1} parent=0 // pred_region
    _
  $region49: #{net_forward.1} parent=0 // pred_fallthru
    _
  // Predicated region
  $region50: #{net_forward.1} parent=0 // pred_check
    _
  $region51: #{net_forward.1} parent=0 // pred_check_branch
    %45 = sbr.rel (0) target = $region53
  $region52: #{net_forward.1} parent=0 // pred_region
    _
  $region53: #{net_forward.1} parent=0 // pred_fallthru
    _
  // Predicated region
  $region54: #{net_forward.1} parent=0 // pred_check
    _
  $region55: #{net_forward.1} parent=0 // pred_check_branch
    %47 = sbr.rel (0) target = $region57
  $region56: #{net_forward.1} parent=0 // pred_region
    _
  $region57: #{net_forward.1} parent=0 // pred_fallthru
    _
  // Predicated region
  $region58: #{net_forward.1} parent=0 // pred_check
    _
  $region59: #{net_forward.1} parent=0 // pred_check_branch
    %49 = sbr.rel (0) target = $region61
  $region60: #{net_forward.1} parent=0 // pred_region
    _
  $region61: #{net_forward.1} parent=0 // pred_fallthru
    _
  %v50 = vld [vmem:[%s0] sm:$0xff]
  %v51 = vld [vmem:[%s0 + $0x8] sm:$0xff]
  %v52 = vld [vmem:[%s0 + $0x10] sm:$0xff]
  %v53 = vld [vmem:[%s0 + $0x20] sm:$0xff]
  %v54 = vld [vmem:[%s0 + $0x28] sm:$0xff]
  %v55 = vld [vmem:[%s0 + $0x30] sm:$0xff]
  %v56 = vld [vmem:[%s0 + $0x40] sm:$0xff]
  %v57 = vld [vmem:[%s0 + $0x48] sm:$0xff]
  %v58 = vld [vmem:[%s0 + $0x50] sm:$0xff]
  %v59 = vld [vmem:[%s0 + $0x60] sm:$0xff]
  %v60 = vld [vmem:[%s0 + $0x68] sm:$0xff]
  %v61 = vld [vmem:[%s0 + $0x70] sm:$0xff]
  %v62 = vld [vmem:[%s0 + $0x80] sm:$0xff]
  %v63 = vld [vmem:[%s0 + $0x88] sm:$0xff]
  %v64 = vld [vmem:[%s0 + $0x90] sm:$0xff]
  %v65 = vld [vmem:[%s0 + $0xa0] sm:$0xff]
  %v66 = vld [vmem:[%s0 + $0xa8] sm:$0xff]
  %v67 = vld [vmem:[%s0 + $0xb0] sm:$0xff]
  %v68 = vld [vmem:[%s0 + $0xc0] sm:$0xff]
  %v69 = vld [vmem:[%s0 + $0xc8] sm:$0xff]
  %v70 = vld [vmem:[%s0 + $0xd0] sm:$0xff]
  %v71 = vld [vmem:[%s0 + $0xe0] sm:$0xff]
  %v72 = vld [vmem:[%s0 + $0xe8] sm:$0xff]
  %v73 = vld [vmem:[%s0 + $0xf0] sm:$0xff]
  %v74 = vld [vmem:[%s1] sm:$0xff]
  %v75 = vld [vmem:[%s1 + $0x8] sm:$0xff]
  %v76 = vld [vmem:[%s1 + $0x10] sm:$0xff]
  %v77 = vld [vmem:[%s1 + $0x18] sm:$0xff]
  %v78 = vld [vmem:[%s1 + $0x20] sm:$0xff]
  %v79 = vld [vmem:[%s1 + $0x28] sm:$0xff]
  %v80 = vld [vmem:[%s1 + $0x30] sm:$0xf]
  %v81 = vld [vmem:[%s1 + $0x38] sm:$0xf]
  %v82 = vld [vmem:[%s0 + $0x1] sm:$0xff]
  %v83 = vld [vmem:[%s0 + $0x9] sm:$0xff]
  %v84 = vld [vmem:[%s0 + $0x11] sm:$0xff]
  %v85 = vld [vmem:[%s0 + $0x21] sm:$0xff]
  %v86 = vld [vmem:[%s0 + $0x29] sm:$0xff]
  %v87 = vld [vmem:[%s0 + $0x31] sm:$0xff]
  %v88 = vld [vmem:[%s0 + $0x41] sm:$0xff]
  %v89 = vld [vmem:[%s0 + $0x49] sm:$0xff]
  %v90 = vld [vmem:[%s0 + $0x51] sm:$0xff]
  %v91 = vld [vmem:[%s0 + $0x61] sm:$0xff]
  %v92 = vld [vmem:[%s0 + $0x69] sm:$0xff]
  %v93 = vld [vmem:[%s0 + $0x71] sm:$0xff]
  %v94 = vld [vmem:[%s0 + $0x81] sm:$0xff]
  %v95 = vld [vmem:[%s0 + $0x89] sm:$0xff]
  %v96 = vld [vmem:[%s0 + $0x91] sm:$0xff]
  %v97 = vld [vmem:[%s0 + $0xa1] sm:$0xff]
  %v98 = vld [vmem:[%s0 + $0xa9] sm:$0xff]
  %v99 = vld [vmem:[%s0 + $0xb1] sm:$0xff]
  %v100 = vld [vmem:[%s0 + $0xc1] sm:$0xff]
  %v101 = vld [vmem:[%s0 + $0xc9] sm:$0xff]
  %v102 = vld [vmem:[%s0 + $0xd1] sm:$0xff]
  %v103 = vld [vmem:[%s0 + $0xe1] sm:$0xff]
  %v104 = vld [vmem:[%s0 + $0xe9] sm:$0xff]
  %v105 = vld [vmem:[%s0 + $0xf1] sm:$0xff]
  %s106 = scalar_lea.vmem %s1, 64
  %v107 = vld [vmem:[%s106] sm:$0xff]
  %v108 = vld [vmem:[%s106 + $0x8] sm:$0xff]
  %v109 = vld [vmem:[%s106 + $0x10] sm:$0xff]
  %v110 = vld [vmem:[%s106 + $0x18] sm:$0xff]
  %v111 = vld [vmem:[%s106 + $0x20] sm:$0xff]
  %v112 = vld [vmem:[%s106 + $0x28] sm:$0xff]
  %v113 = vld [vmem:[%s106 + $0x30] sm:$0xf]
  %v114 = vld [vmem:[%s106 + $0x38] sm:$0xf]
  %vm115 = vcmask 228352
  %v117 = vsel %vm115, %v82, 0
  %v120 = vsel %vm115, %v83, 0
  %v123 = vsel %vm115, %v84, 0
  %v126 = vsel %vm115, %v85, 0
  %v129 = vsel %vm115, %v86, 0
  %v132 = vsel %vm115, %v87, 0
  %v135 = vsel %vm115, %v88, 0
  %v138 = vsel %vm115, %v89, 0
  %v141 = vsel %vm115, %v90, 0
  %v144 = vsel %vm115, %v91, 0
  %v147 = vsel %vm115, %v92, 0
  %v150 = vsel %vm115, %v93, 0
  %v153 = vsel %vm115, %v94, 0
  %v156 = vsel %vm115, %v95, 0
  %v159 = vsel %vm115, %v96, 0
  %v162 = vsel %vm115, %v97, 0
  %v165 = vsel %vm115, %v98, 0
  %v168 = vsel %vm115, %v99, 0
  %v171 = vsel %vm115, %v100, 0
  %v174 = vsel %vm115, %v101, 0
  %v177 = vsel %vm115, %v102, 0
  %v180 = vsel %vm115, %v103, 0
  %v183 = vsel %vm115, %v104, 0
  %v186 = vsel %vm115, %v105, 0
  %vm188 = vcmask 1043456
  %v190 = vsel %vm188, %v113, 0
  %v193 = vsel %vm188, %v114, 0
  %195 = vmatprep.subr.mxu0 %v108
  %196 = vmatpush1.msra.mxu0 %v107
  %197 = vmatprep.subr.mxu0 %v110
  %198 = vmatpush1.msra.mxu0 %v109
  %199 = vmatprep.subr.mxu0 %v112
  %200 = vmatpush1.msra.mxu0 %v111
  %201 = vmatprep.subr.mxu0 %v193
  %202 = vmatpush1.msra.mxu0 %v190
  %203 = vmatprep.subr.mxu0 0.0
  %204 = vmatpush1.msra.mxu0 0.0
  %205 = vmatprep.subr.mxu0 0.0
  %206 = vmatpush1.msra.mxu0 0.0
  %207 = vmatprep.subr.mxu0 0.0
  %208 = vmatpush1.msra.mxu0 0.0
  %209 = vmatprep.subr.mxu0 0.0
  %210 = vmatpush1.msra.mxu0 0.0
  %211 = vmatprep.subr.mxu0 0.0
  %212 = vmatpush1.msra.mxu0 0.0
  %213 = vmatprep.subr.mxu0 0.0
  %214 = vmatpush1.msra.mxu0 0.0
  %215 = vmatprep.subr.mxu0 0.0
  %216 = vmatpush1.msra.mxu0 0.0
  %217 = vmatprep.subr.mxu0 0.0
  %218 = vmatpush1.msra.mxu0 0.0
  %219 = vmatprep.subr.mxu0 0.0
  %220 = vmatpush1.msra.mxu0 0.0
  %221 = vmatprep.subr.mxu0 0.0
  %222 = vmatpush1.msra.mxu0 0.0
  %223 = vmatprep.subr.mxu0 0.0
  %224 = vmatpush1.msra.mxu0 0.0
  %225 = vmatprep.subr.mxu0 0.0
  %226 = vmatpush1.msra.mxu0 0.0
  %227 = vmatprep.subr.mxu0 0.0
  %228 = vmatpush1.msra.mxu0 0.0
  %229 = vmatprep.subr.mxu0 0.0
  %230 = vmatpush1.msra.mxu0 0.0
  %231 = vmatprep.subr.mxu0 0.0
  %232 = vmatpush1.msra.mxu0 0.0
  %233 = vmatprep.subr.mxu0 0.0
  %234 = vmatpush1.msra.mxu0 0.0
  %235 = vmatprep.subr.mxu0 0.0
  %236 = vmatpush1.msra.mxu0 0.0
  %237 = vmatprep.subr.mxu0 0.0
  %238 = vmatpush1.msra.mxu0 0.0
  %239 = vmatprep.subr.mxu0 0.0
  %240 = vmatpush1.msra.mxu0 0.0
  %241 = vmatprep.subr.mxu0 0.0
  %242 = vmatpush1.msra.mxu0 0.0
  %243 = vmatprep.subr.mxu0 0.0
  %244 = vmatpush1.msra.mxu0 0.0
  %245 = vmatprep.subr.mxu0 0.0
  %246 = vmatpush1.msra.mxu0 0.0
  %247 = vmatprep.subr.mxu0 0.0
  %248 = vmatpush1.msra.mxu0 0.0
  %249 = vmatprep.subr.mxu0 0.0
  %250 = vmatpush1.msra.mxu0 0.0
  %251 = vmatprep.subr.mxu0 0.0
  %252 = vmatpush1.msra.mxu0 0.0
  %253 = vmatprep.subr.mxu0 0.0
  %254 = vmatpush1.msra.mxu0 0.0
  %255 = vmatprep.subr.mxu0 0.0
  %256 = vmatpush1.msra.mxu0 0.0
  %257 = vmatprep.subr.mxu0 0.0
  %258 = vmatpush1.msra.mxu0 0.0
  %259 = vmatprep.mubr.f32.mxu0 0.0
  %260 = vmatmul.mubr.f32.gmra.mrb[0].mxu0 %v117
  %v261 = vpop.f32.mrb[0].mxu0
  %v262 = vadd.f32 0.0, %v261
  %v263 = vpop.f32.mrb[0].mxu0
  %v264 = vadd.f32 0.0, %v263
  %265 = vmatprep.mubr.f32.mxu0 0.0
  %266 = vmatmul.mubr.f32.gmra.mrb[0].mxu0 %v120
  %v267 = vpop.f32.mrb[0].mxu0
  %v268 = vadd.f32 0.0, %v267
  %v269 = vpop.f32.mrb[0].mxu0
  %v270 = vadd.f32 0.0, %v269
  %271 = vmatprep.mubr.f32.mxu0 0.0
  %272 = vmatmul.mubr.f32.gmra.mrb[0].mxu0 %v123
  %v273 = vpop.f32.mrb[0].mxu0
  %v274 = vadd.f32 0.0, %v273
  %v275 = vpop.f32.mrb[0].mxu0
  %v276 = vadd.f32 0.0, %v275
  %277 = vmatprep.mubr.f32.mxu0 0.0
  %278 = vmatmul.mubr.f32.gmra.mrb[0].mxu0 %v126
  %v279 = vpop.f32.mrb[0].mxu0
  %v280 = vadd.f32 0.0, %v279
  %v281 = vpop.f32.mrb[0].mxu0
  %v282 = vadd.f32 0.0, %v281
  %283 = vmatprep.mubr.f32.mxu0 0.0
  %284 = vmatmul.mubr.f32.gmra.mrb[0].mxu0 %v129
  %v285 = vpop.f32.mrb[0].mxu0
  %v286 = vadd.f32 0.0, %v285
  %v287 = vpop.f32.mrb[0].mxu0
  %v288 = vadd.f32 0.0, %v287
  %289 = vmatprep.mubr.f32.mxu0 0.0
  %290 = vmatmul.mubr.f32.gmra.mrb[0].mxu0 %v132
  %v291 = vpop.f32.mrb[0].mxu0
  %v292 = vadd.f32 0.0, %v291
  %v293 = vpop.f32.mrb[0].mxu0
  %v294 = vadd.f32 0.0, %v293
  %295 = vmatprep.mubr.f32.mxu0 0.0
  %296 = vmatmul.mubr.f32.gmra.mrb[0].mxu0 %v135
  %v297 = vpop.f32.mrb[0].mxu0
  %v298 = vadd.f32 0.0, %v297
  %v299 = vpop.f32.mrb[0].mxu0
  %v300 = vadd.f32 0.0, %v299
  %301 = vmatprep.mubr.f32.mxu0 0.0
  %302 = vmatmul.mubr.f32.gmra.mrb[0].mxu0 %v138
  %v303 = vpop.f32.mrb[0].mxu0
  %v304 = vadd.f32 0.0, %v303
  %v305 = vpop.f32.mrb[0].mxu0
  %v306 = vadd.f32 0.0, %v305
  %307 = vmatprep.mubr.f32.mxu0 0.0
  %308 = vmatmul.mubr.f32.gmra.mrb[0].mxu0 %v141
  %v309 = vpop.f32.mrb[0].mxu0
  %v310 = vadd.f32 0.0, %v309
  %v311 = vpop.f32.mrb[0].mxu0
  %v312 = vadd.f32 0.0, %v311
  %313 = vmatprep.mubr.f32.mxu0 0.0
  %314 = vmatmul.mubr.f32.gmra.mrb[0].mxu0 %v144
  %v315 = vpop.f32.mrb[0].mxu0
  %v316 = vadd.f32 0.0, %v315
  %v317 = vpop.f32.mrb[0].mxu0
  %v318 = vadd.f32 0.0, %v317
  %319 = vmatprep.mubr.f32.mxu0 0.0
  %320 = vmatmul.mubr.f32.gmra.mrb[0].mxu0 %v147
  %v321 = vpop.f32.mrb[0].mxu0
  %v322 = vadd.f32 0.0, %v321
  %v323 = vpop.f32.mrb[0].mxu0
  %v324 = vadd.f32 0.0, %v323
  %325 = vmatprep.mubr.f32.mxu0 0.0
  %326 = vmatmul.mubr.f32.gmra.mrb[0].mxu0 %v150
  %v327 = vpop.f32.mrb[0].mxu0
  %v328 = vadd.f32 0.0, %v327
  %v329 = vpop.f32.mrb[0].mxu0
  %v330 = vadd.f32 0.0, %v329
  %331 = vmatprep.mubr.f32.mxu0 0.0
  %332 = vmatmul.mubr.f32.gmra.mrb[0].mxu0 %v153
  %v333 = vpop.f32.mrb[0].mxu0
  %v334 = vadd.f32 0.0, %v333
  %v335 = vpop.f32.mrb[0].mxu0
  %v336 = vadd.f32 0.0, %v335
  %337 = vmatprep.mubr.f32.mxu0 0.0
  %338 = vmatmul.mubr.f32.gmra.mrb[0].mxu0 %v156
  %v339 = vpop.f32.mrb[0].mxu0
  %v340 = vadd.f32 0.0, %v339
  %v341 = vpop.f32.mrb[0].mxu0
  %v342 = vadd.f32 0.0, %v341
  %343 = vmatprep.mubr.f32.mxu0 0.0
  %344 = vmatmul.mubr.f32.gmra.mrb[0].mxu0 %v159
  %v345 = vpop.f32.mrb[0].mxu0
  %v346 = vadd.f32 0.0, %v345
  %v347 = vpop.f32.mrb[0].mxu0
  %v348 = vadd.f32 0.0, %v347
  %349 = vmatprep.mubr.f32.mxu0 0.0
  %350 = vmatmul.mubr.f32.gmra.mrb[0].mxu0 %v162
  %v351 = vpop.f32.mrb[0].mxu0
  %v352 = vadd.f32 0.0, %v351
  %v353 = vpop.f32.mrb[0].mxu0
  %v354 = vadd.f32 0.0, %v353
  %355 = vmatprep.mubr.f32.mxu0 0.0
  %356 = vmatmul.mubr.f32.gmra.mrb[0].mxu0 %v165
  %v357 = vpop.f32.mrb[0].mxu0
  %v358 = vadd.f32 0.0, %v357
  %v359 = vpop.f32.mrb[0].mxu0
  %v360 = vadd.f32 0.0, %v359
  %361 = vmatprep.mubr.f32.mxu0 0.0
  %362 = vmatmul.mubr.f32.gmra.mrb[0].mxu0 %v168
  %v363 = vpop.f32.mrb[0].mxu0
  %v364 = vadd.f32 0.0, %v363
  %v365 = vpop.f32.mrb[0].mxu0
  %v366 = vadd.f32 0.0, %v365
  %367 = vmatprep.mubr.f32.mxu0 0.0
  %368 = vmatmul.mubr.f32.gmra.mrb[0].mxu0 %v171
  %v369 = vpop.f32.mrb[0].mxu0
  %v370 = vadd.f32 0.0, %v369
  %v371 = vpop.f32.mrb[0].mxu0
  %v372 = vadd.f32 0.0, %v371
  %373 = vmatprep.mubr.f32.mxu0 0.0
  %374 = vmatmul.mubr.f32.gmra.mrb[0].mxu0 %v174
  %v375 = vpop.f32.mrb[0].mxu0
  %v376 = vadd.f32 0.0, %v375
  %v377 = vpop.f32.mrb[0].mxu0
  %v378 = vadd.f32 0.0, %v377
  %379 = vmatprep.mubr.f32.mxu0 0.0
  %380 = vmatmul.mubr.f32.gmra.mrb[0].mxu0 %v177
  %v381 = vpop.f32.mrb[0].mxu0
  %v382 = vadd.f32 0.0, %v381
  %v383 = vpop.f32.mrb[0].mxu0
  %v384 = vadd.f32 0.0, %v383
  %385 = vmatprep.mubr.f32.mxu0 0.0
  %386 = vmatmul.mubr.f32.gmra.mrb[0].mxu0 %v180
  %v387 = vpop.f32.mrb[0].mxu0
  %v388 = vadd.f32 0.0, %v387
  %v389 = vpop.f32.mrb[0].mxu0
  %v390 = vadd.f32 0.0, %v389
  %391 = vmatprep.mubr.f32.mxu0 0.0
  %392 = vmatmul.mubr.f32.gmra.mrb[0].mxu0 %v183
  %v393 = vpop.f32.mrb[0].mxu0
  %v394 = vadd.f32 0.0, %v393
  %v395 = vpop.f32.mrb[0].mxu0
  %v396 = vadd.f32 0.0, %v395
  %397 = vmatprep.mubr.f32.mxu0 0.0
  %398 = vmatmul.mubr.f32.gmra.mrb[0].mxu0 %v186
  %v399 = vpop.f32.mrb[0].mxu0
  %v400 = vadd.f32 0.0, %v399
  %v401 = vpop.f32.mrb[0].mxu0
  %v402 = vadd.f32 0.0, %v401
  %403 = vdwg.mxu0
  %v405 = vsel %vm115, %v50, 0
  %v408 = vsel %vm115, %v51, 0
  %v411 = vsel %vm115, %v52, 0
  %v414 = vsel %vm115, %v53, 0
  %v417 = vsel %vm115, %v54, 0
  %v420 = vsel %vm115, %v55, 0
  %v423 = vsel %vm115, %v56, 0
  %v426 = vsel %vm115, %v57, 0
  %v429 = vsel %vm115, %v58, 0
  %v432 = vsel %vm115, %v59, 0
  %v435 = vsel %vm115, %v60, 0
  %v438 = vsel %vm115, %v61, 0
  %v441 = vsel %vm115, %v62, 0
  %v444 = vsel %vm115, %v63, 0
  %v447 = vsel %vm115, %v64, 0
  %v450 = vsel %vm115, %v65, 0
  %v453 = vsel %vm115, %v66, 0
  %v456 = vsel %vm115, %v67, 0
  %v459 = vsel %vm115, %v68, 0
  %v462 = vsel %vm115, %v69, 0
  %v465 = vsel %vm115, %v70, 0
  %v468 = vsel %vm115, %v71, 0
  %v471 = vsel %vm115, %v72, 0
  %v474 = vsel %vm115, %v73, 0
  %v477 = vsel %vm188, %v80, 0
  %v480 = vsel %vm188, %v81, 0
  %482 = vmatprep.subr.mxu0 %v75
  %483 = vmatpush1.msra.mxu0 %v74
  %484 = vmatprep.subr.mxu0 %v77
  %485 = vmatpush1.msra.mxu0 %v76
  %486 = vmatprep.subr.mxu0 %v79
  %487 = vmatpush1.msra.mxu0 %v78
  %488 = vmatprep.subr.mxu0 %v480
  %489 = vmatpush1.msra.mxu0 %v477
  %490 = vmatprep.subr.mxu0 0.0
  %491 = vmatpush1.msra.mxu0 0.0
  %492 = vmatprep.subr.mxu0 0.0
  %493 = vmatpush1.msra.mxu0 0.0
  %494 = vmatprep.subr.mxu0 0.0
  %495 = vmatpush1.msra.mxu0 0.0
  %496 = vmatprep.subr.mxu0 0.0
  %497 = vmatpush1.msra.mxu0 0.0
  %498 = vmatprep.subr.mxu0 0.0
  %499 = vmatpush1.msra.mxu0 0.0
  %500 = vmatprep.subr.mxu0 0.0
  %501 = vmatpush1.msra.mxu0 0.0
  %502 = vmatprep.subr.mxu0 0.0
  %503 = vmatpush1.msra.mxu0 0.0
  %504 = vmatprep.subr.mxu0 0.0
  %505 = vmatpush1.msra.mxu0 0.0
  %506 = vmatprep.subr.mxu0 0.0
  %507 = vmatpush1.msra.mxu0 0.0
  %508 = vmatprep.subr.mxu0 0.0
  %509 = vmatpush1.msra.mxu0 0.0
  %510 = vmatprep.subr.mxu0 0.0
  %511 = vmatpush1.msra.mxu0 0.0
  %512 = vmatprep.subr.mxu0 0.0
  %513 = vmatpush1.msra.mxu0 0.0
  %514 = vmatprep.subr.mxu0 0.0
  %515 = vmatpush1.msra.mxu0 0.0
  %516 = vmatprep.subr.mxu0 0.0
  %517 = vmatpush1.msra.mxu0 0.0
  %518 = vmatprep.subr.mxu0 0.0
  %519 = vmatpush1.msra.mxu0 0.0
  %520 = vmatprep.subr.mxu0 0.0
  %521 = vmatpush1.msra.mxu0 0.0
  %522 = vmatprep.subr.mxu0 0.0
  %523 = vmatpush1.msra.mxu0 0.0
  %524 = vmatprep.subr.mxu0 0.0
  %525 = vmatpush1.msra.mxu0 0.0
  %526 = vmatprep.subr.mxu0 0.0
  %527 = vmatpush1.msra.mxu0 0.0
  %528 = vmatprep.subr.mxu0 0.0
  %529 = vmatpush1.msra.mxu0 0.0
  %530 = vmatprep.subr.mxu0 0.0
  %531 = vmatpush1.msra.mxu0 0.0
  %532 = vmatprep.subr.mxu0 0.0
  %533 = vmatpush1.msra.mxu0 0.0
  %534 = vmatprep.subr.mxu0 0.0
  %535 = vmatpush1.msra.mxu0 0.0
  %536 = vmatprep.subr.mxu0 0.0
  %537 = vmatpush1.msra.mxu0 0.0
  %538 = vmatprep.subr.mxu0 0.0
  %539 = vmatpush1.msra.mxu0 0.0
  %540 = vmatprep.subr.mxu0 0.0
  %541 = vmatpush1.msra.mxu0 0.0
  %542 = vmatprep.subr.mxu0 0.0
  %543 = vmatpush1.msra.mxu0 0.0
  %544 = vmatprep.subr.mxu0 0.0
  %545 = vmatpush1.msra.mxu0 0.0
  %546 = vmatprep.mubr.f32.mxu0 0.0
  %547 = vmatmul.mubr.f32.gmra.mrb[0].mxu0 %v405
  %v548 = vpop.f32.mrb[0].mxu0
  %v549 = vadd.f32 %v262, %v548
  %v550 = vpop.f32.mrb[0].mxu0
  %v551 = vadd.f32 %v264, %v550
  %552 = vmatprep.mubr.f32.mxu0 0.0
  %553 = vmatmul.mubr.f32.gmra.mrb[0].mxu0 %v408
  %v554 = vpop.f32.mrb[0].mxu0
  %v555 = vadd.f32 %v268, %v554
  %v556 = vpop.f32.mrb[0].mxu0
  %v557 = vadd.f32 %v270, %v556
  %558 = vmatprep.mubr.f32.mxu0 0.0
  %559 = vmatmul.mubr.f32.gmra.mrb[0].mxu0 %v411
  %v560 = vpop.f32.mrb[0].mxu0
  %v561 = vadd.f32 %v274, %v560
  %v562 = vpop.f32.mrb[0].mxu0
  %v563 = vadd.f32 %v276, %v562
  %564 = vmatprep.mubr.f32.mxu0 0.0
  %565 = vmatmul.mubr.f32.gmra.mrb[0].mxu0 %v414
  %v566 = vpop.f32.mrb[0].mxu0
  %v567 = vadd.f32 %v280, %v566
  %v568 = vpop.f32.mrb[0].mxu0
  %v569 = vadd.f32 %v282, %v568
  %570 = vmatprep.mubr.f32.mxu0 0.0
  %571 = vmatmul.mubr.f32.gmra.mrb[0].mxu0 %v417
  %v572 = vpop.f32.mrb[0].mxu0
  %v573 = vadd.f32 %v286, %v572
  %v574 = vpop.f32.mrb[0].mxu0
  %v575 = vadd.f32 %v288, %v574
  %576 = vmatprep.mubr.f32.mxu0 0.0
  %577 = vmatmul.mubr.f32.gmra.mrb[0].mxu0 %v420
  %v578 = vpop.f32.mrb[0].mxu0
  %v579 = vadd.f32 %v292, %v578
  %v580 = vpop.f32.mrb[0].mxu0
  %v581 = vadd.f32 %v294, %v580
  %582 = vmatprep.mubr.f32.mxu0 0.0
  %583 = vmatmul.mubr.f32.gmra.mrb[0].mxu0 %v423
  %v584 = vpop.f32.mrb[0].mxu0
  %v585 = vadd.f32 %v298, %v584
  %v586 = vpop.f32.mrb[0].mxu0
  %v587 = vadd.f32 %v300, %v586
  %588 = vmatprep.mubr.f32.mxu0 0.0
  %589 = vmatmul.mubr.f32.gmra.mrb[0].mxu0 %v426
  %v590 = vpop.f32.mrb[0].mxu0
  %v591 = vadd.f32 %v304, %v590
  %v592 = vpop.f32.mrb[0].mxu0
  %v593 = vadd.f32 %v306, %v592
  %594 = vmatprep.mubr.f32.mxu0 0.0
  %595 = vmatmul.mubr.f32.gmra.mrb[0].mxu0 %v429
  %v596 = vpop.f32.mrb[0].mxu0
  %v597 = vadd.f32 %v310, %v596
  %v598 = vpop.f32.mrb[0].mxu0
  %v599 = vadd.f32 %v312, %v598
  %600 = vmatprep.mubr.f32.mxu0 0.0
  %601 = vmatmul.mubr.f32.gmra.mrb[0].mxu0 %v432
  %v602 = vpop.f32.mrb[0].mxu0
  %v603 = vadd.f32 %v316, %v602
  %v604 = vpop.f32.mrb[0].mxu0
  %v605 = vadd.f32 %v318, %v604
  %606 = vmatprep.mubr.f32.mxu0 0.0
  %607 = vmatmul.mubr.f32.gmra.mrb[0].mxu0 %v435
  %v608 = vpop.f32.mrb[0].mxu0
  %v609 = vadd.f32 %v322, %v608
  %v610 = vpop.f32.mrb[0].mxu0
  %v611 = vadd.f32 %v324, %v610
  %612 = vmatprep.mubr.f32.mxu0 0.0
  %613 = vmatmul.mubr.f32.gmra.mrb[0].mxu0 %v438
  %v614 = vpop.f32.mrb[0].mxu0
  %v615 = vadd.f32 %v328, %v614
  %v616 = vpop.f32.mrb[0].mxu0
  %v617 = vadd.f32 %v330, %v616
  %618 = vmatprep.mubr.f32.mxu0 0.0
  %619 = vmatmul.mubr.f32.gmra.mrb[0].mxu0 %v441
  %v620 = vpop.f32.mrb[0].mxu0
  %v621 = vadd.f32 %v334, %v620
  %v622 = vpop.f32.mrb[0].mxu0
  %v623 = vadd.f32 %v336, %v622
  %624 = vmatprep.mubr.f32.mxu0 0.0
  %625 = vmatmul.mubr.f32.gmra.mrb[0].mxu0 %v444
  %v626 = vpop.f32.mrb[0].mxu0
  %v627 = vadd.f32 %v340, %v626
  %v628 = vpop.f32.mrb[0].mxu0
  %v629 = vadd.f32 %v342, %v628
  %630 = vmatprep.mubr.f32.mxu0 0.0
  %631 = vmatmul.mubr.f32.gmra.mrb[0].mxu0 %v447
  %v632 = vpop.f32.mrb[0].mxu0
  %v633 = vadd.f32 %v346, %v632
  %v634 = vpop.f32.mrb[0].mxu0
  %v635 = vadd.f32 %v348, %v634
  %636 = vmatprep.mubr.f32.mxu0 0.0
  %637 = vmatmul.mubr.f32.gmra.mrb[0].mxu0 %v450
  %v638 = vpop.f32.mrb[0].mxu0
  %v639 = vadd.f32 %v352, %v638
  %v640 = vpop.f32.mrb[0].mxu0
  %v641 = vadd.f32 %v354, %v640
  %642 = vmatprep.mubr.f32.mxu0 0.0
  %643 = vmatmul.mubr.f32.gmra.mrb[0].mxu0 %v453
  %v644 = vpop.f32.mrb[0].mxu0
  %v645 = vadd.f32 %v358, %v644
  %v646 = vpop.f32.mrb[0].mxu0
  %v647 = vadd.f32 %v360, %v646
  %648 = vmatprep.mubr.f32.mxu0 0.0
  %649 = vmatmul.mubr.f32.gmra.mrb[0].mxu0 %v456
  %v650 = vpop.f32.mrb[0].mxu0
  %v651 = vadd.f32 %v364, %v650
  %v652 = vpop.f32.mrb[0].mxu0
  %v653 = vadd.f32 %v366, %v652
  %654 = vmatprep.mubr.f32.mxu0 0.0
  %655 = vmatmul.mubr.f32.gmra.mrb[0].mxu0 %v459
  %v656 = vpop.f32.mrb[0].mxu0
  %v657 = vadd.f32 %v370, %v656
  %v658 = vpop.f32.mrb[0].mxu0
  %v659 = vadd.f32 %v372, %v658
  %660 = vmatprep.mubr.f32.mxu0 0.0
  %661 = vmatmul.mubr.f32.gmra.mrb[0].mxu0 %v462
  %v662 = vpop.f32.mrb[0].mxu0
  %v663 = vadd.f32 %v376, %v662
  %v664 = vpop.f32.mrb[0].mxu0
  %v665 = vadd.f32 %v378, %v664
  %666 = vmatprep.mubr.f32.mxu0 0.0
  %667 = vmatmul.mubr.f32.gmra.mrb[0].mxu0 %v465
  %v668 = vpop.f32.mrb[0].mxu0
  %v669 = vadd.f32 %v382, %v668
  %v670 = vpop.f32.mrb[0].mxu0
  %v671 = vadd.f32 %v384, %v670
  %672 = vmatprep.mubr.f32.mxu0 0.0
  %673 = vmatmul.mubr.f32.gmra.mrb[0].mxu0 %v468
  %v674 = vpop.f32.mrb[0].mxu0
  %v675 = vadd.f32 %v388, %v674
  %v676 = vpop.f32.mrb[0].mxu0
  %v677 = vadd.f32 %v390, %v676
  %678 = vmatprep.mubr.f32.mxu0 0.0
  %679 = vmatmul.mubr.f32.gmra.mrb[0].mxu0 %v471
  %v680 = vpop.f32.mrb[0].mxu0
  %v681 = vadd.f32 %v394, %v680
  %v682 = vpop.f32.mrb[0].mxu0
  %v683 = vadd.f32 %v396, %v682
  %684 = vmatprep.mubr.f32.mxu0 0.0
  %685 = vmatmul.mubr.f32.gmra.mrb[0].mxu0 %v474
  %v686 = vpop.f32.mrb[0].mxu0
  %v687 = vadd.f32 %v400, %v686
  %v688 = vpop.f32.mrb[0].mxu0
  %v689 = vadd.f32 %v402, %v688
  %690 = vdwg.mxu0
  %v691 = vld [vmem:[%s0 + $0x2] sm:$0xff]
  %v692 = vld [vmem:[%s0 + $0xa] sm:$0xff]
  %v693 = vld [vmem:[%s0 + $0x12] sm:$0xff]
  %v694 = vld [vmem:[%s0 + $0x22] sm:$0xff]
  %v695 = vld [vmem:[%s0 + $0x2a] sm:$0xff]
  %v696 = vld [vmem:[%s0 + $0x32] sm:$0xff]
  %v697 = vld [vmem:[%s0 + $0x42] sm:$0xff]
  %v698 = vld [vmem:[%s0 + $0x4a] sm:$0xff]
  %v699 = vld [vmem:[%s0 + $0x52] sm:$0xff]
  %v700 = vld [vmem:[%s0 + $0x62] sm:$0xff]
  %v701 = vld [vmem:[%s0 + $0x6a] sm:$0xff]
  %v702 = vld [vmem:[%s0 + $0x72] sm:$0xff]
  %v703 = vld [vmem:[%s0 + $0x82] sm:$0xff]
  %v704 = vld [vmem:[%s0 + $0x8a] sm:$0xff]
  %v705 = vld [vmem:[%s0 + $0x92] sm:$0xff]
  %v706 = vld [vmem:[%s0 + $0xa2] sm:$0xff]
  %v707 = vld [vmem:[%s0 + $0xaa] sm:$0xff]
  %v708 = vld [vmem:[%s0 + $0xb2] sm:$0xff]
  %v709 = vld [vmem:[%s0 + $0xc2] sm:$0xff]
  %v710 = vld [vmem:[%s0 + $0xca] sm:$0xff]
  %v711 = vld [vmem:[%s0 + $0xd2] sm:$0xff]
  %v712 = vld [vmem:[%s0 + $0xe2] sm:$0xff]
  %v713 = vld [vmem:[%s0 + $0xea] sm:$0xff]
  %v714 = vld [vmem:[%s0 + $0xf2] sm:$0xff]
  %s715 = scalar_lea.vmem %s1, 128
  %v716 = vld [vmem:[%s715] sm:$0xff]
  %v717 = vld [vmem:[%s715 + $0x8] sm:$0xff]
  %v718 = vld [vmem:[%s715 + $0x10] sm:$0xff]
  %v719 = vld [vmem:[%s715 + $0x18] sm:$0xff]
  %v720 = vld [vmem:[%s715 + $0x20] sm:$0xff]
  %v721 = vld [vmem:[%s715 + $0x28] sm:$0xff]
  %v722 = vld [vmem:[%s715 + $0x30] sm:$0xf]
  %v723 = vld [vmem:[%s715 + $0x38] sm:$0xf]
  %v725 = vsel %vm115, %v691, 0
  %v728 = vsel %vm115, %v692, 0
  %v731 = vsel %vm115, %v693, 0
  %v734 = vsel %vm115, %v694, 0
  %v737 = vsel %vm115, %v695, 0
  %v740 = vsel %vm115, %v696, 0
  %v743 = vsel %vm115, %v697, 0
  %v746 = vsel %vm115, %v698, 0
  %v749 = vsel %vm115, %v699, 0
  %v752 = vsel %vm115, %v700, 0
  %v755 = vsel %vm115, %v701, 0
  %v758 = vsel %vm115, %v702, 0
  %v761 = vsel %vm115, %v703, 0
  %v764 = vsel %vm115, %v704, 0
  %v767 = vsel %vm115, %v705, 0
  %v770 = vsel %vm115, %v706, 0
  %v773 = vsel %vm115, %v707, 0
  %v776 = vsel %vm115, %v708, 0
  %v779 = vsel %vm115, %v709, 0
  %v782 = vsel %vm115, %v710, 0
  %v785 = vsel %vm115, %v711, 0
  %v788 = vsel %vm115, %v712, 0
  %v791 = vsel %vm115, %v713, 0
  %v794 = vsel %vm115, %v714, 0
  %v797 = vsel %vm188, %v722, 0
  %v800 = vsel %vm188, %v723, 0
  %802 = vmatprep.subr.mxu0 %v717
  %803 = vmatpush1.msra.mxu0 %v716
  %804 = vmatprep.subr.mxu0 %v719
  %805 = vmatpush1.msra.mxu0 %v718
  %806 = vmatprep.subr.mxu0 %v721
  %807 = vmatpush1.msra.mxu0 %v720
  %808 = vmatprep.subr.mxu0 %v800
  %809 = vmatpush1.msra.mxu0 %v797
  %810 = vmatprep.subr.mxu0 0.0
  %811 = vmatpush1.msra.mxu0 0.0
  %812 = vmatprep.subr.mxu0 0.0
  %813 = vmatpush1.msra.mxu0 0.0
  %814 = vmatprep.subr.mxu0 0.0
  %815 = vmatpush1.msra.mxu0 0.0
  %816 = vmatprep.subr.mxu0 0.0
  %817 = vmatpush1.msra.mxu0 0.0
  %818 = vmatprep.subr.mxu0 0.0
  %819 = vmatpush1.msra.mxu0 0.0
  %820 = vmatprep.subr.mxu0 0.0
  %821 = vmatpush1.msra.mxu0 0.0
  %822 = vmatprep.subr.mxu0 0.0
  %823 = vmatpush1.msra.mxu0 0.0
  %824 = vmatprep.subr.mxu0 0.0
  %825 = vmatpush1.msra.mxu0 0.0
  %826 = vmatprep.subr.mxu0 0.0
  %827 = vmatpush1.msra.mxu0 0.0
  %828 = vmatprep.subr.mxu0 0.0
  %829 = vmatpush1.msra.mxu0 0.0
  %830 = vmatprep.subr.mxu0 0.0
  %831 = vmatpush1.msra.mxu0 0.0
  %832 = vmatprep.subr.mxu0 0.0
  %833 = vmatpush1.msra.mxu0 0.0
  %834 = vmatprep.subr.mxu0 0.0
  %835 = vmatpush1.msra.mxu0 0.0
  %836 = vmatprep.subr.mxu0 0.0
  %837 = vmatpush1.msra.mxu0 0.0
  %838 = vmatprep.subr.mxu0 0.0
  %839 = vmatpush1.msra.mxu0 0.0
  %840 = vmatprep.subr.mxu0 0.0
  %841 = vmatpush1.msra.mxu0 0.0
  %842 = vmatprep.subr.mxu0 0.0
  %843 = vmatpush1.msra.mxu0 0.0
  %844 = vmatprep.subr.mxu0 0.0
  %845 = vmatpush1.msra.mxu0 0.0
  %846 = vmatprep.subr.mxu0 0.0
  %847 = vmatpush1.msra.mxu0 0.0
  %848 = vmatprep.subr.mxu0 0.0
  %849 = vmatpush1.msra.mxu0 0.0
  %850 = vmatprep.subr.mxu0 0.0
  %851 = vmatpush1.msra.mxu0 0.0
  %852 = vmatprep.subr.mxu0 0.0
  %853 = vmatpush1.msra.mxu0 0.0
  %854 = vmatprep.subr.mxu0 0.0
  %855 = vmatpush1.msra.mxu0 0.0
  %856 = vmatprep.subr.mxu0 0.0
  %857 = vmatpush1.msra.mxu0 0.0
  %858 = vmatprep.subr.mxu0 0.0
  %859 = vmatpush1.msra.mxu0 0.0
  %860 = vmatprep.subr.mxu0 0.0
  %861 = vmatpush1.msra.mxu0 0.0
  %862 = vmatprep.subr.mxu0 0.0
  %863 = vmatpush1.msra.mxu0 0.0
  %864 = vmatprep.subr.mxu0 0.0
  %865 = vmatpush1.msra.mxu0 0.0
  %866 = vmatprep.mubr.f32.mxu0 0.0
  %867 = vmatmul.mubr.f32.gmra.mrb[0].mxu0 %v725
  %v868 = vpop.f32.mrb[0].mxu0
  %v869 = vadd.f32 0.0, %v868
  %v870 = vpop.f32.mrb[0].mxu0
  %v871 = vadd.f32 0.0, %v870
  %872 = vmatprep.mubr.f32.mxu0 0.0
  %873 = vmatmul.mubr.f32.gmra.mrb[0].mxu0 %v728
  %v874 = vpop.f32.mrb[0].mxu0
  %v875 = vadd.f32 0.0, %v874
  %v876 = vpop.f32.mrb[0].mxu0
  %v877 = vadd.f32 0.0, %v876
  %878 = vmatprep.mubr.f32.mxu0 0.0
  %879 = vmatmul.mubr.f32.gmra.mrb[0].mxu0 %v731
  %v880 = vpop.f32.mrb[0].mxu0
  %v881 = vadd.f32 0.0, %v880
  %v882 = vpop.f32.mrb[0].mxu0
  %v883 = vadd.f32 0.0, %v882
  %884 = vmatprep.mubr.f32.mxu0 0.0
  %885 = vmatmul.mubr.f32.gmra.mrb[0].mxu0 %v734
  %v886 = vpop.f32.mrb[0].mxu0
  %v887 = vadd.f32 0.0, %v886
  %v888 = vpop.f32.mrb[0].mxu0
  %v889 = vadd.f32 0.0, %v888
  %890 = vmatprep.mubr.f32.mxu0 0.0
  %891 = vmatmul.mubr.f32.gmra.mrb[0].mxu0 %v737
  %v892 = vpop.f32.mrb[0].mxu0
  %v893 = vadd.f32 0.0, %v892
  %v894 = vpop.f32.mrb[0].mxu0
  %v895 = vadd.f32 0.0, %v894
  %896 = vmatprep.mubr.f32.mxu0 0.0
  %897 = vmatmul.mubr.f32.gmra.mrb[0].mxu0 %v740
  %v898 = vpop.f32.mrb[0].mxu0
  %v899 = vadd.f32 0.0, %v898
  %v900 = vpop.f32.mrb[0].mxu0
  %v901 = vadd.f32 0.0, %v900
  %902 = vmatprep.mubr.f32.mxu0 0.0
  %903 = vmatmul.mubr.f32.gmra.mrb[0].mxu0 %v743
  %v904 = vpop.f32.mrb[0].mxu0
  %v905 = vadd.f32 0.0, %v904
  %v906 = vpop.f32.mrb[0].mxu0
  %v907 = vadd.f32 0.0, %v906
  %908 = vmatprep.mubr.f32.mxu0 0.0
  %909 = vmatmul.mubr.f32.gmra.mrb[0].mxu0 %v746
  %v910 = vpop.f32.mrb[0].mxu0
  %v911 = vadd.f32 0.0, %v910
  %v912 = vpop.f32.mrb[0].mxu0
  %v913 = vadd.f32 0.0, %v912
  %914 = vmatprep.mubr.f32.mxu0 0.0
  %915 = vmatmul.mubr.f32.gmra.mrb[0].mxu0 %v749
  %v916 = vpop.f32.mrb[0].mxu0
  %v917 = vadd.f32 0.0, %v916
  %v918 = vpop.f32.mrb[0].mxu0
  %v919 = vadd.f32 0.0, %v918
  %920 = vmatprep.mubr.f32.mxu0 0.0
  %921 = vmatmul.mubr.f32.gmra.mrb[0].mxu0 %v752
  %v922 = vpop.f32.mrb[0].mxu0
  %v923 = vadd.f32 0.0, %v922
  %v924 = vpop.f32.mrb[0].mxu0
  %v925 = vadd.f32 0.0, %v924
  %926 = vmatprep.mubr.f32.mxu0 0.0
  %927 = vmatmul.mubr.f32.gmra.mrb[0].mxu0 %v755
  %v928 = vpop.f32.mrb[0].mxu0
  %v929 = vadd.f32 0.0, %v928
  %v930 = vpop.f32.mrb[0].mxu0
  %v931 = vadd.f32 0.0, %v930
  %932 = vmatprep.mubr.f32.mxu0 0.0
  %933 = vmatmul.mubr.f32.gmra.mrb[0].mxu0 %v758
  %v934 = vpop.f32.mrb[0].mxu0
  %v935 = vadd.f32 0.0, %v934
  %v936 = vpop.f32.mrb[0].mxu0
  %v937 = vadd.f32 0.0, %v936
  %938 = vmatprep.mubr.f32.mxu0 0.0
  %939 = vmatmul.mubr.f32.gmra.mrb[0].mxu0 %v761
  %v940 = vpop.f32.mrb[0].mxu0
  %v941 = vadd.f32 0.0, %v940
  %v942 = vpop.f32.mrb[0].mxu0
  %v943 = vadd.f32 0.0, %v942
  %944 = vmatprep.mubr.f32.mxu0 0.0
  %945 = vmatmul.mubr.f32.gmra.mrb[0].mxu0 %v764
  %v946 = vpop.f32.mrb[0].mxu0
  %v947 = vadd.f32 0.0, %v946
  %v948 = vpop.f32.mrb[0].mxu0
  %v949 = vadd.f32 0.0, %v948
  %950 = vmatprep.mubr.f32.mxu0 0.0
  %951 = vmatmul.mubr.f32.gmra.mrb[0].mxu0 %v767
  %v952 = vpop.f32.mrb[0].mxu0
  %v953 = vadd.f32 0.0, %v952
  %v954 = vpop.f32.mrb[0].mxu0
  %v955 = vadd.f32 0.0, %v954
  %956 = vmatprep.mubr.f32.mxu0 0.0
  %957 = vmatmul.mubr.f32.gmra.mrb[0].mxu0 %v770
  %v958 = vpop.f32.mrb[0].mxu0
  %v959 = vadd.f32 0.0, %v958
  %v960 = vpop.f32.mrb[0].mxu0
  %v961 = vadd.f32 0.0, %v960
  %962 = vmatprep.mubr.f32.mxu0 0.0
  %963 = vmatmul.mubr.f32.gmra.mrb[0].mxu0 %v773
  %v964 = vpop.f32.mrb[0].mxu0
  %v965 = vadd.f32 0.0, %v964
  %v966 = vpop.f32.mrb[0].mxu0
  %v967 = vadd.f32 0.0, %v966
  %968 = vmatprep.mubr.f32.mxu0 0.0
  %969 = vmatmul.mubr.f32.gmra.mrb[0].mxu0 %v776
  %v970 = vpop.f32.mrb[0].mxu0
  %v971 = vadd.f32 0.0, %v970
  %v972 = vpop.f32.mrb[0].mxu0
  %v973 = vadd.f32 0.0, %v972
  %974 = vmatprep.mubr.f32.mxu0 0.0
  %975 = vmatmul.mubr.f32.gmra.mrb[0].mxu0 %v779
  %v976 = vpop.f32.mrb[0].mxu0
  %v977 = vadd.f32 0.0, %v976
  %v978 = vpop.f32.mrb[0].mxu0
  %v979 = vadd.f32 0.0, %v978
  %980 = vmatprep.mubr.f32.mxu0 0.0
  %981 = vmatmul.mubr.f32.gmra.mrb[0].mxu0 %v782
  %v982 = vpop.f32.mrb[0].mxu0
  %v983 = vadd.f32 0.0, %v982
  %v984 = vpop.f32.mrb[0].mxu0
  %v985 = vadd.f32 0.0, %v984
  %986 = vmatprep.mubr.f32.mxu0 0.0
  %987 = vmatmul.mubr.f32.gmra.mrb[0].mxu0 %v785
  %v988 = vpop.f32.mrb[0].mxu0
  %v989 = vadd.f32 0.0, %v988
  %v990 = vpop.f32.mrb[0].mxu0
  %v991 = vadd.f32 0.0, %v990
  %992 = vmatprep.mubr.f32.mxu0 0.0
  %993 = vmatmul.mubr.f32.gmra.mrb[0].mxu0 %v788
  %v994 = vpop.f32.mrb[0].mxu0
  %v995 = vadd.f32 0.0, %v994
  %v996 = vpop.f32.mrb[0].mxu0
  %v997 = vadd.f32 0.0, %v996
  %998 = vmatprep.mubr.f32.mxu0 0.0
  %999 = vmatmul.mubr.f32.gmra.mrb[0].mxu0 %v791
  %v1000 = vpop.f32.mrb[0].mxu0
  %v1001 = vadd.f32 0.0, %v1000
  %v1002 = vpop.f32.mrb[0].mxu0
  %v1003 = vadd.f32 0.0, %v1002
  %1004 = vmatprep.mubr.f32.mxu0 0.0
  %1005 = vmatmul.mubr.f32.gmra.mrb[0].mxu0 %v794
  %v1006 = vpop.f32.mrb[0].mxu0
  %v1007 = vadd.f32 0.0, %v1006
  %v1008 = vpop.f32.mrb[0].mxu0
  %v1009 = vadd.f32 0.0, %v1008
  %1010 = vdwg.mxu0
  %v1011 = vadd.f32 %v549, %v869
  %v1012 = vadd.f32 %v551, %v871
  %v1013 = vadd.f32 %v555, %v875
  %v1014 = vadd.f32 %v557, %v877
  %v1015 = vadd.f32 %v561, %v881
  %v1016 = vadd.f32 %v563, %v883
  %v1017 = vadd.f32 %v567, %v887
  %v1018 = vadd.f32 %v569, %v889
  %v1019 = vadd.f32 %v573, %v893
  %v1020 = vadd.f32 %v575, %v895
  %v1021 = vadd.f32 %v579, %v899
  %v1022 = vadd.f32 %v581, %v901
  %v1023 = vadd.f32 %v585, %v905
  %v1024 = vadd.f32 %v587, %v907
  %v1025 = vadd.f32 %v591, %v911
  %v1026 = vadd.f32 %v593, %v913
  %v1027 = vadd.f32 %v597, %v917
  %v1028 = vadd.f32 %v599, %v919
  %v1029 = vadd.f32 %v603, %v923
  %v1030 = vadd.f32 %v605, %v925
  %v1031 = vadd.f32 %v609, %v929
  %v1032 = vadd.f32 %v611, %v931
  %v1033 = vadd.f32 %v615, %v935
  %v1034 = vadd.f32 %v617, %v937
  %v1035 = vadd.f32 %v621, %v941
  %v1036 = vadd.f32 %v623, %v943
  %v1037 = vadd.f32 %v627, %v947
  %v1038 = vadd.f32 %v629, %v949
  %v1039 = vadd.f32 %v633, %v953
  %v1040 = vadd.f32 %v635, %v955
  %v1041 = vadd.f32 %v639, %v959
  %v1042 = vadd.f32 %v641, %v961
  %v1043 = vadd.f32 %v645, %v965
  %v1044 = vadd.f32 %v647, %v967
  %v1045 = vadd.f32 %v651, %v971
  %v1046 = vadd.f32 %v653, %v973
  %v1047 = vadd.f32 %v657, %v977
  %v1048 = vadd.f32 %v659, %v979
  %v1049 = vadd.f32 %v663, %v983
  %v1050 = vadd.f32 %v665, %v985
  %v1051 = vadd.f32 %v669, %v989
  %v1052 = vadd.f32 %v671, %v991
  %v1053 = vadd.f32 %v675, %v995
  %v1054 = vadd.f32 %v677, %v997
  %v1055 = vadd.f32 %v681, %v1001
  %v1056 = vadd.f32 %v683, %v1003
  %v1057 = vadd.f32 %v687, %v1007
  %v1058 = vadd.f32 %v689, %v1009
  %v1059 = vld [vmem:[%s0 + $0x3] sm:$0xff]
  %v1060 = vld [vmem:[%s0 + $0xb] sm:$0xff]
  %v1061 = vld [vmem:[%s0 + $0x13] sm:$0xff]
  %v1062 = vld [vmem:[%s0 + $0x23] sm:$0xff]
  %v1063 = vld [vmem:[%s0 + $0x2b] sm:$0xff]
  %v1064 = vld [vmem:[%s0 + $0x33] sm:$0xff]
  %v1065 = vld [vmem:[%s0 + $0x43] sm:$0xff]
  %v1066 = vld [vmem:[%s0 + $0x4b] sm:$0xff]
  %v1067 = vld [vmem:[%s0 + $0x53] sm:$0xff]
  %v1068 = vld [vmem:[%s0 + $0x63] sm:$0xff]
  %v1069 = vld [vmem:[%s0 + $0x6b] sm:$0xff]
  %v1070 = vld [vmem:[%s0 + $0x73] sm:$0xff]
  %v1071 = vld [vmem:[%s0 + $0x83] sm:$0xff]
  %v1072 = vld [vmem:[%s0 + $0x8b] sm:$0xff]
  %v1073 = vld [vmem:[%s0 + $0x93] sm:$0xff]
  %v1074 = vld [vmem:[%s0 + $0xa3] sm:$0xff]
  %v1075 = vld [vmem:[%s0 + $0xab] sm:$0xff]
  %v1076 = vld [vmem:[%s0 + $0xb3] sm:$0xff]
  %v1077 = vld [vmem:[%s0 + $0xc3] sm:$0xff]
  %v1078 = vld [vmem:[%s0 + $0xcb] sm:$0xff]
  %v1079 = vld [vmem:[%s0 + $0xd3] sm:$0xff]
  %v1080 = vld [vmem:[%s0 + $0xe3] sm:$0xff]
  %v1081 = vld [vmem:[%s0 + $0xeb] sm:$0xff]
  %v1082 = vld [vmem:[%s0 + $0xf3] sm:$0xff]
  %s1083 = scalar_lea.vmem %s1, 192
  %v1084 = vld [vmem:[%s1083] sm:$0xff]
  %v1085 = vld [vmem:[%s1083 + $0x8] sm:$0xff]
  %v1086 = vld [vmem:[%s1083 + $0x10] sm:$0xff]
  %v1087 = vld [vmem:[%s1083 + $0x18] sm:$0xff]
  %v1088 = vld [vmem:[%s1083 + $0x20] sm:$0xff]
  %v1089 = vld [vmem:[%s1083 + $0x28] sm:$0xff]
  %v1090 = vld [vmem:[%s1083 + $0x30] sm:$0xf]
  %v1091 = vld [vmem:[%s1083 + $0x38] sm:$0xf]
  %v1093 = vsel %vm115, %v1059, 0
  %v1096 = vsel %vm115, %v1060, 0
  %v1099 = vsel %vm115, %v1061, 0
  %v1102 = vsel %vm115, %v1062, 0
  %v1105 = vsel %vm115, %v1063, 0
  %v1108 = vsel %vm115, %v1064, 0
  %v1111 = vsel %vm115, %v1065, 0
  %v1114 = vsel %vm115, %v1066, 0
  %v1117 = vsel %vm115, %v1067, 0
  %v1120 = vsel %vm115, %v1068, 0
  %v1123 = vsel %vm115, %v1069, 0
  %v1126 = vsel %vm115, %v1070, 0
  %v1129 = vsel %vm115, %v1071, 0
  %v1132 = vsel %vm115, %v1072, 0
  %v1135 = vsel %vm115, %v1073, 0
  %v1138 = vsel %vm115, %v1074, 0
  %v1141 = vsel %vm115, %v1075, 0
  %v1144 = vsel %vm115, %v1076, 0
  %v1147 = vsel %vm115, %v1077, 0
  %v1150 = vsel %vm115, %v1078, 0
  %v1153 = vsel %vm115, %v1079, 0
  %v1156 = vsel %vm115, %v1080, 0
  %v1159 = vsel %vm115, %v1081, 0
  %v1162 = vsel %vm115, %v1082, 0
  %v1165 = vsel %vm188, %v1090, 0
  %v1168 = vsel %vm188, %v1091, 0
  %1170 = vmatprep.subr.mxu0 %v1085
  %1171 = vmatpush1.msra.mxu0 %v1084
  %1172 = vmatprep.subr.mxu0 %v1087
  %1173 = vmatpush1.msra.mxu0 %v1086
  %1174 = vmatprep.subr.mxu0 %v1089
  %1175 = vmatpush1.msra.mxu0 %v1088
  %1176 = vmatprep.subr.mxu0 %v1168
  %1177 = vmatpush1.msra.mxu0 %v1165
  %1178 = vmatprep.subr.mxu0 0.0
  %1179 = vmatpush1.msra.mxu0 0.0
  %1180 = vmatprep.subr.mxu0 0.0
  %1181 = vmatpush1.msra.mxu0 0.0
  %1182 = vmatprep.subr.mxu0 0.0
  %1183 = vmatpush1.msra.mxu0 0.0
  %1184 = vmatprep.subr.mxu0 0.0
  %1185 = vmatpush1.msra.mxu0 0.0
  %1186 = vmatprep.subr.mxu0 0.0
  %1187 = vmatpush1.msra.mxu0 0.0
  %1188 = vmatprep.subr.mxu0 0.0
  %1189 = vmatpush1.msra.mxu0 0.0
  %1190 = vmatprep.subr.mxu0 0.0
  %1191 = vmatpush1.msra.mxu0 0.0
  %1192 = vmatprep.subr.mxu0 0.0
  %1193 = vmatpush1.msra.mxu0 0.0
  %1194 = vmatprep.subr.mxu0 0.0
  %1195 = vmatpush1.msra.mxu0 0.0
  %1196 = vmatprep.subr.mxu0 0.0
  %1197 = vmatpush1.msra.mxu0 0.0
  %1198 = vmatprep.subr.mxu0 0.0
  %1199 = vmatpush1.msra.mxu0 0.0
  %1200 = vmatprep.subr.mxu0 0.0
  %1201 = vmatpush1.msra.mxu0 0.0
  %1202 = vmatprep.subr.mxu0 0.0
  %1203 = vmatpush1.msra.mxu0 0.0
  %1204 = vmatprep.subr.mxu0 0.0
  %1205 = vmatpush1.msra.mxu0 0.0
  %1206 = vmatprep.subr.mxu0 0.0
  %1207 = vmatpush1.msra.mxu0 0.0
  %1208 = vmatprep.subr.mxu0 0.0
  %1209 = vmatpush1.msra.mxu0 0.0
  %1210 = vmatprep.subr.mxu0 0.0
  %1211 = vmatpush1.msra.mxu0 0.0
  %1212 = vmatprep.subr.mxu0 0.0
  %1213 = vmatpush1.msra.mxu0 0.0
  %1214 = vmatprep.subr.mxu0 0.0
  %1215 = vmatpush1.msra.mxu0 0.0
  %1216 = vmatprep.subr.mxu0 0.0
  %1217 = vmatpush1.msra.mxu0 0.0
  %1218 = vmatprep.subr.mxu0 0.0
  %1219 = vmatpush1.msra.mxu0 0.0
  %1220 = vmatprep.subr.mxu0 0.0
  %1221 = vmatpush1.msra.mxu0 0.0
  %1222 = vmatprep.subr.mxu0 0.0
  %1223 = vmatpush1.msra.mxu0 0.0
  %1224 = vmatprep.subr.mxu0 0.0
  %1225 = vmatpush1.msra.mxu0 0.0
  %1226 = vmatprep.subr.mxu0 0.0
  %1227 = vmatpush1.msra.mxu0 0.0
  %1228 = vmatprep.subr.mxu0 0.0
  %1229 = vmatpush1.msra.mxu0 0.0
  %1230 = vmatprep.subr.mxu0 0.0
  %1231 = vmatpush1.msra.mxu0 0.0
  %1232 = vmatprep.subr.mxu0 0.0
  %1233 = vmatpush1.msra.mxu0 0.0
  %1234 = vmatprep.mubr.f32.mxu0 0.0
  %1235 = vmatmul.mubr.f32.gmra.mrb[0].mxu0 %v1093
  %v1236 = vpop.f32.mrb[0].mxu0
  %v1237 = vadd.f32 0.0, %v1236
  %v1238 = vpop.f32.mrb[0].mxu0
  %v1239 = vadd.f32 0.0, %v1238
  %1240 = vmatprep.mubr.f32.mxu0 0.0
  %1241 = vmatmul.mubr.f32.gmra.mrb[0].mxu0 %v1096
  %v1242 = vpop.f32.mrb[0].mxu0
  %v1243 = vadd.f32 0.0, %v1242
  %v1244 = vpop.f32.mrb[0].mxu0
  %v1245 = vadd.f32 0.0, %v1244
  %1246 = vmatprep.mubr.f32.mxu0 0.0
  %1247 = vmatmul.mubr.f32.gmra.mrb[0].mxu0 %v1099
  %v1248 = vpop.f32.mrb[0].mxu0
  %v1249 = vadd.f32 0.0, %v1248
  %v1250 = vpop.f32.mrb[0].mxu0
  %v1251 = vadd.f32 0.0, %v1250
  %1252 = vmatprep.mubr.f32.mxu0 0.0
  %1253 = vmatmul.mubr.f32.gmra.mrb[0].mxu0 %v1102
  %v1254 = vpop.f32.mrb[0].mxu0
  %v1255 = vadd.f32 0.0, %v1254
  %v1256 = vpop.f32.mrb[0].mxu0
  %v1257 = vadd.f32 0.0, %v1256
  %1258 = vmatprep.mubr.f32.mxu0 0.0
  %1259 = vmatmul.mubr.f32.gmra.mrb[0].mxu0 %v1105
  %v1260 = vpop.f32.mrb[0].mxu0
  %v1261 = vadd.f32 0.0, %v1260
  %v1262 = vpop.f32.mrb[0].mxu0
  %v1263 = vadd.f32 0.0, %v1262
  %1264 = vmatprep.mubr.f32.mxu0 0.0
  %1265 = vmatmul.mubr.f32.gmra.mrb[0].mxu0 %v1108
  %v1266 = vpop.f32.mrb[0].mxu0
  %v1267 = vadd.f32 0.0, %v1266
  %v1268 = vpop.f32.mrb[0].mxu0
  %v1269 = vadd.f32 0.0, %v1268
  %1270 = vmatprep.mubr.f32.mxu0 0.0
  %1271 = vmatmul.mubr.f32.gmra.mrb[0].mxu0 %v1111
  %v1272 = vpop.f32.mrb[0].mxu0
  %v1273 = vadd.f32 0.0, %v1272
  %v1274 = vpop.f32.mrb[0].mxu0
  %v1275 = vadd.f32 0.0, %v1274
  %1276 = vmatprep.mubr.f32.mxu0 0.0
  %1277 = vmatmul.mubr.f32.gmra.mrb[0].mxu0 %v1114
  %v1278 = vpop.f32.mrb[0].mxu0
  %v1279 = vadd.f32 0.0, %v1278
  %v1280 = vpop.f32.mrb[0].mxu0
  %v1281 = vadd.f32 0.0, %v1280
  %1282 = vmatprep.mubr.f32.mxu0 0.0
  %1283 = vmatmul.mubr.f32.gmra.mrb[0].mxu0 %v1117
  %v1284 = vpop.f32.mrb[0].mxu0
  %v1285 = vadd.f32 0.0, %v1284
  %v1286 = vpop.f32.mrb[0].mxu0
  %v1287 = vadd.f32 0.0, %v1286
  %1288 = vmatprep.mubr.f32.mxu0 0.0
  %1289 = vmatmul.mubr.f32.gmra.mrb[0].mxu0 %v1120
  %v1290 = vpop.f32.mrb[0].mxu0
  %v1291 = vadd.f32 0.0, %v1290
  %v1292 = vpop.f32.mrb[0].mxu0
  %v1293 = vadd.f32 0.0, %v1292
  %1294 = vmatprep.mubr.f32.mxu0 0.0
  %1295 = vmatmul.mubr.f32.gmra.mrb[0].mxu0 %v1123
  %v1296 = vpop.f32.mrb[0].mxu0
  %v1297 = vadd.f32 0.0, %v1296
  %v1298 = vpop.f32.mrb[0].mxu0
  %v1299 = vadd.f32 0.0, %v1298
  %1300 = vmatprep.mubr.f32.mxu0 0.0
  %1301 = vmatmul.mubr.f32.gmra.mrb[0].mxu0 %v1126
  %v1302 = vpop.f32.mrb[0].mxu0
  %v1303 = vadd.f32 0.0, %v1302
  %v1304 = vpop.f32.mrb[0].mxu0
  %v1305 = vadd.f32 0.0, %v1304
  %1306 = vmatprep.mubr.f32.mxu0 0.0
  %1307 = vmatmul.mubr.f32.gmra.mrb[0].mxu0 %v1129
  %v1308 = vpop.f32.mrb[0].mxu0
  %v1309 = vadd.f32 0.0, %v1308
  %v1310 = vpop.f32.mrb[0].mxu0
  %v1311 = vadd.f32 0.0, %v1310
  %1312 = vmatprep.mubr.f32.mxu0 0.0
  %1313 = vmatmul.mubr.f32.gmra.mrb[0].mxu0 %v1132
  %v1314 = vpop.f32.mrb[0].mxu0
  %v1315 = vadd.f32 0.0, %v1314
  %v1316 = vpop.f32.mrb[0].mxu0
  %v1317 = vadd.f32 0.0, %v1316
  %1318 = vmatprep.mubr.f32.mxu0 0.0
  %1319 = vmatmul.mubr.f32.gmra.mrb[0].mxu0 %v1135
  %v1320 = vpop.f32.mrb[0].mxu0
  %v1321 = vadd.f32 0.0, %v1320
  %v1322 = vpop.f32.mrb[0].mxu0
  %v1323 = vadd.f32 0.0, %v1322
  %1324 = vmatprep.mubr.f32.mxu0 0.0
  %1325 = vmatmul.mubr.f32.gmra.mrb[0].mxu0 %v1138
  %v1326 = vpop.f32.mrb[0].mxu0
  %v1327 = vadd.f32 0.0, %v1326
  %v1328 = vpop.f32.mrb[0].mxu0
  %v1329 = vadd.f32 0.0, %v1328
  %1330 = vmatprep.mubr.f32.mxu0 0.0
  %1331 = vmatmul.mubr.f32.gmra.mrb[0].mxu0 %v1141
  %v1332 = vpop.f32.mrb[0].mxu0
  %v1333 = vadd.f32 0.0, %v1332
  %v1334 = vpop.f32.mrb[0].mxu0
  %v1335 = vadd.f32 0.0, %v1334
  %1336 = vmatprep.mubr.f32.mxu0 0.0
  %1337 = vmatmul.mubr.f32.gmra.mrb[0].mxu0 %v1144
  %v1338 = vpop.f32.mrb[0].mxu0
  %v1339 = vadd.f32 0.0, %v1338
  %v1340 = vpop.f32.mrb[0].mxu0
  %v1341 = vadd.f32 0.0, %v1340
  %1342 = vmatprep.mubr.f32.mxu0 0.0
  %1343 = vmatmul.mubr.f32.gmra.mrb[0].mxu0 %v1147
  %v1344 = vpop.f32.mrb[0].mxu0
  %v1345 = vadd.f32 0.0, %v1344
  %v1346 = vpop.f32.mrb[0].mxu0
  %v1347 = vadd.f32 0.0, %v1346
  %1348 = vmatprep.mubr.f32.mxu0 0.0
  %1349 = vmatmul.mubr.f32.gmra.mrb[0].mxu0 %v1150
  %v1350 = vpop.f32.mrb[0].mxu0
  %v1351 = vadd.f32 0.0, %v1350
  %v1352 = vpop.f32.mrb[0].mxu0
  %v1353 = vadd.f32 0.0, %v1352
  %1354 = vmatprep.mubr.f32.mxu0 0.0
  %1355 = vmatmul.mubr.f32.gmra.mrb[0].mxu0 %v1153
  %v1356 = vpop.f32.mrb[0].mxu0
  %v1357 = vadd.f32 0.0, %v1356
  %v1358 = vpop.f32.mrb[0].mxu0
  %v1359 = vadd.f32 0.0, %v1358
  %1360 = vmatprep.mubr.f32.mxu0 0.0
  %1361 = vmatmul.mubr.f32.gmra.mrb[0].mxu0 %v1156
  %v1362 = vpop.f32.mrb[0].mxu0
  %v1363 = vadd.f32 0.0, %v1362
  %v1364 = vpop.f32.mrb[0].mxu0
  %v1365 = vadd.f32 0.0, %v1364
  %1366 = vmatprep.mubr.f32.mxu0 0.0
  %1367 = vmatmul.mubr.f32.gmra.mrb[0].mxu0 %v1159
  %v1368 = vpop.f32.mrb[0].mxu0
  %v1369 = vadd.f32 0.0, %v1368
  %v1370 = vpop.f32.mrb[0].mxu0
  %v1371 = vadd.f32 0.0, %v1370
  %1372 = vmatprep.mubr.f32.mxu0 0.0
  %1373 = vmatmul.mubr.f32.gmra.mrb[0].mxu0 %v1162
  %v1374 = vpop.f32.mrb[0].mxu0
  %v1375 = vadd.f32 0.0, %v1374
  %v1376 = vpop.f32.mrb[0].mxu0
  %v1377 = vadd.f32 0.0, %v1376
  %1378 = vdwg.mxu0
  %v1379 = vadd.f32 %v1011, %v1237
  %v1380 = vadd.f32 %v1012, %v1239
  %v1381 = vadd.f32 %v1013, %v1243
  %v1382 = vadd.f32 %v1014, %v1245
  %v1383 = vadd.f32 %v1015, %v1249
  %v1384 = vadd.f32 %v1016, %v1251
  %v1385 = vadd.f32 %v1017, %v1255
  %v1386 = vadd.f32 %v1018, %v1257
  %v1387 = vadd.f32 %v1019, %v1261
  %v1388 = vadd.f32 %v1020, %v1263
  %v1389 = vadd.f32 %v1021, %v1267
  %v1390 = vadd.f32 %v1022, %v1269
  %v1391 = vadd.f32 %v1023, %v1273
  %v1392 = vadd.f32 %v1024, %v1275
  %v1393 = vadd.f32 %v1025, %v1279
  %v1394 = vadd.f32 %v1026, %v1281
  %v1395 = vadd.f32 %v1027, %v1285
  %v1396 = vadd.f32 %v1028, %v1287
  %v1397 = vadd.f32 %v1029, %v1291
  %v1398 = vadd.f32 %v1030, %v1293
  %v1399 = vadd.f32 %v1031, %v1297
  %v1400 = vadd.f32 %v1032, %v1299
  %v1401 = vadd.f32 %v1033, %v1303
  %v1402 = vadd.f32 %v1034, %v1305
  %v1403 = vadd.f32 %v1035, %v1309
  %v1404 = vadd.f32 %v1036, %v1311
  %v1405 = vadd.f32 %v1037, %v1315
  %v1406 = vadd.f32 %v1038, %v1317
  %v1407 = vadd.f32 %v1039, %v1321
  %v1408 = vadd.f32 %v1040, %v1323
  %v1409 = vadd.f32 %v1041, %v1327
  %v1410 = vadd.f32 %v1042, %v1329
  %v1411 = vadd.f32 %v1043, %v1333
  %v1412 = vadd.f32 %v1044, %v1335
  %v1413 = vadd.f32 %v1045, %v1339
  %v1414 = vadd.f32 %v1046, %v1341
  %v1415 = vadd.f32 %v1047, %v1345
  %v1416 = vadd.f32 %v1048, %v1347
  %v1417 = vadd.f32 %v1049, %v1351
  %v1418 = vadd.f32 %v1050, %v1353
  %v1419 = vadd.f32 %v1051, %v1357
  %v1420 = vadd.f32 %v1052, %v1359
  %v1421 = vadd.f32 %v1053, %v1363
  %v1422 = vadd.f32 %v1054, %v1365
  %v1423 = vadd.f32 %v1055, %v1369
  %v1424 = vadd.f32 %v1056, %v1371
  %v1425 = vadd.f32 %v1057, %v1375
  %v1426 = vadd.f32 %v1058, %v1377
  %v1427 = vld [vmem:[%s0 + $0x4] sm:$0xff]
  %v1428 = vld [vmem:[%s0 + $0xc] sm:$0xff]
  %v1429 = vld [vmem:[%s0 + $0x14] sm:$0xff]
  %v1430 = vld [vmem:[%s0 + $0x24] sm:$0xff]
  %v1431 = vld [vmem:[%s0 + $0x2c] sm:$0xff]
  %v1432 = vld [vmem:[%s0 + $0x34] sm:$0xff]
  %v1433 = vld [vmem:[%s0 + $0x44] sm:$0xff]
  %v1434 = vld [vmem:[%s0 + $0x4c] sm:$0xff]
  %v1435 = vld [vmem:[%s0 + $0x54] sm:$0xff]
  %v1436 = vld [vmem:[%s0 + $0x64] sm:$0xff]
  %v1437 = vld [vmem:[%s0 + $0x6c] sm:$0xff]
  %v1438 = vld [vmem:[%s0 + $0x74] sm:$0xff]
  %v1439 = vld [vmem:[%s0 + $0x84] sm:$0xff]
  %v1440 = vld [vmem:[%s0 + $0x8c] sm:$0xff]
  %v1441 = vld [vmem:[%s0 + $0x94] sm:$0xff]
  %v1442 = vld [vmem:[%s0 + $0xa4] sm:$0xff]
  %v1443 = vld [vmem:[%s0 + $0xac] sm:$0xff]
  %v1444 = vld [vmem:[%s0 + $0xb4] sm:$0xff]
  %v1445 = vld [vmem:[%s0 + $0xc4] sm:$0xff]
  %v1446 = vld [vmem:[%s0 + $0xcc] sm:$0xff]
  %v1447 = vld [vmem:[%s0 + $0xd4] sm:$0xff]
  %v1448 = vld [vmem:[%s0 + $0xe4] sm:$0xff]
  %v1449 = vld [vmem:[%s0 + $0xec] sm:$0xff]
  %v1450 = vld [vmem:[%s0 + $0xf4] sm:$0xff]
  %s1451 = scalar_lea.vmem %s1, 256
  %v1452 = vld [vmem:[%s1451] sm:$0xff]
  %v1453 = vld [vmem:[%s1451 + $0x8] sm:$0xff]
  %v1454 = vld [vmem:[%s1451 + $0x10] sm:$0xff]
  %v1455 = vld [vmem:[%s1451 + $0x18] sm:$0xff]
  %v1456 = vld [vmem:[%s1451 + $0x20] sm:$0xff]
  %v1457 = vld [vmem:[%s1451 + $0x28] sm:$0xff]
  %v1458 = vld [vmem:[%s1451 + $0x30] sm:$0xf]
  %v1459 = vld [vmem:[%s1451 + $0x38] sm:$0xf]
  %v1461 = vsel %vm115, %v1427, 0
  %v1464 = vsel %vm115, %v1428, 0
  %v1467 = vsel %vm115, %v1429, 0
  %v1470 = vsel %vm115, %v1430, 0
  %v1473 = vsel %vm115, %v1431, 0
  %v1476 = vsel %vm115, %v1432, 0
  %v1479 = vsel %vm115, %v1433, 0
  %v1482 = vsel %vm115, %v1434, 0
  %v1485 = vsel %vm115, %v1435, 0
  %v1488 = vsel %vm115, %v1436, 0
  %v1491 = vsel %vm115, %v1437, 0
  %v1494 = vsel %vm115, %v1438, 0
  %v1497 = vsel %vm115, %v1439, 0
  %v1500 = vsel %vm115, %v1440, 0
  %v1503 = vsel %vm115, %v1441, 0
  %v1506 = vsel %vm115, %v1442, 0
  %v1509 = vsel %vm115, %v1443, 0
  %v1512 = vsel %vm115, %v1444, 0
  %v1515 = vsel %vm115, %v1445, 0
  %v1518 = vsel %vm115, %v1446, 0
  %v1521 = vsel %vm115, %v1447, 0
  %v1524 = vsel %vm115, %v1448, 0
  %v1527 = vsel %vm115, %v1449, 0
  %v1530 = vsel %vm115, %v1450, 0
  %v1533 = vsel %vm188, %v1458, 0
  %v1536 = vsel %vm188, %v1459, 0
  %1538 = vmatprep.subr.mxu0 %v1453
  %1539 = vmatpush1.msra.mxu0 %v1452
  %1540 = vmatprep.subr.mxu0 %v1455
  %1541 = vmatpush1.msra.mxu0 %v1454
  %1542 = vmatprep.subr.mxu0 %v1457
  %1543 = vmatpush1.msra.mxu0 %v1456
  %1544 = vmatprep.subr.mxu0 %v1536
  %1545 = vmatpush1.msra.mxu0 %v1533
  %1546 = vmatprep.subr.mxu0 0.0
  %1547 = vmatpush1.msra.mxu0 0.0
  %1548 = vmatprep.subr.mxu0 0.0
  %1549 = vmatpush1.msra.mxu0 0.0
  %1550 = vmatprep.subr.mxu0 0.0
  %1551 = vmatpush1.msra.mxu0 0.0
  %1552 = vmatprep.subr.mxu0 0.0
  %1553 = vmatpush1.msra.mxu0 0.0
  %1554 = vmatprep.subr.mxu0 0.0
  %1555 = vmatpush1.msra.mxu0 0.0
  %1556 = vmatprep.subr.mxu0 0.0
  %1557 = vmatpush1.msra.mxu0 0.0
  %1558 = vmatprep.subr.mxu0 0.0
  %1559 = vmatpush1.msra.mxu0 0.0
  %1560 = vmatprep.subr.mxu0 0.0
  %1561 = vmatpush1.msra.mxu0 0.0
  %1562 = vmatprep.subr.mxu0 0.0
  %1563 = vmatpush1.msra.mxu0 0.0
  %1564 = vmatprep.subr.mxu0 0.0
  %1565 = vmatpush1.msra.mxu0 0.0
  %1566 = vmatprep.subr.mxu0 0.0
  %1567 = vmatpush1.msra.mxu0 0.0
  %1568 = vmatprep.subr.mxu0 0.0
  %1569 = vmatpush1.msra.mxu0 0.0
  %1570 = vmatprep.subr.mxu0 0.0
  %1571 = vmatpush1.msra.mxu0 0.0
  %1572 = vmatprep.subr.mxu0 0.0
  %1573 = vmatpush1.msra.mxu0 0.0
  %1574 = vmatprep.subr.mxu0 0.0
  %1575 = vmatpush1.msra.mxu0 0.0
  %1576 = vmatprep.subr.mxu0 0.0
  %1577 = vmatpush1.msra.mxu0 0.0
  %1578 = vmatprep.subr.mxu0 0.0
  %1579 = vmatpush1.msra.mxu0 0.0
  %1580 = vmatprep.subr.mxu0 0.0
  %1581 = vmatpush1.msra.mxu0 0.0
  %1582 = vmatprep.subr.mxu0 0.0
  %1583 = vmatpush1.msra.mxu0 0.0
  %1584 = vmatprep.subr.mxu0 0.0
  %1585 = vmatpush1.msra.mxu0 0.0
  %1586 = vmatprep.subr.mxu0 0.0
  %1587 = vmatpush1.msra.mxu0 0.0
  %1588 = vmatprep.subr.mxu0 0.0
  %1589 = vmatpush1.msra.mxu0 0.0
  %1590 = vmatprep.subr.mxu0 0.0
  %1591 = vmatpush1.msra.mxu0 0.0
  %1592 = vmatprep.subr.mxu0 0.0
  %1593 = vmatpush1.msra.mxu0 0.0
  %1594 = vmatprep.subr.mxu0 0.0
  %1595 = vmatpush1.msra.mxu0 0.0
  %1596 = vmatprep.subr.mxu0 0.0
  %1597 = vmatpush1.msra.mxu0 0.0
  %1598 = vmatprep.subr.mxu0 0.0
  %1599 = vmatpush1.msra.mxu0 0.0
  %1600 = vmatprep.subr.mxu0 0.0
  %1601 = vmatpush1.msra.mxu0 0.0
  %1602 = vmatprep.mubr.f32.mxu0 0.0
  %1603 = vmatmul.mubr.f32.gmra.mrb[0].mxu0 %v1461
  %v1604 = vpop.f32.mrb[0].mxu0
  %v1605 = vadd.f32 0.0, %v1604
  %v1606 = vpop.f32.mrb[0].mxu0
  %v1607 = vadd.f32 0.0, %v1606
  %1608 = vmatprep.mubr.f32.mxu0 0.0
  %1609 = vmatmul.mubr.f32.gmra.mrb[0].mxu0 %v1464
  %v1610 = vpop.f32.mrb[0].mxu0
  %v1611 = vadd.f32 0.0, %v1610
  %v1612 = vpop.f32.mrb[0].mxu0
  %v1613 = vadd.f32 0.0, %v1612
  %1614 = vmatprep.mubr.f32.mxu0 0.0
  %1615 = vmatmul.mubr.f32.gmra.mrb[0].mxu0 %v1467
  %v1616 = vpop.f32.mrb[0].mxu0
  %v1617 = vadd.f32 0.0, %v1616
  %v1618 = vpop.f32.mrb[0].mxu0
  %v1619 = vadd.f32 0.0, %v1618
  %1620 = vmatprep.mubr.f32.mxu0 0.0
  %1621 = vmatmul.mubr.f32.gmra.mrb[0].mxu0 %v1470
  %v1622 = vpop.f32.mrb[0].mxu0
  %v1623 = vadd.f32 0.0, %v1622
  %v1624 = vpop.f32.mrb[0].mxu0
  %v1625 = vadd.f32 0.0, %v1624
  %1626 = vmatprep.mubr.f32.mxu0 0.0
  %1627 = vmatmul.mubr.f32.gmra.mrb[0].mxu0 %v1473
  %v1628 = vpop.f32.mrb[0].mxu0
  %v1629 = vadd.f32 0.0, %v1628
  %v1630 = vpop.f32.mrb[0].mxu0
  %v1631 = vadd.f32 0.0, %v1630
  %1632 = vmatprep.mubr.f32.mxu0 0.0
  %1633 = vmatmul.mubr.f32.gmra.mrb[0].mxu0 %v1476
  %v1634 = vpop.f32.mrb[0].mxu0
  %v1635 = vadd.f32 0.0, %v1634
  %v1636 = vpop.f32.mrb[0].mxu0
  %v1637 = vadd.f32 0.0, %v1636
  %1638 = vmatprep.mubr.f32.mxu0 0.0
  %1639 = vmatmul.mubr.f32.gmra.mrb[0].mxu0 %v1479
  %v1640 = vpop.f32.mrb[0].mxu0
  %v1641 = vadd.f32 0.0, %v1640
  %v1642 = vpop.f32.mrb[0].mxu0
  %v1643 = vadd.f32 0.0, %v1642
  %1644 = vmatprep.mubr.f32.mxu0 0.0
  %1645 = vmatmul.mubr.f32.gmra.mrb[0].mxu0 %v1482
  %v1646 = vpop.f32.mrb[0].mxu0
  %v1647 = vadd.f32 0.0, %v1646
  %v1648 = vpop.f32.mrb[0].mxu0
  %v1649 = vadd.f32 0.0, %v1648
  %1650 = vmatprep.mubr.f32.mxu0 0.0
  %1651 = vmatmul.mubr.f32.gmra.mrb[0].mxu0 %v1485
  %v1652 = vpop.f32.mrb[0].mxu0
  %v1653 = vadd.f32 0.0, %v1652
  %v1654 = vpop.f32.mrb[0].mxu0
  %v1655 = vadd.f32 0.0, %v1654
  %1656 = vmatprep.mubr.f32.mxu0 0.0
  %1657 = vmatmul.mubr.f32.gmra.mrb[0].mxu0 %v1488
  %v1658 = vpop.f32.mrb[0].mxu0
  %v1659 = vadd.f32 0.0, %v1658
  %v1660 = vpop.f32.mrb[0].mxu0
  %v1661 = vadd.f32 0.0, %v1660
  %1662 = vmatprep.mubr.f32.mxu0 0.0
  %1663 = vmatmul.mubr.f32.gmra.mrb[0].mxu0 %v1491
  %v1664 = vpop.f32.mrb[0].mxu0
  %v1665 = vadd.f32 0.0, %v1664
  %v1666 = vpop.f32.mrb[0].mxu0
  %v1667 = vadd.f32 0.0, %v1666
  %1668 = vmatprep.mubr.f32.mxu0 0.0
  %1669 = vmatmul.mubr.f32.gmra.mrb[0].mxu0 %v1494
  %v1670 = vpop.f32.mrb[0].mxu0
  %v1671 = vadd.f32 0.0, %v1670
  %v1672 = vpop.f32.mrb[0].mxu0
  %v1673 = vadd.f32 0.0, %v1672
  %1674 = vmatprep.mubr.f32.mxu0 0.0
  %1675 = vmatmul.mubr.f32.gmra.mrb[0].mxu0 %v1497
  %v1676 = vpop.f32.mrb[0].mxu0
  %v1677 = vadd.f32 0.0, %v1676
  %v1678 = vpop.f32.mrb[0].mxu0
  %v1679 = vadd.f32 0.0, %v1678
  %1680 = vmatprep.mubr.f32.mxu0 0.0
  %1681 = vmatmul.mubr.f32.gmra.mrb[0].mxu0 %v1500
  %v1682 = vpop.f32.mrb[0].mxu0
  %v1683 = vadd.f32 0.0, %v1682
  %v1684 = vpop.f32.mrb[0].mxu0
  %v1685 = vadd.f32 0.0, %v1684
  %1686 = vmatprep.mubr.f32.mxu0 0.0
  %1687 = vmatmul.mubr.f32.gmra.mrb[0].mxu0 %v1503
  %v1688 = vpop.f32.mrb[0].mxu0
  %v1689 = vadd.f32 0.0, %v1688
  %v1690 = vpop.f32.mrb[0].mxu0
  %v1691 = vadd.f32 0.0, %v1690
  %1692 = vmatprep.mubr.f32.mxu0 0.0
  %1693 = vmatmul.mubr.f32.gmra.mrb[0].mxu0 %v1506
  %v1694 = vpop.f32.mrb[0].mxu0
  %v1695 = vadd.f32 0.0, %v1694
  %v1696 = vpop.f32.mrb[0].mxu0
  %v1697 = vadd.f32 0.0, %v1696
  %1698 = vmatprep.mubr.f32.mxu0 0.0
  %1699 = vmatmul.mubr.f32.gmra.mrb[0].mxu0 %v1509
  %v1700 = vpop.f32.mrb[0].mxu0
  %v1701 = vadd.f32 0.0, %v1700
  %v1702 = vpop.f32.mrb[0].mxu0
  %v1703 = vadd.f32 0.0, %v1702
  %1704 = vmatprep.mubr.f32.mxu0 0.0
  %1705 = vmatmul.mubr.f32.gmra.mrb[0].mxu0 %v1512
  %v1706 = vpop.f32.mrb[0].mxu0
  %v1707 = vadd.f32 0.0, %v1706
  %v1708 = vpop.f32.mrb[0].mxu0
  %v1709 = vadd.f32 0.0, %v1708
  %1710 = vmatprep.mubr.f32.mxu0 0.0
  %1711 = vmatmul.mubr.f32.gmra.mrb[0].mxu0 %v1515
  %v1712 = vpop.f32.mrb[0].mxu0
  %v1713 = vadd.f32 0.0, %v1712
  %v1714 = vpop.f32.mrb[0].mxu0
  %v1715 = vadd.f32 0.0, %v1714
  %1716 = vmatprep.mubr.f32.mxu0 0.0
  %1717 = vmatmul.mubr.f32.gmra.mrb[0].mxu0 %v1518
  %v1718 = vpop.f32.mrb[0].mxu0
  %v1719 = vadd.f32 0.0, %v1718
  %v1720 = vpop.f32.mrb[0].mxu0
  %v1721 = vadd.f32 0.0, %v1720
  %1722 = vmatprep.mubr.f32.mxu0 0.0
  %1723 = vmatmul.mubr.f32.gmra.mrb[0].mxu0 %v1521
  %v1724 = vpop.f32.mrb[0].mxu0
  %v1725 = vadd.f32 0.0, %v1724
  %v1726 = vpop.f32.mrb[0].mxu0
  %v1727 = vadd.f32 0.0, %v1726
  %1728 = vmatprep.mubr.f32.mxu0 0.0
  %1729 = vmatmul.mubr.f32.gmra.mrb[0].mxu0 %v1524
  %v1730 = vpop.f32.mrb[0].mxu0
  %v1731 = vadd.f32 0.0, %v1730
  %v1732 = vpop.f32.mrb[0].mxu0
  %v1733 = vadd.f32 0.0, %v1732
  %1734 = vmatprep.mubr.f32.mxu0 0.0
  %1735 = vmatmul.mubr.f32.gmra.mrb[0].mxu0 %v1527
  %v1736 = vpop.f32.mrb[0].mxu0
  %v1737 = vadd.f32 0.0, %v1736
  %v1738 = vpop.f32.mrb[0].mxu0
  %v1739 = vadd.f32 0.0, %v1738
  %1740 = vmatprep.mubr.f32.mxu0 0.0
  %1741 = vmatmul.mubr.f32.gmra.mrb[0].mxu0 %v1530
  %v1742 = vpop.f32.mrb[0].mxu0
  %v1743 = vadd.f32 0.0, %v1742
  %v1744 = vpop.f32.mrb[0].mxu0
  %v1745 = vadd.f32 0.0, %v1744
  %1746 = vdwg.mxu0
  %v1747 = vadd.f32 %v1379, %v1605
  %v1748 = vadd.f32 %v1380, %v1607
  %v1749 = vadd.f32 %v1381, %v1611
  %v1750 = vadd.f32 %v1382, %v1613
  %v1751 = vadd.f32 %v1383, %v1617
  %v1752 = vadd.f32 %v1384, %v1619
  %v1753 = vadd.f32 %v1385, %v1623
  %v1754 = vadd.f32 %v1386, %v1625
  %v1755 = vadd.f32 %v1387, %v1629
  %v1756 = vadd.f32 %v1388, %v1631
  %v1757 = vadd.f32 %v1389, %v1635
  %v1758 = vadd.f32 %v1390, %v1637
  %v1759 = vadd.f32 %v1391, %v1641
  %v1760 = vadd.f32 %v1392, %v1643
  %v1761 = vadd.f32 %v1393, %v1647
  %v1762 = vadd.f32 %v1394, %v1649
  %v1763 = vadd.f32 %v1395, %v1653
  %v1764 = vadd.f32 %v1396, %v1655
  %v1765 = vadd.f32 %v1397, %v1659
  %v1766 = vadd.f32 %v1398, %v1661
  %v1767 = vadd.f32 %v1399, %v1665
  %v1768 = vadd.f32 %v1400, %v1667
  %v1769 = vadd.f32 %v1401, %v1671
  %v1770 = vadd.f32 %v1402, %v1673
  %v1771 = vadd.f32 %v1403, %v1677
  %v1772 = vadd.f32 %v1404, %v1679
  %v1773 = vadd.f32 %v1405, %v1683
  %v1774 = vadd.f32 %v1406, %v1685
  %v1775 = vadd.f32 %v1407, %v1689
  %v1776 = vadd.f32 %v1408, %v1691
  %v1777 = vadd.f32 %v1409, %v1695
  %v1778 = vadd.f32 %v1410, %v1697
  %v1779 = vadd.f32 %v1411, %v1701
  %v1780 = vadd.f32 %v1412, %v1703
  %v1781 = vadd.f32 %v1413, %v1707
  %v1782 = vadd.f32 %v1414, %v1709
  %v1783 = vadd.f32 %v1415, %v1713
  %v1784 = vadd.f32 %v1416, %v1715
  %v1785 = vadd.f32 %v1417, %v1719
  %v1786 = vadd.f32 %v1418, %v1721
  %v1787 = vadd.f32 %v1419, %v1725
  %v1788 = vadd.f32 %v1420, %v1727
  %v1789 = vadd.f32 %v1421, %v1731
  %v1790 = vadd.f32 %v1422, %v1733
  %v1791 = vadd.f32 %v1423, %v1737
  %v1792 = vadd.f32 %v1424, %v1739
  %v1793 = vadd.f32 %v1425, %v1743
  %v1794 = vadd.f32 %v1426, %v1745
  %v1795 = vld [vmem:[%s2] sm:$0x3]
  %v1797 = vlaneseq
  %v1798 = vshrl.u32 %v1797, 7
  %v1799 = vsub.s32 0, %v1798
  %v1800 = vrot.slane %v1795, %v1799
  %v1801 = vlaneseq
  %v1802 = vshrl.u32 %v1801, 7
  %v1803 = vsub.s32 1, %v1802
  %v1804 = vrot.slane %v1795, %v1803
  %v1807 = vadd.f32 %v1747, %v1800
  %v1808 = vadd.f32 %v1748, %v1804
  %v1809 = vadd.f32 %v1749, %v1800
  %v1810 = vadd.f32 %v1750, %v1804
  %v1811 = vadd.f32 %v1751, %v1800
  %v1812 = vadd.f32 %v1752, %v1804
  %v1813 = vadd.f32 %v1753, %v1800
  %v1814 = vadd.f32 %v1754, %v1804
  %v1815 = vadd.f32 %v1755, %v1800
  %v1816 = vadd.f32 %v1756, %v1804
  %v1817 = vadd.f32 %v1757, %v1800
  %v1818 = vadd.f32 %v1758, %v1804
  %v1819 = vadd.f32 %v1759, %v1800
  %v1820 = vadd.f32 %v1760, %v1804
  %v1821 = vadd.f32 %v1761, %v1800
  %v1822 = vadd.f32 %v1762, %v1804
  %v1823 = vadd.f32 %v1763, %v1800
  %v1824 = vadd.f32 %v1764, %v1804
  %v1825 = vadd.f32 %v1765, %v1800
  %v1826 = vadd.f32 %v1766, %v1804
  %v1827 = vadd.f32 %v1767, %v1800
  %v1828 = vadd.f32 %v1768, %v1804
  %v1829 = vadd.f32 %v1769, %v1800
  %v1830 = vadd.f32 %v1770, %v1804
  %v1831 = vadd.f32 %v1771, %v1800
  %v1832 = vadd.f32 %v1772, %v1804
  %v1833 = vadd.f32 %v1773, %v1800
  %v1834 = vadd.f32 %v1774, %v1804
  %v1835 = vadd.f32 %v1775, %v1800
  %v1836 = vadd.f32 %v1776, %v1804
  %v1837 = vadd.f32 %v1777, %v1800
  %v1838 = vadd.f32 %v1778, %v1804
  %v1839 = vadd.f32 %v1779, %v1800
  %v1840 = vadd.f32 %v1780, %v1804
  %v1841 = vadd.f32 %v1781, %v1800
  %v1842 = vadd.f32 %v1782, %v1804
  %v1843 = vadd.f32 %v1783, %v1800
  %v1844 = vadd.f32 %v1784, %v1804
  %v1845 = vadd.f32 %v1785, %v1800
  %v1846 = vadd.f32 %v1786, %v1804
  %v1847 = vadd.f32 %v1787, %v1800
  %v1848 = vadd.f32 %v1788, %v1804
  %v1849 = vadd.f32 %v1789, %v1800
  %v1850 = vadd.f32 %v1790, %v1804
  %v1851 = vadd.f32 %v1791, %v1800
  %v1852 = vadd.f32 %v1792, %v1804
  %v1853 = vadd.f32 %v1793, %v1800
  %v1854 = vadd.f32 %v1794, %v1804
  %v1855 = vld [vmem:[%s3] sm:$0xff]
  %v1856 = vld [vmem:[%s3 + $0x8] sm:$0xff]
  %v1857 = vld [vmem:[%s3 + $0x10] sm:$0xff]
  %v1858 = vld [vmem:[%s3 + $0x18] sm:$0xff]
  %v1859 = vld [vmem:[%s3 + $0x20] sm:$0xff]
  %v1860 = vld [vmem:[%s3 + $0x28] sm:$0xff]
  %v1861 = vld [vmem:[%s3 + $0x30] sm:$0xff]
  %v1862 = vld [vmem:[%s3 + $0x38] sm:$0xff]
  %v1863 = vld [vmem:[%s3 + $0x40] sm:$0xff]
  %v1864 = vld [vmem:[%s3 + $0x48] sm:$0xff]
  %v1865 = vld [vmem:[%s3 + $0x50] sm:$0xff]
  %v1866 = vld [vmem:[%s3 + $0x58] sm:$0xff]
  %v1867 = vld [vmem:[%s3 + $0x60] sm:$0xff]
  %v1868 = vld [vmem:[%s3 + $0x68] sm:$0xff]
  %v1869 = vld [vmem:[%s3 + $0x70] sm:$0xff]
  %v1870 = vld [vmem:[%s3 + $0x78] sm:$0xff]
  %v1871 = vld [vmem:[%s3 + $0x80] sm:$0xff]
  %v1872 = vld [vmem:[%s3 + $0x88] sm:$0xff]
  %v1873 = vld [vmem:[%s3 + $0x90] sm:$0xff]
  %v1874 = vld [vmem:[%s3 + $0x98] sm:$0xff]
  %v1875 = vld [vmem:[%s3 + $0xa0] sm:$0xff]
  %v1876 = vld [vmem:[%s3 + $0xa8] sm:$0xff]
  %v1877 = vld [vmem:[%s3 + $0xb0] sm:$0xff]
  %v1878 = vld [vmem:[%s3 + $0xb8] sm:$0xff]
  %vm1879 = vcmask 523264
  %v1881 = vsel %vm1879, %v1856, 0
  %v1884 = vsel %vm1879, %v1858, 0
  %v1887 = vsel %vm1879, %v1860, 0
  %v1890 = vsel %vm1879, %v1862, 0
  %v1893 = vsel %vm1879, %v1864, 0
  %v1896 = vsel %vm1879, %v1866, 0
  %v1899 = vsel %vm1879, %v1868, 0
  %v1902 = vsel %vm1879, %v1870, 0
  %v1905 = vsel %vm1879, %v1872, 0
  %v1908 = vsel %vm1879, %v1874, 0
  %v1911 = vsel %vm1879, %v1876, 0
  %v1914 = vsel %vm1879, %v1878, 0
  %1916 = vmatprep.subr.mxu0 %v1808
  %1917 = vmatpush1.msra.mxu0 %v1807
  %1918 = vmatprep.subr.mxu0 %v1810
  %1919 = vmatpush1.msra.mxu0 %v1809
  %1920 = vmatprep.subr.mxu0 %v1812
  %1921 = vmatpush1.msra.mxu0 %v1811
  %1922 = vmatprep.subr.mxu0 %v1814
  %1923 = vmatpush1.msra.mxu0 %v1813
  %1924 = vmatprep.subr.mxu0 %v1816
  %1925 = vmatpush1.msra.mxu0 %v1815
  %1926 = vmatprep.subr.mxu0 %v1818
  %1927 = vmatpush1.msra.mxu0 %v1817
  %1928 = vmatprep.subr.mxu0 %v1820
  %1929 = vmatpush1.msra.mxu0 %v1819
  %1930 = vmatprep.subr.mxu0 %v1822
  %1931 = vmatpush1.msra.mxu0 %v1821
  %1932 = vmatprep.subr.mxu0 %v1824
  %1933 = vmatpush1.msra.mxu0 %v1823
  %1934 = vmatprep.subr.mxu0 %v1826
  %1935 = vmatpush1.msra.mxu0 %v1825
  %1936 = vmatprep.subr.mxu0 %v1828
  %1937 = vmatpush1.msra.mxu0 %v1827
  %1938 = vmatprep.subr.mxu0 %v1830
  %1939 = vmatpush1.msra.mxu0 %v1829
  %1940 = vmatprep.subr.mxu0 %v1832
  %1941 = vmatpush1.msra.mxu0 %v1831
  %1942 = vmatprep.subr.mxu0 %v1834
  %1943 = vmatpush1.msra.mxu0 %v1833
  %1944 = vmatprep.subr.mxu0 %v1836
  %1945 = vmatpush1.msra.mxu0 %v1835
  %1946 = vmatprep.subr.mxu0 %v1838
  %1947 = vmatpush1.msra.mxu0 %v1837
  %1948 = vmatprep.subr.mxu0 %v1840
  %1949 = vmatpush1.msra.mxu0 %v1839
  %1950 = vmatprep.subr.mxu0 %v1842
  %1951 = vmatpush1.msra.mxu0 %v1841
  %1952 = vmatprep.subr.mxu0 %v1844
  %1953 = vmatpush1.msra.mxu0 %v1843
  %1954 = vmatprep.subr.mxu0 %v1846
  %1955 = vmatpush1.msra.mxu0 %v1845
  %1956 = vmatprep.subr.mxu0 %v1848
  %1957 = vmatpush1.msra.mxu0 %v1847
  %1958 = vmatprep.subr.mxu0 %v1850
  %1959 = vmatpush1.msra.mxu0 %v1849
  %1960 = vmatprep.subr.mxu0 %v1852
  %1961 = vmatpush1.msra.mxu0 %v1851
  %1962 = vmatprep.subr.mxu0 %v1854
  %1963 = vmatpush1.msra.mxu0 %v1853
  %1964 = vmatprep.subr.mxu0 0.0
  %1965 = vmatpush1.msra.mxu0 0.0
  %1966 = vmatprep.subr.mxu0 0.0
  %1967 = vmatpush1.msra.mxu0 0.0
  %1968 = vmatprep.subr.mxu0 0.0
  %1969 = vmatpush1.msra.mxu0 0.0
  %1970 = vmatprep.subr.mxu0 0.0
  %1971 = vmatpush1.msra.mxu0 0.0
  %1972 = vmatprep.subr.mxu0 0.0
  %1973 = vmatpush1.msra.mxu0 0.0
  %1974 = vmatprep.subr.mxu0 0.0
  %1975 = vmatpush1.msra.mxu0 0.0
  %1976 = vmatprep.subr.mxu0 0.0
  %1977 = vmatpush1.msra.mxu0 0.0
  %1978 = vmatprep.subr.mxu0 0.0
  %1979 = vmatpush1.msra.mxu0 0.0
  %1980 = vmatprep.mubr.f32.mxu0 %v1881
  %1981 = vmatmul.mubr.f32.gmra.mrb[0].mxu0 %v1855
  %v1982 = vpop.f32.mrb[0].mxu0
  %v1983 = vadd.f32 0.0, %v1982
  %v1984 = vpop.f32.mrb[0].mxu0
  %v1985 = vadd.f32 0.0, %v1984
  %1986 = vmatprep.mubr.f32.mxu0 %v1884
  %1987 = vmatmul.mubr.f32.gmra.mrb[0].mxu0 %v1857
  %v1988 = vpop.f32.mrb[0].mxu0
  %v1989 = vadd.f32 0.0, %v1988
  %v1990 = vpop.f32.mrb[0].mxu0
  %v1991 = vadd.f32 0.0, %v1990
  %1992 = vmatprep.mubr.f32.mxu0 %v1887
  %1993 = vmatmul.mubr.f32.gmra.mrb[0].mxu0 %v1859
  %v1994 = vpop.f32.mrb[0].mxu0
  %v1995 = vadd.f32 0.0, %v1994
  %v1996 = vpop.f32.mrb[0].mxu0
  %v1997 = vadd.f32 0.0, %v1996
  %1998 = vmatprep.mubr.f32.mxu0 %v1890
  %1999 = vmatmul.mubr.f32.gmra.mrb[0].mxu0 %v1861
  %v2000 = vpop.f32.mrb[0].mxu0
  %v2001 = vadd.f32 0.0, %v2000
  %v2002 = vpop.f32.mrb[0].mxu0
  %v2003 = vadd.f32 0.0, %v2002
  %2004 = vmatprep.mubr.f32.mxu0 %v1893
  %2005 = vmatmul.mubr.f32.gmra.mrb[0].mxu0 %v1863
  %v2006 = vpop.f32.mrb[0].mxu0
  %v2007 = vadd.f32 0.0, %v2006
  %v2008 = vpop.f32.mrb[0].mxu0
  %v2009 = vadd.f32 0.0, %v2008
  %2010 = vmatprep.mubr.f32.mxu0 %v1896
  %2011 = vmatmul.mubr.f32.gmra.mrb[0].mxu0 %v1865
  %v2012 = vpop.f32.mrb[0].mxu0
  %v2013 = vadd.f32 0.0, %v2012
  %v2014 = vpop.f32.mrb[0].mxu0
  %v2015 = vadd.f32 0.0, %v2014
  %2016 = vmatprep.mubr.f32.mxu0 %v1899
  %2017 = vmatmul.mubr.f32.gmra.mrb[0].mxu0 %v1867
  %v2018 = vpop.f32.mrb[0].mxu0
  %v2019 = vadd.f32 0.0, %v2018
  %v2020 = vpop.f32.mrb[0].mxu0
  %v2021 = vadd.f32 0.0, %v2020
  %2022 = vmatprep.mubr.f32.mxu0 %v1902
  %2023 = vmatmul.mubr.f32.gmra.mrb[0].mxu0 %v1869
  %v2024 = vpop.f32.mrb[0].mxu0
  %v2025 = vadd.f32 0.0, %v2024
  %v2026 = vpop.f32.mrb[0].mxu0
  %v2027 = vadd.f32 0.0, %v2026
  %2028 = vmatprep.mubr.f32.mxu0 %v1905
  %2029 = vmatmul.mubr.f32.gmra.mrb[0].mxu0 %v1871
  %v2030 = vpop.f32.mrb[0].mxu0
  %v2031 = vadd.f32 0.0, %v2030
  %v2032 = vpop.f32.mrb[0].mxu0
  %v2033 = vadd.f32 0.0, %v2032
  %2034 = vmatprep.mubr.f32.mxu0 %v1908
  %2035 = vmatmul.mubr.f32.gmra.mrb[0].mxu0 %v1873
  %v2036 = vpop.f32.mrb[0].mxu0
  %v2037 = vadd.f32 0.0, %v2036
  %v2038 = vpop.f32.mrb[0].mxu0
  %v2039 = vadd.f32 0.0, %v2038
  %2040 = vmatprep.mubr.f32.mxu0 %v1911
  %2041 = vmatmul.mubr.f32.gmra.mrb[0].mxu0 %v1875
  %v2042 = vpop.f32.mrb[0].mxu0
  %v2043 = vadd.f32 0.0, %v2042
  %v2044 = vpop.f32.mrb[0].mxu0
  %v2045 = vadd.f32 0.0, %v2044
  %2046 = vmatprep.mubr.f32.mxu0 %v1914
  %2047 = vmatmul.mubr.f32.gmra.mrb[0].mxu0 %v1877
  %v2048 = vpop.f32.mrb[0].mxu0
  %v2049 = vadd.f32 0.0, %v2048
  %v2050 = vpop.f32.mrb[0].mxu0
  %v2051 = vadd.f32 0.0, %v2050
  %2052 = vdwg.mxu0
  %s2053 = scalar_lea.vmem %s3, 192
  %v2054 = vld [vmem:[%s2053] sm:$0xff]
  %v2055 = vld [vmem:[%s2053 + $0x8] sm:$0xff]
  %v2056 = vld [vmem:[%s2053 + $0x10] sm:$0xff]
  %v2057 = vld [vmem:[%s2053 + $0x18] sm:$0xff]
  %v2058 = vld [vmem:[%s2053 + $0x20] sm:$0xff]
  %v2059 = vld [vmem:[%s2053 + $0x28] sm:$0xff]
  %v2060 = vld [vmem:[%s2053 + $0x30] sm:$0xff]
  %v2061 = vld [vmem:[%s2053 + $0x38] sm:$0xff]
  %v2062 = vld [vmem:[%s2053 + $0x40] sm:$0xff]
  %v2063 = vld [vmem:[%s2053 + $0x48] sm:$0xff]
  %v2064 = vld [vmem:[%s2053 + $0x50] sm:$0xff]
  %v2065 = vld [vmem:[%s2053 + $0x58] sm:$0xff]
  %v2066 = vld [vmem:[%s2053 + $0x60] sm:$0xff]
  %v2067 = vld [vmem:[%s2053 + $0x68] sm:$0xff]
  %v2068 = vld [vmem:[%s2053 + $0x70] sm:$0xff]
  %v2069 = vld [vmem:[%s2053 + $0x78] sm:$0xff]
  %v2070 = vld [vmem:[%s2053 + $0x80] sm:$0xff]
  %v2071 = vld [vmem:[%s2053 + $0x88] sm:$0xff]
  %v2072 = vld [vmem:[%s2053 + $0x90] sm:$0xff]
  %v2073 = vld [vmem:[%s2053 + $0x98] sm:$0xff]
  %v2074 = vld [vmem:[%s2053 + $0xa0] sm:$0xff]
  %v2075 = vld [vmem:[%s2053 + $0xa8] sm:$0xff]
  %v2076 = vld [vmem:[%s2053 + $0xb0] sm:$0xff]
  %v2077 = vld [vmem:[%s2053 + $0xb8] sm:$0xff]
  %v2079 = vsel %vm1879, %v2055, 0
  %v2082 = vsel %vm1879, %v2057, 0
  %v2085 = vsel %vm1879, %v2059, 0
  %v2088 = vsel %vm1879, %v2061, 0
  %v2091 = vsel %vm1879, %v2063, 0
  %v2094 = vsel %vm1879, %v2065, 0
  %v2097 = vsel %vm1879, %v2067, 0
  %v2100 = vsel %vm1879, %v2069, 0
  %v2103 = vsel %vm1879, %v2071, 0
  %v2106 = vsel %vm1879, %v2073, 0
  %v2109 = vsel %vm1879, %v2075, 0
  %v2112 = vsel %vm1879, %v2077, 0
  %2114 = vmatprep.subr.mxu0 %v1808
  %2115 = vmatpush1.msra.mxu0 %v1807
  %2116 = vmatprep.subr.mxu0 %v1810
  %2117 = vmatpush1.msra.mxu0 %v1809
  %2118 = vmatprep.subr.mxu0 %v1812
  %2119 = vmatpush1.msra.mxu0 %v1811
  %2120 = vmatprep.subr.mxu0 %v1814
  %2121 = vmatpush1.msra.mxu0 %v1813
  %2122 = vmatprep.subr.mxu0 %v1816
  %2123 = vmatpush1.msra.mxu0 %v1815
  %2124 = vmatprep.subr.mxu0 %v1818
  %2125 = vmatpush1.msra.mxu0 %v1817
  %2126 = vmatprep.subr.mxu0 %v1820
  %2127 = vmatpush1.msra.mxu0 %v1819
  %2128 = vmatprep.subr.mxu0 %v1822
  %2129 = vmatpush1.msra.mxu0 %v1821
  %2130 = vmatprep.subr.mxu0 %v1824
  %2131 = vmatpush1.msra.mxu0 %v1823
  %2132 = vmatprep.subr.mxu0 %v1826
  %2133 = vmatpush1.msra.mxu0 %v1825
  %2134 = vmatprep.subr.mxu0 %v1828
  %2135 = vmatpush1.msra.mxu0 %v1827
  %2136 = vmatprep.subr.mxu0 %v1830
  %2137 = vmatpush1.msra.mxu0 %v1829
  %2138 = vmatprep.subr.mxu0 %v1832
  %2139 = vmatpush1.msra.mxu0 %v1831
  %2140 = vmatprep.subr.mxu0 %v1834
  %2141 = vmatpush1.msra.mxu0 %v1833
  %2142 = vmatprep.subr.mxu0 %v1836
  %2143 = vmatpush1.msra.mxu0 %v1835
  %2144 = vmatprep.subr.mxu0 %v1838
  %2145 = vmatpush1.msra.mxu0 %v1837
  %2146 = vmatprep.subr.mxu0 %v1840
  %2147 = vmatpush1.msra.mxu0 %v1839
  %2148 = vmatprep.subr.mxu0 %v1842
  %2149 = vmatpush1.msra.mxu0 %v1841
  %2150 = vmatprep.subr.mxu0 %v1844
  %2151 = vmatpush1.msra.mxu0 %v1843
  %2152 = vmatprep.subr.mxu0 %v1846
  %2153 = vmatpush1.msra.mxu0 %v1845
  %2154 = vmatprep.subr.mxu0 %v1848
  %2155 = vmatpush1.msra.mxu0 %v1847
  %2156 = vmatprep.subr.mxu0 %v1850
  %2157 = vmatpush1.msra.mxu0 %v1849
  %2158 = vmatprep.subr.mxu0 %v1852
  %2159 = vmatpush1.msra.mxu0 %v1851
  %2160 = vmatprep.subr.mxu0 %v1854
  %2161 = vmatpush1.msra.mxu0 %v1853
  %2162 = vmatprep.subr.mxu0 0.0
  %2163 = vmatpush1.msra.mxu0 0.0
  %2164 = vmatprep.subr.mxu0 0.0
  %2165 = vmatpush1.msra.mxu0 0.0
  %2166 = vmatprep.subr.mxu0 0.0
  %2167 = vmatpush1.msra.mxu0 0.0
  %2168 = vmatprep.subr.mxu0 0.0
  %2169 = vmatpush1.msra.mxu0 0.0
  %2170 = vmatprep.subr.mxu0 0.0
  %2171 = vmatpush1.msra.mxu0 0.0
  %2172 = vmatprep.subr.mxu0 0.0
  %2173 = vmatpush1.msra.mxu0 0.0
  %2174 = vmatprep.subr.mxu0 0.0
  %2175 = vmatpush1.msra.mxu0 0.0
  %2176 = vmatprep.subr.mxu0 0.0
  %2177 = vmatpush1.msra.mxu0 0.0
  %2178 = vmatprep.mubr.f32.mxu0 %v2079
  %2179 = vmatmul.mubr.f32.gmra.mrb[0].mxu0 %v2054
  %v2180 = vpop.f32.mrb[0].mxu0
  %v2181 = vadd.f32 0.0, %v2180
  %v2182 = vpop.f32.mrb[0].mxu0
  %v2183 = vadd.f32 0.0, %v2182
  %2184 = vmatprep.mubr.f32.mxu0 %v2082
  %2185 = vmatmul.mubr.f32.gmra.mrb[0].mxu0 %v2056
  %v2186 = vpop.f32.mrb[0].mxu0
  %v2187 = vadd.f32 0.0, %v2186
  %v2188 = vpop.f32.mrb[0].mxu0
  %v2189 = vadd.f32 0.0, %v2188
  %2190 = vmatprep.mubr.f32.mxu0 %v2085
  %2191 = vmatmul.mubr.f32.gmra.mrb[0].mxu0 %v2058
  %v2192 = vpop.f32.mrb[0].mxu0
  %v2193 = vadd.f32 0.0, %v2192
  %v2194 = vpop.f32.mrb[0].mxu0
  %v2195 = vadd.f32 0.0, %v2194
  %2196 = vmatprep.mubr.f32.mxu0 %v2088
  %2197 = vmatmul.mubr.f32.gmra.mrb[0].mxu0 %v2060
  %v2198 = vpop.f32.mrb[0].mxu0
  %v2199 = vadd.f32 0.0, %v2198
  %v2200 = vpop.f32.mrb[0].mxu0
  %v2201 = vadd.f32 0.0, %v2200
  %2202 = vmatprep.mubr.f32.mxu0 %v2091
  %2203 = vmatmul.mubr.f32.gmra.mrb[0].mxu0 %v2062
  %v2204 = vpop.f32.mrb[0].mxu0
  %v2205 = vadd.f32 0.0, %v2204
  %v2206 = vpop.f32.mrb[0].mxu0
  %v2207 = vadd.f32 0.0, %v2206
  %2208 = vmatprep.mubr.f32.mxu0 %v2094
  %2209 = vmatmul.mubr.f32.gmra.mrb[0].mxu0 %v2064
  %v2210 = vpop.f32.mrb[0].mxu0
  %v2211 = vadd.f32 0.0, %v2210
  %v2212 = vpop.f32.mrb[0].mxu0
  %v2213 = vadd.f32 0.0, %v2212
  %2214 = vmatprep.mubr.f32.mxu0 %v2097
  %2215 = vmatmul.mubr.f32.gmra.mrb[0].mxu0 %v2066
  %v2216 = vpop.f32.mrb[0].mxu0
  %v2217 = vadd.f32 0.0, %v2216
  %v2218 = vpop.f32.mrb[0].mxu0
  %v2219 = vadd.f32 0.0, %v2218
  %2220 = vmatprep.mubr.f32.mxu0 %v2100
  %2221 = vmatmul.mubr.f32.gmra.mrb[0].mxu0 %v2068
  %v2222 = vpop.f32.mrb[0].mxu0
  %v2223 = vadd.f32 0.0, %v2222
  %v2224 = vpop.f32.mrb[0].mxu0
  %v2225 = vadd.f32 0.0, %v2224
  %2226 = vmatprep.mubr.f32.mxu0 %v2103
  %2227 = vmatmul.mubr.f32.gmra.mrb[0].mxu0 %v2070
  %v2228 = vpop.f32.mrb[0].mxu0
  %v2229 = vadd.f32 0.0, %v2228
  %v2230 = vpop.f32.mrb[0].mxu0
  %v2231 = vadd.f32 0.0, %v2230
  %2232 = vmatprep.mubr.f32.mxu0 %v2106
  %2233 = vmatmul.mubr.f32.gmra.mrb[0].mxu0 %v2072
  %v2234 = vpop.f32.mrb[0].mxu0
  %v2235 = vadd.f32 0.0, %v2234
  %v2236 = vpop.f32.mrb[0].mxu0
  %v2237 = vadd.f32 0.0, %v2236
  %2238 = vmatprep.mubr.f32.mxu0 %v2109
  %2239 = vmatmul.mubr.f32.gmra.mrb[0].mxu0 %v2074
  %v2240 = vpop.f32.mrb[0].mxu0
  %v2241 = vadd.f32 0.0, %v2240
  %v2242 = vpop.f32.mrb[0].mxu0
  %v2243 = vadd.f32 0.0, %v2242
  %2244 = vmatprep.mubr.f32.mxu0 %v2112
  %2245 = vmatmul.mubr.f32.gmra.mrb[0].mxu0 %v2076
  %v2246 = vpop.f32.mrb[0].mxu0
  %v2247 = vadd.f32 0.0, %v2246
  %v2248 = vpop.f32.mrb[0].mxu0
  %v2249 = vadd.f32 0.0, %v2248
  %2250 = vdwg.mxu0
  %v2251 = vmax.f32 %v1983, %v2181
  %v2252 = vmax.f32 %v1985, %v2183
  %v2253 = vmax.f32 %v1989, %v2187
  %v2254 = vmax.f32 %v1991, %v2189
  %v2255 = vmax.f32 %v1995, %v2193
  %v2256 = vmax.f32 %v1997, %v2195
  %v2257 = vmax.f32 %v2001, %v2199
  %v2258 = vmax.f32 %v2003, %v2201
  %v2259 = vmax.f32 %v2007, %v2205
  %v2260 = vmax.f32 %v2009, %v2207
  %v2261 = vmax.f32 %v2013, %v2211
  %v2262 = vmax.f32 %v2015, %v2213
  %v2263 = vmax.f32 %v2019, %v2217
  %v2264 = vmax.f32 %v2021, %v2219
  %v2265 = vmax.f32 %v2025, %v2223
  %v2266 = vmax.f32 %v2027, %v2225
  %v2267 = vmax.f32 %v2031, %v2229
  %v2268 = vmax.f32 %v2033, %v2231
  %v2269 = vmax.f32 %v2037, %v2235
  %v2270 = vmax.f32 %v2039, %v2237
  %v2271 = vmax.f32 %v2043, %v2241
  %v2272 = vmax.f32 %v2045, %v2243
  %v2273 = vmax.f32 %v2049, %v2247
  %v2274 = vmax.f32 %v2051, %v2249
  %v2275 = vld [vmem:[%s4] sm:$0xff]
  %v2276 = vld [vmem:[%s4 + $0x8] sm:$0xff]
  %v2277 = vld [vmem:[%s4 + $0x10] sm:$0xff]
  %v2278 = vld [vmem:[%s4 + $0x18] sm:$0xff]
  %v2279 = vld [vmem:[%s4 + $0x20] sm:$0xff]
  %v2280 = vld [vmem:[%s4 + $0x28] sm:$0xff]
  %v2281 = vld [vmem:[%s4 + $0x30] sm:$0xff]
  %v2282 = vld [vmem:[%s4 + $0x38] sm:$0xff]
  %v2283 = vld [vmem:[%s4 + $0x40] sm:$0xff]
  %v2284 = vld [vmem:[%s4 + $0x48] sm:$0xff]
  %v2285 = vld [vmem:[%s4 + $0x50] sm:$0xff]
  %v2286 = vld [vmem:[%s4 + $0x58] sm:$0xff]
  %v2287 = vld [vmem:[%s4 + $0x60] sm:$0xff]
  %v2288 = vld [vmem:[%s4 + $0x68] sm:$0xff]
  %v2289 = vld [vmem:[%s4 + $0x70] sm:$0xff]
  %v2290 = vld [vmem:[%s4 + $0x78] sm:$0xff]
  %v2291 = vld [vmem:[%s4 + $0x80] sm:$0xff]
  %v2292 = vld [vmem:[%s4 + $0x88] sm:$0xff]
  %v2293 = vld [vmem:[%s4 + $0x90] sm:$0xff]
  %v2294 = vld [vmem:[%s4 + $0x98] sm:$0xff]
  %v2295 = vld [vmem:[%s4 + $0xa0] sm:$0xff]
  %v2296 = vld [vmem:[%s4 + $0xa8] sm:$0xff]
  %v2297 = vld [vmem:[%s4 + $0xb0] sm:$0xff]
  %v2298 = vld [vmem:[%s4 + $0xb8] sm:$0xff]
  %v2299 = vld [vmem:[%s4 + $0xc0] sm:$0xff]
  %v2300 = vld [vmem:[%s4 + $0xc8] sm:$0xff]
  %v2301 = vld [vmem:[%s4 + $0xd0] sm:$0xff]
  %v2302 = vld [vmem:[%s4 + $0xd8] sm:$0xff]
  %v2303 = vld [vmem:[%s4 + $0xe0] sm:$0xff]
  %v2304 = vld [vmem:[%s4 + $0xe8] sm:$0xff]
  %vm2305 = vcmask 916480
  %v2307 = vsel %vm2305, %v2252, 0
  %v2310 = vsel %vm2305, %v2254, 0
  %v2313 = vsel %vm2305, %v2256, 0
  %v2316 = vsel %vm2305, %v2258, 0
  %v2319 = vsel %vm2305, %v2260, 0
  %v2322 = vsel %vm2305, %v2262, 0
  %v2325 = vsel %vm2305, %v2264, 0
  %v2328 = vsel %vm2305, %v2266, 0
  %v2331 = vsel %vm2305, %v2268, 0
  %v2334 = vsel %vm2305, %v2270, 0
  %v2337 = vsel %vm2305, %v2272, 0
  %v2340 = vsel %vm2305, %v2274, 0
  %2342 = vmatprep.subr.mxu0 0.0
  %2343 = vmatpush1.msra.mxu0 %v2275
  %2344 = vmatprep.subr.mxu0 0.0
  %2345 = vmatpush1.msra.mxu0 %v2276
  %2346 = vmatprep.subr.mxu0 0.0
  %2347 = vmatpush1.msra.mxu0 %v2277
  %2348 = vmatprep.subr.mxu0 0.0
  %2349 = vmatpush1.msra.mxu0 %v2278
  %2350 = vmatprep.subr.mxu0 0.0
  %2351 = vmatpush1.msra.mxu0 %v2279
  %2352 = vmatprep.subr.mxu0 0.0
  %2353 = vmatpush1.msra.mxu0 %v2280
  %2354 = vmatprep.subr.mxu0 0.0
  %2355 = vmatpush1.msra.mxu0 %v2281
  %2356 = vmatprep.subr.mxu0 0.0
  %2357 = vmatpush1.msra.mxu0 %v2282
  %2358 = vmatprep.subr.mxu0 0.0
  %2359 = vmatpush1.msra.mxu0 %v2283
  %2360 = vmatprep.subr.mxu0 0.0
  %2361 = vmatpush1.msra.mxu0 %v2284
  %2362 = vmatprep.subr.mxu0 0.0
  %2363 = vmatpush1.msra.mxu0 %v2285
  %2364 = vmatprep.subr.mxu0 0.0
  %2365 = vmatpush1.msra.mxu0 %v2286
  %2366 = vmatprep.subr.mxu0 0.0
  %2367 = vmatpush1.msra.mxu0 %v2287
  %2368 = vmatprep.subr.mxu0 0.0
  %2369 = vmatpush1.msra.mxu0 %v2288
  %2370 = vmatprep.subr.mxu0 0.0
  %2371 = vmatpush1.msra.mxu0 %v2289
  %2372 = vmatprep.subr.mxu0 0.0
  %2373 = vmatpush1.msra.mxu0 %v2290
  %2374 = vmatprep.subr.mxu0 0.0
  %2375 = vmatpush1.msra.mxu0 %v2291
  %2376 = vmatprep.subr.mxu0 0.0
  %2377 = vmatpush1.msra.mxu0 %v2292
  %2378 = vmatprep.subr.mxu0 0.0
  %2379 = vmatpush1.msra.mxu0 %v2293
  %2380 = vmatprep.subr.mxu0 0.0
  %2381 = vmatpush1.msra.mxu0 %v2294
  %2382 = vmatprep.subr.mxu0 0.0
  %2383 = vmatpush1.msra.mxu0 %v2295
  %2384 = vmatprep.subr.mxu0 0.0
  %2385 = vmatpush1.msra.mxu0 %v2296
  %2386 = vmatprep.subr.mxu0 0.0
  %2387 = vmatpush1.msra.mxu0 %v2297
  %2388 = vmatprep.subr.mxu0 0.0
  %2389 = vmatpush1.msra.mxu0 %v2298
  %2390 = vmatprep.subr.mxu0 0.0
  %2391 = vmatpush1.msra.mxu0 %v2299
  %2392 = vmatprep.subr.mxu0 0.0
  %2393 = vmatpush1.msra.mxu0 %v2300
  %2394 = vmatprep.subr.mxu0 0.0
  %2395 = vmatpush1.msra.mxu0 %v2301
  %2396 = vmatprep.subr.mxu0 0.0
  %2397 = vmatpush1.msra.mxu0 %v2302
  %2398 = vmatprep.subr.mxu0 0.0
  %2399 = vmatpush1.msra.mxu0 %v2303
  %2400 = vmatprep.subr.mxu0 0.0
  %2401 = vmatpush1.msra.mxu0 %v2304
  %2402 = vmatprep.subr.mxu0 0.0
  %2403 = vmatpush1.msra.mxu0 0.0
  %2404 = vmatprep.subr.mxu0 0.0
  %2405 = vmatpush1.msra.mxu0 0.0
  %2406 = vmatprep.mubr.f32.mxu0 %v2307
  %2407 = vmatmul.mubr.f32.gmra.mrb[0].mxu0 %v2251
  %v2408 = vpop.f32.mrb[0].mxu0
  %v2409 = vadd.f32 0.0, %v2408
  %v2410 = vpop.f32.mrb[0].mxu0
  %2411 = vmatprep.mubr.f32.mxu0 %v2310
  %2412 = vmatmul.mubr.f32.gmra.mrb[0].mxu0 %v2253
  %v2413 = vpop.f32.mrb[0].mxu0
  %v2414 = vadd.f32 0.0, %v2413
  %v2415 = vpop.f32.mrb[0].mxu0
  %2416 = vmatprep.mubr.f32.mxu0 %v2313
  %2417 = vmatmul.mubr.f32.gmra.mrb[0].mxu0 %v2255
  %v2418 = vpop.f32.mrb[0].mxu0
  %v2419 = vadd.f32 0.0, %v2418
  %v2420 = vpop.f32.mrb[0].mxu0
  %2421 = vmatprep.mubr.f32.mxu0 %v2316
  %2422 = vmatmul.mubr.f32.gmra.mrb[0].mxu0 %v2257
  %v2423 = vpop.f32.mrb[0].mxu0
  %v2424 = vadd.f32 0.0, %v2423
  %v2425 = vpop.f32.mrb[0].mxu0
  %2426 = vmatprep.mubr.f32.mxu0 %v2319
  %2427 = vmatmul.mubr.f32.gmra.mrb[0].mxu0 %v2259
  %v2428 = vpop.f32.mrb[0].mxu0
  %v2429 = vadd.f32 0.0, %v2428
  %v2430 = vpop.f32.mrb[0].mxu0
  %2431 = vmatprep.mubr.f32.mxu0 %v2322
  %2432 = vmatmul.mubr.f32.gmra.mrb[0].mxu0 %v2261
  %v2433 = vpop.f32.mrb[0].mxu0
  %v2434 = vadd.f32 0.0, %v2433
  %v2435 = vpop.f32.mrb[0].mxu0
  %2436 = vmatprep.mubr.f32.mxu0 %v2325
  %2437 = vmatmul.mubr.f32.gmra.mrb[0].mxu0 %v2263
  %v2438 = vpop.f32.mrb[0].mxu0
  %v2439 = vadd.f32 0.0, %v2438
  %v2440 = vpop.f32.mrb[0].mxu0
  %2441 = vmatprep.mubr.f32.mxu0 %v2328
  %2442 = vmatmul.mubr.f32.gmra.mrb[0].mxu0 %v2265
  %v2443 = vpop.f32.mrb[0].mxu0
  %v2444 = vadd.f32 0.0, %v2443
  %v2445 = vpop.f32.mrb[0].mxu0
  %2446 = vmatprep.mubr.f32.mxu0 %v2331
  %2447 = vmatmul.mubr.f32.gmra.mrb[0].mxu0 %v2267
  %v2448 = vpop.f32.mrb[0].mxu0
  %v2449 = vadd.f32 0.0, %v2448
  %v2450 = vpop.f32.mrb[0].mxu0
  %2451 = vmatprep.mubr.f32.mxu0 %v2334
  %2452 = vmatmul.mubr.f32.gmra.mrb[0].mxu0 %v2269
  %v2453 = vpop.f32.mrb[0].mxu0
  %v2454 = vadd.f32 0.0, %v2453
  %v2455 = vpop.f32.mrb[0].mxu0
  %2456 = vmatprep.mubr.f32.mxu0 %v2337
  %2457 = vmatmul.mubr.f32.gmra.mrb[0].mxu0 %v2271
  %v2458 = vpop.f32.mrb[0].mxu0
  %v2459 = vadd.f32 0.0, %v2458
  %v2460 = vpop.f32.mrb[0].mxu0
  %2461 = vmatprep.mubr.f32.mxu0 %v2340
  %2462 = vmatmul.mubr.f32.gmra.mrb[0].mxu0 %v2273
  %v2463 = vpop.f32.mrb[0].mxu0
  %v2464 = vadd.f32 0.0, %v2463
  %v2465 = vpop.f32.mrb[0].mxu0
  %2466 = vdwg.mxu0
  %s2467 = scalar_lea.vmem %s4, 240
  %v2468 = vld [vmem:[%s2467] sm:$0xff]
  %v2469 = vld [vmem:[%s2467 + $0x8] sm:$0xff]
  %v2470 = vld [vmem:[%s2467 + $0x10] sm:$0xff]
  %v2471 = vld [vmem:[%s2467 + $0x18] sm:$0xff]
  %v2472 = vld [vmem:[%s2467 + $0x20] sm:$0xff]
  %v2473 = vld [vmem:[%s2467 + $0x28] sm:$0xff]
  %v2474 = vld [vmem:[%s2467 + $0x30] sm:$0xff]
  %v2475 = vld [vmem:[%s2467 + $0x38] sm:$0xff]
  %v2476 = vld [vmem:[%s2467 + $0x40] sm:$0xff]
  %v2477 = vld [vmem:[%s2467 + $0x48] sm:$0xff]
  %v2478 = vld [vmem:[%s2467 + $0x50] sm:$0xff]
  %v2479 = vld [vmem:[%s2467 + $0x58] sm:$0xff]
  %v2480 = vld [vmem:[%s2467 + $0x60] sm:$0xff]
  %v2481 = vld [vmem:[%s2467 + $0x68] sm:$0xff]
  %v2482 = vld [vmem:[%s2467 + $0x70] sm:$0xff]
  %v2483 = vld [vmem:[%s2467 + $0x78] sm:$0xff]
  %v2484 = vld [vmem:[%s2467 + $0x80] sm:$0xff]
  %v2485 = vld [vmem:[%s2467 + $0x88] sm:$0xff]
  %v2486 = vld [vmem:[%s2467 + $0x90] sm:$0xff]
  %v2487 = vld [vmem:[%s2467 + $0x98] sm:$0xff]
  %v2488 = vld [vmem:[%s2467 + $0xa0] sm:$0xff]
  %v2489 = vld [vmem:[%s2467 + $0xa8] sm:$0xff]
  %v2490 = vld [vmem:[%s2467 + $0xb0] sm:$0xff]
  %v2491 = vld [vmem:[%s2467 + $0xb8] sm:$0xff]
  %v2492 = vld [vmem:[%s2467 + $0xc0] sm:$0xff]
  %v2493 = vld [vmem:[%s2467 + $0xc8] sm:$0xff]
  %v2494 = vld [vmem:[%s2467 + $0xd0] sm:$0xff]
  %v2495 = vld [vmem:[%s2467 + $0xd8] sm:$0xff]
  %v2496 = vld [vmem:[%s2467 + $0xe0] sm:$0xff]
  %v2497 = vld [vmem:[%s2467 + $0xe8] sm:$0xff]
  %2498 = vmatprep.subr.mxu0 0.0
  %2499 = vmatpush1.msra.mxu0 %v2468
  %2500 = vmatprep.subr.mxu0 0.0
  %2501 = vmatpush1.msra.mxu0 %v2469
  %2502 = vmatprep.subr.mxu0 0.0
  %2503 = vmatpush1.msra.mxu0 %v2470
  %2504 = vmatprep.subr.mxu0 0.0
  %2505 = vmatpush1.msra.mxu0 %v2471
  %2506 = vmatprep.subr.mxu0 0.0
  %2507 = vmatpush1.msra.mxu0 %v2472
  %2508 = vmatprep.subr.mxu0 0.0
  %2509 = vmatpush1.msra.mxu0 %v2473
  %2510 = vmatprep.subr.mxu0 0.0
  %2511 = vmatpush1.msra.mxu0 %v2474
  %2512 = vmatprep.subr.mxu0 0.0
  %2513 = vmatpush1.msra.mxu0 %v2475
  %2514 = vmatprep.subr.mxu0 0.0
  %2515 = vmatpush1.msra.mxu0 %v2476
  %2516 = vmatprep.subr.mxu0 0.0
  %2517 = vmatpush1.msra.mxu0 %v2477
  %2518 = vmatprep.subr.mxu0 0.0
  %2519 = vmatpush1.msra.mxu0 %v2478
  %2520 = vmatprep.subr.mxu0 0.0
  %2521 = vmatpush1.msra.mxu0 %v2479
  %2522 = vmatprep.subr.mxu0 0.0
  %2523 = vmatpush1.msra.mxu0 %v2480
  %2524 = vmatprep.subr.mxu0 0.0
  %2525 = vmatpush1.msra.mxu0 %v2481
  %2526 = vmatprep.subr.mxu0 0.0
  %2527 = vmatpush1.msra.mxu0 %v2482
  %2528 = vmatprep.subr.mxu0 0.0
  %2529 = vmatpush1.msra.mxu0 %v2483
  %2530 = vmatprep.subr.mxu0 0.0
  %2531 = vmatpush1.msra.mxu0 %v2484
  %2532 = vmatprep.subr.mxu0 0.0
  %2533 = vmatpush1.msra.mxu0 %v2485
  %2534 = vmatprep.subr.mxu0 0.0
  %2535 = vmatpush1.msra.mxu0 %v2486
  %2536 = vmatprep.subr.mxu0 0.0
  %2537 = vmatpush1.msra.mxu0 %v2487
  %2538 = vmatprep.subr.mxu0 0.0
  %2539 = vmatpush1.msra.mxu0 %v2488
  %2540 = vmatprep.subr.mxu0 0.0
  %2541 = vmatpush1.msra.mxu0 %v2489
  %2542 = vmatprep.subr.mxu0 0.0
  %2543 = vmatpush1.msra.mxu0 %v2490
  %2544 = vmatprep.subr.mxu0 0.0
  %2545 = vmatpush1.msra.mxu0 %v2491
  %2546 = vmatprep.subr.mxu0 0.0
  %2547 = vmatpush1.msra.mxu0 %v2492
  %2548 = vmatprep.subr.mxu0 0.0
  %2549 = vmatpush1.msra.mxu0 %v2493
  %2550 = vmatprep.subr.mxu0 0.0
  %2551 = vmatpush1.msra.mxu0 %v2494
  %2552 = vmatprep.subr.mxu0 0.0
  %2553 = vmatpush1.msra.mxu0 %v2495
  %2554 = vmatprep.subr.mxu0 0.0
  %2555 = vmatpush1.msra.mxu0 %v2496
  %2556 = vmatprep.subr.mxu0 0.0
  %2557 = vmatpush1.msra.mxu0 %v2497
  %2558 = vmatprep.subr.mxu0 0.0
  %2559 = vmatpush1.msra.mxu0 0.0
  %2560 = vmatprep.subr.mxu0 0.0
  %2561 = vmatpush1.msra.mxu0 0.0
  %2562 = vmatprep.mubr.f32.mxu0 %v2307
  %2563 = vmatmul.mubr.f32.gmra.mrb[0].mxu0 %v2251
  %v2564 = vpop.f32.mrb[0].mxu0
  %v2565 = vadd.f32 0.0, %v2564
  %v2566 = vpop.f32.mrb[0].mxu0
  %2567 = vmatprep.mubr.f32.mxu0 %v2310
  %2568 = vmatmul.mubr.f32.gmra.mrb[0].mxu0 %v2253
  %v2569 = vpop.f32.mrb[0].mxu0
  %v2570 = vadd.f32 0.0, %v2569
  %v2571 = vpop.f32.mrb[0].mxu0
  %2572 = vmatprep.mubr.f32.mxu0 %v2313
  %2573 = vmatmul.mubr.f32.gmra.mrb[0].mxu0 %v2255
  %v2574 = vpop.f32.mrb[0].mxu0
  %v2575 = vadd.f32 0.0, %v2574
  %v2576 = vpop.f32.mrb[0].mxu0
  %2577 = vmatprep.mubr.f32.mxu0 %v2316
  %2578 = vmatmul.mubr.f32.gmra.mrb[0].mxu0 %v2257
  %v2579 = vpop.f32.mrb[0].mxu0
  %v2580 = vadd.f32 0.0, %v2579
  %v2581 = vpop.f32.mrb[0].mxu0
  %2582 = vmatprep.mubr.f32.mxu0 %v2319
  %2583 = vmatmul.mubr.f32.gmra.mrb[0].mxu0 %v2259
  %v2584 = vpop.f32.mrb[0].mxu0
  %v2585 = vadd.f32 0.0, %v2584
  %v2586 = vpop.f32.mrb[0].mxu0
  %2587 = vmatprep.mubr.f32.mxu0 %v2322
  %2588 = vmatmul.mubr.f32.gmra.mrb[0].mxu0 %v2261
  %v2589 = vpop.f32.mrb[0].mxu0
  %v2590 = vadd.f32 0.0, %v2589
  %v2591 = vpop.f32.mrb[0].mxu0
  %2592 = vmatprep.mubr.f32.mxu0 %v2325
  %2593 = vmatmul.mubr.f32.gmra.mrb[0].mxu0 %v2263
  %v2594 = vpop.f32.mrb[0].mxu0
  %v2595 = vadd.f32 0.0, %v2594
  %v2596 = vpop.f32.mrb[0].mxu0
  %2597 = vmatprep.mubr.f32.mxu0 %v2328
  %2598 = vmatmul.mubr.f32.gmra.mrb[0].mxu0 %v2265
  %v2599 = vpop.f32.mrb[0].mxu0
  %v2600 = vadd.f32 0.0, %v2599
  %v2601 = vpop.f32.mrb[0].mxu0
  %2602 = vmatprep.mubr.f32.mxu0 %v2331
  %2603 = vmatmul.mubr.f32.gmra.mrb[0].mxu0 %v2267
  %v2604 = vpop.f32.mrb[0].mxu0
  %v2605 = vadd.f32 0.0, %v2604
  %v2606 = vpop.f32.mrb[0].mxu0
  %2607 = vmatprep.mubr.f32.mxu0 %v2334
  %2608 = vmatmul.mubr.f32.gmra.mrb[0].mxu0 %v2269
  %v2609 = vpop.f32.mrb[0].mxu0
  %v2610 = vadd.f32 0.0, %v2609
  %v2611 = vpop.f32.mrb[0].mxu0
  %2612 = vmatprep.mubr.f32.mxu0 %v2337
  %2613 = vmatmul.mubr.f32.gmra.mrb[0].mxu0 %v2271
  %v2614 = vpop.f32.mrb[0].mxu0
  %v2615 = vadd.f32 0.0, %v2614
  %v2616 = vpop.f32.mrb[0].mxu0
  %2617 = vmatprep.mubr.f32.mxu0 %v2340
  %2618 = vmatmul.mubr.f32.gmra.mrb[0].mxu0 %v2273
  %v2619 = vpop.f32.mrb[0].mxu0
  %v2620 = vadd.f32 0.0, %v2619
  %v2621 = vpop.f32.mrb[0].mxu0
  %2622 = vdwg.mxu0
  %v2623 = vmax.f32 %v2409, %v2565
  %v2624 = vmax.f32 %v2414, %v2570
  %v2625 = vmax.f32 %v2419, %v2575
  %v2626 = vmax.f32 %v2424, %v2580
  %v2627 = vmax.f32 %v2429, %v2585
  %v2628 = vmax.f32 %v2434, %v2590
  %v2629 = vmax.f32 %v2439, %v2595
  %v2630 = vmax.f32 %v2444, %v2600
  %v2631 = vmax.f32 %v2449, %v2605
  %v2632 = vmax.f32 %v2454, %v2610
  %v2633 = vmax.f32 %v2459, %v2615
  %v2634 = vmax.f32 %v2464, %v2620
  %v2635 = vmax.f32 %v2623, 0.0
  %v2636 = vmax.f32 %v2624, 0.0
  %v2637 = vmax.f32 %v2625, 0.0
  %v2638 = vmax.f32 %v2626, 0.0
  %v2639 = vmax.f32 %v2627, 0.0
  %v2640 = vmax.f32 %v2628, 0.0
  %v2641 = vmax.f32 %v2629, 0.0
  %v2642 = vmax.f32 %v2630, 0.0
  %v2643 = vmax.f32 %v2631, 0.0
  %v2644 = vmax.f32 %v2632, 0.0
  %v2645 = vmax.f32 %v2633, 0.0
  %v2646 = vmax.f32 %v2634, 0.0
  %v2647 = vld [vmem:[%s5] sm:$0xff]
  %v2648 = vld [vmem:[%s5 + $0x8] sm:$0xff]
  %v2649 = vld [vmem:[%s5 + $0x10] sm:$0xff]
  %v2650 = vld [vmem:[%s5 + $0x18] sm:$0xff]
  %v2651 = vld [vmem:[%s5 + $0x20] sm:$0xff]
  %v2652 = vld [vmem:[%s5 + $0x28] sm:$0xff]
  %v2653 = vld [vmem:[%s5 + $0x30] sm:$0xff]
  %v2654 = vld [vmem:[%s5 + $0x38] sm:$0xff]
  %vm2655 = vcmask 785408
  %v2657 = vsel %vm2655, %v2647, 0
  %v2660 = vsel %vm2655, %v2648, 0
  %v2663 = vsel %vm2655, %v2649, 0
  %v2666 = vsel %vm2655, %v2650, 0
  %v2669 = vsel %vm2655, %v2651, 0
  %v2672 = vsel %vm2655, %v2652, 0
  %v2675 = vsel %vm2655, %v2653, 0
  %v2678 = vsel %vm2655, %v2654, 0
  %2680 = vmatprep.subr.mxu0 0.0
  %2681 = vmatpush1.msra.mxu0 %v2635
  %2682 = vmatprep.subr.mxu0 0.0
  %2683 = vmatpush1.msra.mxu0 %v2636
  %2684 = vmatprep.subr.mxu0 0.0
  %2685 = vmatpush1.msra.mxu0 %v2637
  %2686 = vmatprep.subr.mxu0 0.0
  %2687 = vmatpush1.msra.mxu0 %v2638
  %2688 = vmatprep.subr.mxu0 0.0
  %2689 = vmatpush1.msra.mxu0 %v2639
  %2690 = vmatprep.subr.mxu0 0.0
  %2691 = vmatpush1.msra.mxu0 %v2640
  %2692 = vmatprep.subr.mxu0 0.0
  %2693 = vmatpush1.msra.mxu0 %v2641
  %2694 = vmatprep.subr.mxu0 0.0
  %2695 = vmatpush1.msra.mxu0 %v2642
  %2696 = vmatprep.subr.mxu0 0.0
  %2697 = vmatpush1.msra.mxu0 %v2643
  %2698 = vmatprep.subr.mxu0 0.0
  %2699 = vmatpush1.msra.mxu0 %v2644
  %2700 = vmatprep.subr.mxu0 0.0
  %2701 = vmatpush1.msra.mxu0 %v2645
  %2702 = vmatprep.subr.mxu0 0.0
  %2703 = vmatpush1.msra.mxu0 %v2646
  %2704 = vmatprep.subr.mxu0 0.0
  %2705 = vmatpush1.msra.mxu0 0.0
  %2706 = vmatprep.subr.mxu0 0.0
  %2707 = vmatpush1.msra.mxu0 0.0
  %2708 = vmatprep.subr.mxu0 0.0
  %2709 = vmatpush1.msra.mxu0 0.0
  %2710 = vmatprep.subr.mxu0 0.0
  %2711 = vmatpush1.msra.mxu0 0.0
  %2712 = vmatprep.subr.mxu0 0.0
  %2713 = vmatpush1.msra.mxu0 0.0
  %2714 = vmatprep.subr.mxu0 0.0
  %2715 = vmatpush1.msra.mxu0 0.0
  %2716 = vmatprep.subr.mxu0 0.0
  %2717 = vmatpush1.msra.mxu0 0.0
  %2718 = vmatprep.subr.mxu0 0.0
  %2719 = vmatpush1.msra.mxu0 0.0
  %2720 = vmatprep.subr.mxu0 0.0
  %2721 = vmatpush1.msra.mxu0 0.0
  %2722 = vmatprep.subr.mxu0 0.0
  %2723 = vmatpush1.msra.mxu0 0.0
  %2724 = vmatprep.subr.mxu0 0.0
  %2725 = vmatpush1.msra.mxu0 0.0
  %2726 = vmatprep.subr.mxu0 0.0
  %2727 = vmatpush1.msra.mxu0 0.0
  %2728 = vmatprep.subr.mxu0 0.0
  %2729 = vmatpush1.msra.mxu0 0.0
  %2730 = vmatprep.subr.mxu0 0.0
  %2731 = vmatpush1.msra.mxu0 0.0
  %2732 = vmatprep.subr.mxu0 0.0
  %2733 = vmatpush1.msra.mxu0 0.0
  %2734 = vmatprep.subr.mxu0 0.0
  %2735 = vmatpush1.msra.mxu0 0.0
  %2736 = vmatprep.subr.mxu0 0.0
  %2737 = vmatpush1.msra.mxu0 0.0
  %2738 = vmatprep.subr.mxu0 0.0
  %2739 = vmatpush1.msra.mxu0 0.0
  %2740 = vmatprep.subr.mxu0 0.0
  %2741 = vmatpush1.msra.mxu0 0.0
  %2742 = vmatprep.subr.mxu0 0.0
  %2743 = vmatpush1.msra.mxu0 0.0
  %2744 = vmatprep.mubr.f32.mxu0 0.0
  %2745 = vmatmul.mubr.f32.gmra.mrb[0].mxu0 %v2657
  %v2746 = vpop.f32.mrb[0].mxu0
  %v2747 = vadd.f32 0.0, %v2746
  %v2748 = vpop.f32.mrb[0].mxu0
  %2749 = vmatprep.mubr.f32.mxu0 0.0
  %2750 = vmatmul.mubr.f32.gmra.mrb[0].mxu0 %v2660
  %v2751 = vpop.f32.mrb[0].mxu0
  %v2752 = vadd.f32 0.0, %v2751
  %v2753 = vpop.f32.mrb[0].mxu0
  %2754 = vmatprep.mubr.f32.mxu0 0.0
  %2755 = vmatmul.mubr.f32.gmra.mrb[0].mxu0 %v2663
  %v2756 = vpop.f32.mrb[0].mxu0
  %v2757 = vadd.f32 0.0, %v2756
  %v2758 = vpop.f32.mrb[0].mxu0
  %2759 = vmatprep.mubr.f32.mxu0 0.0
  %2760 = vmatmul.mubr.f32.gmra.mrb[0].mxu0 %v2666
  %v2761 = vpop.f32.mrb[0].mxu0
  %v2762 = vadd.f32 0.0, %v2761
  %v2763 = vpop.f32.mrb[0].mxu0
  %2764 = vmatprep.mubr.f32.mxu0 0.0
  %2765 = vmatmul.mubr.f32.gmra.mrb[0].mxu0 %v2669
  %v2766 = vpop.f32.mrb[0].mxu0
  %v2767 = vadd.f32 0.0, %v2766
  %v2768 = vpop.f32.mrb[0].mxu0
  %2769 = vmatprep.mubr.f32.mxu0 0.0
  %2770 = vmatmul.mubr.f32.gmra.mrb[0].mxu0 %v2672
  %v2771 = vpop.f32.mrb[0].mxu0
  %v2772 = vadd.f32 0.0, %v2771
  %v2773 = vpop.f32.mrb[0].mxu0
  %2774 = vmatprep.mubr.f32.mxu0 0.0
  %2775 = vmatmul.mubr.f32.gmra.mrb[0].mxu0 %v2675
  %v2776 = vpop.f32.mrb[0].mxu0
  %v2777 = vadd.f32 0.0, %v2776
  %v2778 = vpop.f32.mrb[0].mxu0
  %2779 = vmatprep.mubr.f32.mxu0 0.0
  %2780 = vmatmul.mubr.f32.gmra.mrb[0].mxu0 %v2678
  %v2781 = vpop.f32.mrb[0].mxu0
  %v2782 = vadd.f32 0.0, %v2781
  %v2783 = vpop.f32.mrb[0].mxu0
  %2784 = vdwg.mxu0
  %v2785 = vld [vmem:[%s6] sm:$0xff]
  %v2786 = vld [vmem:[%s6 + $0x8] sm:$0xff]
  %v2787 = vld [vmem:[%s6 + $0x10] sm:$0xff]
  %v2788 = vld [vmem:[%s6 + $0x18] sm:$0xff]
  %v2789 = vld [vmem:[%s6 + $0x20] sm:$0xff]
  %v2790 = vld [vmem:[%s6 + $0x28] sm:$0xff]
  %v2791 = vld [vmem:[%s6 + $0x30] sm:$0xff]
  %v2792 = vld [vmem:[%s6 + $0x38] sm:$0xff]
  %v2793 = vld [vmem:[%s6 + $0x40] sm:$0xff]
  %v2794 = vld [vmem:[%s6 + $0x48] sm:$0xff]
  %v2795 = vld [vmem:[%s6 + $0x50] sm:$0xff]
  %v2796 = vld [vmem:[%s6 + $0x58] sm:$0xff]
  %v2797 = vld [vmem:[%s6 + $0x60] sm:$0xff]
  %v2798 = vld [vmem:[%s6 + $0x68] sm:$0xff]
  %v2799 = vld [vmem:[%s6 + $0x70] sm:$0xff]
  %v2800 = vld [vmem:[%s6 + $0x78] sm:$0xff]
  %v2801 = vld [vmem:[%s6 + $0x80] sm:$0xff]
  %v2802 = vld [vmem:[%s6 + $0x88] sm:$0xff]
  %v2803 = vld [vmem:[%s6 + $0x90] sm:$0xff]
  %v2804 = vld [vmem:[%s6 + $0x98] sm:$0xff]
  %v2805 = vld [vmem:[%s6 + $0xa0] sm:$0xff]
  %v2806 = vld [vmem:[%s6 + $0xa8] sm:$0xff]
  %v2807 = vld [vmem:[%s6 + $0xb0] sm:$0xff]
  %v2808 = vld [vmem:[%s6 + $0xb8] sm:$0xff]
  %v2809 = vld [vmem:[%s6 + $0xc0] sm:$0xff]
  %v2810 = vld [vmem:[%s6 + $0xc8] sm:$0xff]
  %v2811 = vld [vmem:[%s6 + $0xd0] sm:$0xff]
  %v2812 = vld [vmem:[%s6 + $0xd8] sm:$0xff]
  %v2813 = vld [vmem:[%s6 + $0xe0] sm:$0xff]
  %v2814 = vld [vmem:[%s6 + $0xe8] sm:$0xff]
  %s2815 = scalar_lea.vmem %s5, 64
  %v2816 = vld [vmem:[%s2815] sm:$0xff]
  %v2817 = vld [vmem:[%s2815 + $0x8] sm:$0xff]
  %v2818 = vld [vmem:[%s2815 + $0x10] sm:$0xff]
  %v2819 = vld [vmem:[%s2815 + $0x18] sm:$0xff]
  %v2820 = vld [vmem:[%s2815 + $0x20] sm:$0xff]
  %v2821 = vld [vmem:[%s2815 + $0x28] sm:$0xff]
  %v2822 = vld [vmem:[%s2815 + $0x30] sm:$0xff]
  %v2823 = vld [vmem:[%s2815 + $0x38] sm:$0xff]
  %v2825 = vsel %vm2655, %v2816, 0
  %v2828 = vsel %vm2655, %v2817, 0
  %v2831 = vsel %vm2655, %v2818, 0
  %v2834 = vsel %vm2655, %v2819, 0
  %v2837 = vsel %vm2655, %v2820, 0
  %v2840 = vsel %vm2655, %v2821, 0
  %v2843 = vsel %vm2655, %v2822, 0
  %v2846 = vsel %vm2655, %v2823, 0
  %2848 = vmatprep.subr.mxu0 0.0
  %2849 = vmatpush1.msra.mxu0 %v2635
  %2850 = vmatprep.subr.mxu0 0.0
  %2851 = vmatpush1.msra.mxu0 %v2636
  %2852 = vmatprep.subr.mxu0 0.0
  %2853 = vmatpush1.msra.mxu0 %v2637
  %2854 = vmatprep.subr.mxu0 0.0
  %2855 = vmatpush1.msra.mxu0 %v2638
  %2856 = vmatprep.subr.mxu0 0.0
  %2857 = vmatpush1.msra.mxu0 %v2639
  %2858 = vmatprep.subr.mxu0 0.0
  %2859 = vmatpush1.msra.mxu0 %v2640
  %2860 = vmatprep.subr.mxu0 0.0
  %2861 = vmatpush1.msra.mxu0 %v2641
  %2862 = vmatprep.subr.mxu0 0.0
  %2863 = vmatpush1.msra.mxu0 %v2642
  %2864 = vmatprep.subr.mxu0 0.0
  %2865 = vmatpush1.msra.mxu0 %v2643
  %2866 = vmatprep.subr.mxu0 0.0
  %2867 = vmatpush1.msra.mxu0 %v2644
  %2868 = vmatprep.subr.mxu0 0.0
  %2869 = vmatpush1.msra.mxu0 %v2645
  %2870 = vmatprep.subr.mxu0 0.0
  %2871 = vmatpush1.msra.mxu0 %v2646
  %2872 = vmatprep.subr.mxu0 0.0
  %2873 = vmatpush1.msra.mxu0 0.0
  %2874 = vmatprep.subr.mxu0 0.0
  %2875 = vmatpush1.msra.mxu0 0.0
  %2876 = vmatprep.subr.mxu0 0.0
  %2877 = vmatpush1.msra.mxu0 0.0
  %2878 = vmatprep.subr.mxu0 0.0
  %2879 = vmatpush1.msra.mxu0 0.0
  %2880 = vmatprep.subr.mxu0 0.0
  %2881 = vmatpush1.msra.mxu0 0.0
  %2882 = vmatprep.subr.mxu0 0.0
  %2883 = vmatpush1.msra.mxu0 0.0
  %2884 = vmatprep.subr.mxu0 0.0
  %2885 = vmatpush1.msra.mxu0 0.0
  %2886 = vmatprep.subr.mxu0 0.0
  %2887 = vmatpush1.msra.mxu0 0.0
  %2888 = vmatprep.subr.mxu0 0.0
  %2889 = vmatpush1.msra.mxu0 0.0
  %2890 = vmatprep.subr.mxu0 0.0
  %2891 = vmatpush1.msra.mxu0 0.0
  %2892 = vmatprep.subr.mxu0 0.0
  %2893 = vmatpush1.msra.mxu0 0.0
  %2894 = vmatprep.subr.mxu0 0.0
  %2895 = vmatpush1.msra.mxu0 0.0
  %2896 = vmatprep.subr.mxu0 0.0
  %2897 = vmatpush1.msra.mxu0 0.0
  %2898 = vmatprep.subr.mxu0 0.0
  %2899 = vmatpush1.msra.mxu0 0.0
  %2900 = vmatprep.subr.mxu0 0.0
  %2901 = vmatpush1.msra.mxu0 0.0
  %2902 = vmatprep.subr.mxu0 0.0
  %2903 = vmatpush1.msra.mxu0 0.0
  %2904 = vmatprep.subr.mxu0 0.0
  %2905 = vmatpush1.msra.mxu0 0.0
  %2906 = vmatprep.subr.mxu0 0.0
  %2907 = vmatpush1.msra.mxu0 0.0
  %2908 = vmatprep.subr.mxu0 0.0
  %2909 = vmatpush1.msra.mxu0 0.0
  %2910 = vmatprep.subr.mxu0 0.0
  %2911 = vmatpush1.msra.mxu0 0.0
  %2912 = vmatprep.mubr.f32.mxu0 0.0
  %2913 = vmatmul.mubr.f32.gmra.mrb[0].mxu0 %v2825
  %v2914 = vpop.f32.mrb[0].mxu0
  %v2915 = vadd.f32 0.0, %v2914
  %v2916 = vpop.f32.mrb[0].mxu0
  %2917 = vmatprep.mubr.f32.mxu0 0.0
  %2918 = vmatmul.mubr.f32.gmra.mrb[0].mxu0 %v2828
  %v2919 = vpop.f32.mrb[0].mxu0
  %v2920 = vadd.f32 0.0, %v2919
  %v2921 = vpop.f32.mrb[0].mxu0
  %2922 = vmatprep.mubr.f32.mxu0 0.0
  %2923 = vmatmul.mubr.f32.gmra.mrb[0].mxu0 %v2831
  %v2924 = vpop.f32.mrb[0].mxu0
  %v2925 = vadd.f32 0.0, %v2924
  %v2926 = vpop.f32.mrb[0].mxu0
  %2927 = vmatprep.mubr.f32.mxu0 0.0
  %2928 = vmatmul.mubr.f32.gmra.mrb[0].mxu0 %v2834
  %v2929 = vpop.f32.mrb[0].mxu0
  %v2930 = vadd.f32 0.0, %v2929
  %v2931 = vpop.f32.mrb[0].mxu0
  %2932 = vmatprep.mubr.f32.mxu0 0.0
  %2933 = vmatmul.mubr.f32.gmra.mrb[0].mxu0 %v2837
  %v2934 = vpop.f32.mrb[0].mxu0
  %v2935 = vadd.f32 0.0, %v2934
  %v2936 = vpop.f32.mrb[0].mxu0
  %2937 = vmatprep.mubr.f32.mxu0 0.0
  %2938 = vmatmul.mubr.f32.gmra.mrb[0].mxu0 %v2840
  %v2939 = vpop.f32.mrb[0].mxu0
  %v2940 = vadd.f32 0.0, %v2939
  %v2941 = vpop.f32.mrb[0].mxu0
  %2942 = vmatprep.mubr.f32.mxu0 0.0
  %2943 = vmatmul.mubr.f32.gmra.mrb[0].mxu0 %v2843
  %v2944 = vpop.f32.mrb[0].mxu0
  %v2945 = vadd.f32 0.0, %v2944
  %v2946 = vpop.f32.mrb[0].mxu0
  %2947 = vmatprep.mubr.f32.mxu0 0.0
  %2948 = vmatmul.mubr.f32.gmra.mrb[0].mxu0 %v2846
  %v2949 = vpop.f32.mrb[0].mxu0
  %v2950 = vadd.f32 0.0, %v2949
  %v2951 = vpop.f32.mrb[0].mxu0
  %2952 = vdwg.mxu0
  %s2953 = scalar_lea.vmem %s6, 240
  %v2954 = vld [vmem:[%s2953] sm:$0xff]
  %v2955 = vld [vmem:[%s2953 + $0x8] sm:$0xff]
  %v2956 = vld [vmem:[%s2953 + $0x10] sm:$0xff]
  %v2957 = vld [vmem:[%s2953 + $0x18] sm:$0xff]
  %v2958 = vld [vmem:[%s2953 + $0x20] sm:$0xff]
  %v2959 = vld [vmem:[%s2953 + $0x28] sm:$0xff]
  %v2960 = vld [vmem:[%s2953 + $0x30] sm:$0xff]
  %v2961 = vld [vmem:[%s2953 + $0x38] sm:$0xff]
  %v2962 = vld [vmem:[%s2953 + $0x40] sm:$0xff]
  %v2963 = vld [vmem:[%s2953 + $0x48] sm:$0xff]
  %v2964 = vld [vmem:[%s2953 + $0x50] sm:$0xff]
  %v2965 = vld [vmem:[%s2953 + $0x58] sm:$0xff]
  %v2966 = vld [vmem:[%s2953 + $0x60] sm:$0xff]
  %v2967 = vld [vmem:[%s2953 + $0x68] sm:$0xff]
  %v2968 = vld [vmem:[%s2953 + $0x70] sm:$0xff]
  %v2969 = vld [vmem:[%s2953 + $0x78] sm:$0xff]
  %v2970 = vld [vmem:[%s2953 + $0x80] sm:$0xff]
  %v2971 = vld [vmem:[%s2953 + $0x88] sm:$0xff]
  %v2972 = vld [vmem:[%s2953 + $0x90] sm:$0xff]
  %v2973 = vld [vmem:[%s2953 + $0x98] sm:$0xff]
  %v2974 = vld [vmem:[%s2953 + $0xa0] sm:$0xff]
  %v2975 = vld [vmem:[%s2953 + $0xa8] sm:$0xff]
  %v2976 = vld [vmem:[%s2953 + $0xb0] sm:$0xff]
  %v2977 = vld [vmem:[%s2953 + $0xb8] sm:$0xff]
  %v2978 = vld [vmem:[%s2953 + $0xc0] sm:$0xff]
  %v2979 = vld [vmem:[%s2953 + $0xc8] sm:$0xff]
  %v2980 = vld [vmem:[%s2953 + $0xd0] sm:$0xff]
  %v2981 = vld [vmem:[%s2953 + $0xd8] sm:$0xff]
  %v2982 = vld [vmem:[%s2953 + $0xe0] sm:$0xff]
  %v2983 = vld [vmem:[%s2953 + $0xe8] sm:$0xff]
  %vm2984 = vcmask 982016
  %v2986 = vsel %vm2984, %v2915, 0
  %v2989 = vsel %vm2984, %v2920, 0
  %v2992 = vsel %vm2984, %v2925, 0
  %v2995 = vsel %vm2984, %v2930, 0
  %v2998 = vsel %vm2984, %v2935, 0
  %v3001 = vsel %vm2984, %v2940, 0
  %v3004 = vsel %vm2984, %v2945, 0
  %v3007 = vsel %vm2984, %v2950, 0
  %3009 = vmatprep.subr.mxu0 %v2955
  %3010 = vmatpush1.msra.mxu0 %v2954
  %3011 = vmatprep.subr.mxu0 %v2957
  %3012 = vmatpush1.msra.mxu0 %v2956
  %3013 = vmatprep.subr.mxu0 %v2959
  %3014 = vmatpush1.msra.mxu0 %v2958
  %3015 = vmatprep.subr.mxu0 %v2961
  %3016 = vmatpush1.msra.mxu0 %v2960
  %3017 = vmatprep.subr.mxu0 %v2963
  %3018 = vmatpush1.msra.mxu0 %v2962
  %3019 = vmatprep.subr.mxu0 %v2965
  %3020 = vmatpush1.msra.mxu0 %v2964
  %3021 = vmatprep.subr.mxu0 %v2967
  %3022 = vmatpush1.msra.mxu0 %v2966
  %3023 = vmatprep.subr.mxu0 %v2969
  %3024 = vmatpush1.msra.mxu0 %v2968
  %3025 = vmatprep.subr.mxu0 %v2971
  %3026 = vmatpush1.msra.mxu0 %v2970
  %3027 = vmatprep.subr.mxu0 %v2973
  %3028 = vmatpush1.msra.mxu0 %v2972
  %3029 = vmatprep.subr.mxu0 %v2975
  %3030 = vmatpush1.msra.mxu0 %v2974
  %3031 = vmatprep.subr.mxu0 %v2977
  %3032 = vmatpush1.msra.mxu0 %v2976
  %3033 = vmatprep.subr.mxu0 %v2979
  %3034 = vmatpush1.msra.mxu0 %v2978
  %3035 = vmatprep.subr.mxu0 %v2981
  %3036 = vmatpush1.msra.mxu0 %v2980
  %3037 = vmatprep.subr.mxu0 %v2983
  %3038 = vmatpush1.msra.mxu0 %v2982
  %3039 = vmatprep.subr.mxu0 0.0
  %3040 = vmatpush1.msra.mxu0 0.0
  %3041 = vmatprep.subr.mxu0 0.0
  %3042 = vmatpush1.msra.mxu0 0.0
  %3043 = vmatprep.subr.mxu0 0.0
  %3044 = vmatpush1.msra.mxu0 0.0
  %3045 = vmatprep.subr.mxu0 0.0
  %3046 = vmatpush1.msra.mxu0 0.0
  %3047 = vmatprep.subr.mxu0 0.0
  %3048 = vmatpush1.msra.mxu0 0.0
  %3049 = vmatprep.subr.mxu0 0.0
  %3050 = vmatpush1.msra.mxu0 0.0
  %3051 = vmatprep.subr.mxu0 0.0
  %3052 = vmatpush1.msra.mxu0 0.0
  %3053 = vmatprep.subr.mxu0 0.0
  %3054 = vmatpush1.msra.mxu0 0.0
  %3055 = vmatprep.subr.mxu0 0.0
  %3056 = vmatpush1.msra.mxu0 0.0
  %3057 = vmatprep.subr.mxu0 0.0
  %3058 = vmatpush1.msra.mxu0 0.0
  %3059 = vmatprep.subr.mxu0 0.0
  %3060 = vmatpush1.msra.mxu0 0.0
  %3061 = vmatprep.subr.mxu0 0.0
  %3062 = vmatpush1.msra.mxu0 0.0
  %3063 = vmatprep.subr.mxu0 0.0
  %3064 = vmatpush1.msra.mxu0 0.0
  %3065 = vmatprep.subr.mxu0 0.0
  %3066 = vmatpush1.msra.mxu0 0.0
  %3067 = vmatprep.subr.mxu0 0.0
  %3068 = vmatpush1.msra.mxu0 0.0
  %3069 = vmatprep.subr.mxu0 0.0
  %3070 = vmatpush1.msra.mxu0 0.0
  %3071 = vmatprep.subr.mxu0 0.0
  %3072 = vmatpush1.msra.mxu0 0.0
  %3073 = vmatprep.mubr.f32.mxu0 0.0
  %3074 = vmatmul.mubr.f32.gmra.mrb[0].mxu0 %v2986
  %v3075 = vpop.f32.mrb[0].mxu0
  %v3076 = vadd.f32 0.0, %v3075
  %v3077 = vpop.f32.mrb[0].mxu0
  %v3078 = vadd.f32 0.0, %v3077
  %3079 = vmatprep.mubr.f32.mxu0 0.0
  %3080 = vmatmul.mubr.f32.gmra.mrb[0].mxu0 %v2989
  %v3081 = vpop.f32.mrb[0].mxu0
  %v3082 = vadd.f32 0.0, %v3081
  %v3083 = vpop.f32.mrb[0].mxu0
  %v3084 = vadd.f32 0.0, %v3083
  %3085 = vmatprep.mubr.f32.mxu0 0.0
  %3086 = vmatmul.mubr.f32.gmra.mrb[0].mxu0 %v2992
  %v3087 = vpop.f32.mrb[0].mxu0
  %v3088 = vadd.f32 0.0, %v3087
  %v3089 = vpop.f32.mrb[0].mxu0
  %v3090 = vadd.f32 0.0, %v3089
  %3091 = vmatprep.mubr.f32.mxu0 0.0
  %3092 = vmatmul.mubr.f32.gmra.mrb[0].mxu0 %v2995
  %v3093 = vpop.f32.mrb[0].mxu0
  %v3094 = vadd.f32 0.0, %v3093
  %v3095 = vpop.f32.mrb[0].mxu0
  %v3096 = vadd.f32 0.0, %v3095
  %3097 = vmatprep.mubr.f32.mxu0 0.0
  %3098 = vmatmul.mubr.f32.gmra.mrb[0].mxu0 %v2998
  %v3099 = vpop.f32.mrb[0].mxu0
  %v3100 = vadd.f32 0.0, %v3099
  %v3101 = vpop.f32.mrb[0].mxu0
  %v3102 = vadd.f32 0.0, %v3101
  %3103 = vmatprep.mubr.f32.mxu0 0.0
  %3104 = vmatmul.mubr.f32.gmra.mrb[0].mxu0 %v3001
  %v3105 = vpop.f32.mrb[0].mxu0
  %v3106 = vadd.f32 0.0, %v3105
  %v3107 = vpop.f32.mrb[0].mxu0
  %v3108 = vadd.f32 0.0, %v3107
  %3109 = vmatprep.mubr.f32.mxu0 0.0
  %3110 = vmatmul.mubr.f32.gmra.mrb[0].mxu0 %v3004
  %v3111 = vpop.f32.mrb[0].mxu0
  %v3112 = vadd.f32 0.0, %v3111
  %v3113 = vpop.f32.mrb[0].mxu0
  %v3114 = vadd.f32 0.0, %v3113
  %3115 = vmatprep.mubr.f32.mxu0 0.0
  %3116 = vmatmul.mubr.f32.gmra.mrb[0].mxu0 %v3007
  %v3117 = vpop.f32.mrb[0].mxu0
  %v3118 = vadd.f32 0.0, %v3117
  %v3119 = vpop.f32.mrb[0].mxu0
  %v3120 = vadd.f32 0.0, %v3119
  %3121 = vdwg.mxu0
  %v3123 = vsel %vm2984, %v2747, 0
  %v3126 = vsel %vm2984, %v2752, 0
  %v3129 = vsel %vm2984, %v2757, 0
  %v3132 = vsel %vm2984, %v2762, 0
  %v3135 = vsel %vm2984, %v2767, 0
  %v3138 = vsel %vm2984, %v2772, 0
  %v3141 = vsel %vm2984, %v2777, 0
  %v3144 = vsel %vm2984, %v2782, 0
  %3146 = vmatprep.subr.mxu0 %v2786
  %3147 = vmatpush1.msra.mxu0 %v2785
  %3148 = vmatprep.subr.mxu0 %v2788
  %3149 = vmatpush1.msra.mxu0 %v2787
  %3150 = vmatprep.subr.mxu0 %v2790
  %3151 = vmatpush1.msra.mxu0 %v2789
  %3152 = vmatprep.subr.mxu0 %v2792
  %3153 = vmatpush1.msra.mxu0 %v2791
  %3154 = vmatprep.subr.mxu0 %v2794
  %3155 = vmatpush1.msra.mxu0 %v2793
  %3156 = vmatprep.subr.mxu0 %v2796
  %3157 = vmatpush1.msra.mxu0 %v2795
  %3158 = vmatprep.subr.mxu0 %v2798
  %3159 = vmatpush1.msra.mxu0 %v2797
  %3160 = vmatprep.subr.mxu0 %v2800
  %3161 = vmatpush1.msra.mxu0 %v2799
  %3162 = vmatprep.subr.mxu0 %v2802
  %3163 = vmatpush1.msra.mxu0 %v2801
  %3164 = vmatprep.subr.mxu0 %v2804
  %3165 = vmatpush1.msra.mxu0 %v2803
  %3166 = vmatprep.subr.mxu0 %v2806
  %3167 = vmatpush1.msra.mxu0 %v2805
  %3168 = vmatprep.subr.mxu0 %v2808
  %3169 = vmatpush1.msra.mxu0 %v2807
  %3170 = vmatprep.subr.mxu0 %v2810
  %3171 = vmatpush1.msra.mxu0 %v2809
  %3172 = vmatprep.subr.mxu0 %v2812
  %3173 = vmatpush1.msra.mxu0 %v2811
  %3174 = vmatprep.subr.mxu0 %v2814
  %3175 = vmatpush1.msra.mxu0 %v2813
  %3176 = vmatprep.subr.mxu0 0.0
  %3177 = vmatpush1.msra.mxu0 0.0
  %3178 = vmatprep.subr.mxu0 0.0
  %3179 = vmatpush1.msra.mxu0 0.0
  %3180 = vmatprep.subr.mxu0 0.0
  %3181 = vmatpush1.msra.mxu0 0.0
  %3182 = vmatprep.subr.mxu0 0.0
  %3183 = vmatpush1.msra.mxu0 0.0
  %3184 = vmatprep.subr.mxu0 0.0
  %3185 = vmatpush1.msra.mxu0 0.0
  %3186 = vmatprep.subr.mxu0 0.0
  %3187 = vmatpush1.msra.mxu0 0.0
  %3188 = vmatprep.subr.mxu0 0.0
  %3189 = vmatpush1.msra.mxu0 0.0
  %3190 = vmatprep.subr.mxu0 0.0
  %3191 = vmatpush1.msra.mxu0 0.0
  %3192 = vmatprep.subr.mxu0 0.0
  %3193 = vmatpush1.msra.mxu0 0.0
  %3194 = vmatprep.subr.mxu0 0.0
  %3195 = vmatpush1.msra.mxu0 0.0
  %3196 = vmatprep.subr.mxu0 0.0
  %3197 = vmatpush1.msra.mxu0 0.0
  %3198 = vmatprep.subr.mxu0 0.0
  %3199 = vmatpush1.msra.mxu0 0.0
  %3200 = vmatprep.subr.mxu0 0.0
  %3201 = vmatpush1.msra.mxu0 0.0
  %3202 = vmatprep.subr.mxu0 0.0
  %3203 = vmatpush1.msra.mxu0 0.0
  %3204 = vmatprep.subr.mxu0 0.0
  %3205 = vmatpush1.msra.mxu0 0.0
  %3206 = vmatprep.subr.mxu0 0.0
  %3207 = vmatpush1.msra.mxu0 0.0
  %3208 = vmatprep.subr.mxu0 0.0
  %3209 = vmatpush1.msra.mxu0 0.0
  %3210 = vmatprep.mubr.f32.mxu0 0.0
  %3211 = vmatmul.mubr.f32.gmra.mrb[0].mxu0 %v3123
  %v3212 = vpop.f32.mrb[0].mxu0
  %v3213 = vadd.f32 %v3076, %v3212
  %v3214 = vpop.f32.mrb[0].mxu0
  %v3215 = vadd.f32 %v3078, %v3214
  %3216 = vmatprep.mubr.f32.mxu0 0.0
  %3217 = vmatmul.mubr.f32.gmra.mrb[0].mxu0 %v3126
  %v3218 = vpop.f32.mrb[0].mxu0
  %v3219 = vadd.f32 %v3082, %v3218
  %v3220 = vpop.f32.mrb[0].mxu0
  %v3221 = vadd.f32 %v3084, %v3220
  %3222 = vmatprep.mubr.f32.mxu0 0.0
  %3223 = vmatmul.mubr.f32.gmra.mrb[0].mxu0 %v3129
  %v3224 = vpop.f32.mrb[0].mxu0
  %v3225 = vadd.f32 %v3088, %v3224
  %v3226 = vpop.f32.mrb[0].mxu0
  %v3227 = vadd.f32 %v3090, %v3226
  %3228 = vmatprep.mubr.f32.mxu0 0.0
  %3229 = vmatmul.mubr.f32.gmra.mrb[0].mxu0 %v3132
  %v3230 = vpop.f32.mrb[0].mxu0
  %v3231 = vadd.f32 %v3094, %v3230
  %v3232 = vpop.f32.mrb[0].mxu0
  %v3233 = vadd.f32 %v3096, %v3232
  %3234 = vmatprep.mubr.f32.mxu0 0.0
  %3235 = vmatmul.mubr.f32.gmra.mrb[0].mxu0 %v3135
  %v3236 = vpop.f32.mrb[0].mxu0
  %v3237 = vadd.f32 %v3100, %v3236
  %v3238 = vpop.f32.mrb[0].mxu0
  %v3239 = vadd.f32 %v3102, %v3238
  %3240 = vmatprep.mubr.f32.mxu0 0.0
  %3241 = vmatmul.mubr.f32.gmra.mrb[0].mxu0 %v3138
  %v3242 = vpop.f32.mrb[0].mxu0
  %v3243 = vadd.f32 %v3106, %v3242
  %v3244 = vpop.f32.mrb[0].mxu0
  %v3245 = vadd.f32 %v3108, %v3244
  %3246 = vmatprep.mubr.f32.mxu0 0.0
  %3247 = vmatmul.mubr.f32.gmra.mrb[0].mxu0 %v3141
  %v3248 = vpop.f32.mrb[0].mxu0
  %v3249 = vadd.f32 %v3112, %v3248
  %v3250 = vpop.f32.mrb[0].mxu0
  %v3251 = vadd.f32 %v3114, %v3250
  %3252 = vmatprep.mubr.f32.mxu0 0.0
  %3253 = vmatmul.mubr.f32.gmra.mrb[0].mxu0 %v3144
  %v3254 = vpop.f32.mrb[0].mxu0
  %v3255 = vadd.f32 %v3118, %v3254
  %v3256 = vpop.f32.mrb[0].mxu0
  %v3257 = vadd.f32 %v3120, %v3256
  %3258 = vdwg.mxu0
  %s3259 = scalar_lea.vmem %s5, 128
  %v3260 = vld [vmem:[%s3259] sm:$0xff]
  %v3261 = vld [vmem:[%s3259 + $0x8] sm:$0xff]
  %v3262 = vld [vmem:[%s3259 + $0x10] sm:$0xff]
  %v3263 = vld [vmem:[%s3259 + $0x18] sm:$0xff]
  %v3264 = vld [vmem:[%s3259 + $0x20] sm:$0xff]
  %v3265 = vld [vmem:[%s3259 + $0x28] sm:$0xff]
  %v3266 = vld [vmem:[%s3259 + $0x30] sm:$0xff]
  %v3267 = vld [vmem:[%s3259 + $0x38] sm:$0xff]
  %v3269 = vsel %vm2655, %v3260, 0
  %v3272 = vsel %vm2655, %v3261, 0
  %v3275 = vsel %vm2655, %v3262, 0
  %v3278 = vsel %vm2655, %v3263, 0
  %v3281 = vsel %vm2655, %v3264, 0
  %v3284 = vsel %vm2655, %v3265, 0
  %v3287 = vsel %vm2655, %v3266, 0
  %v3290 = vsel %vm2655, %v3267, 0
  %3292 = vmatprep.subr.mxu0 0.0
  %3293 = vmatpush1.msra.mxu0 %v2635
  %3294 = vmatprep.subr.mxu0 0.0
  %3295 = vmatpush1.msra.mxu0 %v2636
  %3296 = vmatprep.subr.mxu0 0.0
  %3297 = vmatpush1.msra.mxu0 %v2637
  %3298 = vmatprep.subr.mxu0 0.0
  %3299 = vmatpush1.msra.mxu0 %v2638
  %3300 = vmatprep.subr.mxu0 0.0
  %3301 = vmatpush1.msra.mxu0 %v2639
  %3302 = vmatprep.subr.mxu0 0.0
  %3303 = vmatpush1.msra.mxu0 %v2640
  %3304 = vmatprep.subr.mxu0 0.0
  %3305 = vmatpush1.msra.mxu0 %v2641
  %3306 = vmatprep.subr.mxu0 0.0
  %3307 = vmatpush1.msra.mxu0 %v2642
  %3308 = vmatprep.subr.mxu0 0.0
  %3309 = vmatpush1.msra.mxu0 %v2643
  %3310 = vmatprep.subr.mxu0 0.0
  %3311 = vmatpush1.msra.mxu0 %v2644
  %3312 = vmatprep.subr.mxu0 0.0
  %3313 = vmatpush1.msra.mxu0 %v2645
  %3314 = vmatprep.subr.mxu0 0.0
  %3315 = vmatpush1.msra.mxu0 %v2646
  %3316 = vmatprep.subr.mxu0 0.0
  %3317 = vmatpush1.msra.mxu0 0.0
  %3318 = vmatprep.subr.mxu0 0.0
  %3319 = vmatpush1.msra.mxu0 0.0
  %3320 = vmatprep.subr.mxu0 0.0
  %3321 = vmatpush1.msra.mxu0 0.0
  %3322 = vmatprep.subr.mxu0 0.0
  %3323 = vmatpush1.msra.mxu0 0.0
  %3324 = vmatprep.subr.mxu0 0.0
  %3325 = vmatpush1.msra.mxu0 0.0
  %3326 = vmatprep.subr.mxu0 0.0
  %3327 = vmatpush1.msra.mxu0 0.0
  %3328 = vmatprep.subr.mxu0 0.0
  %3329 = vmatpush1.msra.mxu0 0.0
  %3330 = vmatprep.subr.mxu0 0.0
  %3331 = vmatpush1.msra.mxu0 0.0
  %3332 = vmatprep.subr.mxu0 0.0
  %3333 = vmatpush1.msra.mxu0 0.0
  %3334 = vmatprep.subr.mxu0 0.0
  %3335 = vmatpush1.msra.mxu0 0.0
  %3336 = vmatprep.subr.mxu0 0.0
  %3337 = vmatpush1.msra.mxu0 0.0
  %3338 = vmatprep.subr.mxu0 0.0
  %3339 = vmatpush1.msra.mxu0 0.0
  %3340 = vmatprep.subr.mxu0 0.0
  %3341 = vmatpush1.msra.mxu0 0.0
  %3342 = vmatprep.subr.mxu0 0.0
  %3343 = vmatpush1.msra.mxu0 0.0
  %3344 = vmatprep.subr.mxu0 0.0
  %3345 = vmatpush1.msra.mxu0 0.0
  %3346 = vmatprep.subr.mxu0 0.0
  %3347 = vmatpush1.msra.mxu0 0.0
  %3348 = vmatprep.subr.mxu0 0.0
  %3349 = vmatpush1.msra.mxu0 0.0
  %3350 = vmatprep.subr.mxu0 0.0
  %3351 = vmatpush1.msra.mxu0 0.0
  %3352 = vmatprep.subr.mxu0 0.0
  %3353 = vmatpush1.msra.mxu0 0.0
  %3354 = vmatprep.subr.mxu0 0.0
  %3355 = vmatpush1.msra.mxu0 0.0
  %3356 = vmatprep.mubr.f32.mxu0 0.0
  %3357 = vmatmul.mubr.f32.gmra.mrb[0].mxu0 %v3269
  %v3358 = vpop.f32.mrb[0].mxu0
  %v3359 = vadd.f32 0.0, %v3358
  %v3360 = vpop.f32.mrb[0].mxu0
  %3361 = vmatprep.mubr.f32.mxu0 0.0
  %3362 = vmatmul.mubr.f32.gmra.mrb[0].mxu0 %v3272
  %v3363 = vpop.f32.mrb[0].mxu0
  %v3364 = vadd.f32 0.0, %v3363
  %v3365 = vpop.f32.mrb[0].mxu0
  %3366 = vmatprep.mubr.f32.mxu0 0.0
  %3367 = vmatmul.mubr.f32.gmra.mrb[0].mxu0 %v3275
  %v3368 = vpop.f32.mrb[0].mxu0
  %v3369 = vadd.f32 0.0, %v3368
  %v3370 = vpop.f32.mrb[0].mxu0
  %3371 = vmatprep.mubr.f32.mxu0 0.0
  %3372 = vmatmul.mubr.f32.gmra.mrb[0].mxu0 %v3278
  %v3373 = vpop.f32.mrb[0].mxu0
  %v3374 = vadd.f32 0.0, %v3373
  %v3375 = vpop.f32.mrb[0].mxu0
  %3376 = vmatprep.mubr.f32.mxu0 0.0
  %3377 = vmatmul.mubr.f32.gmra.mrb[0].mxu0 %v3281
  %v3378 = vpop.f32.mrb[0].mxu0
  %v3379 = vadd.f32 0.0, %v3378
  %v3380 = vpop.f32.mrb[0].mxu0
  %3381 = vmatprep.mubr.f32.mxu0 0.0
  %3382 = vmatmul.mubr.f32.gmra.mrb[0].mxu0 %v3284
  %v3383 = vpop.f32.mrb[0].mxu0
  %v3384 = vadd.f32 0.0, %v3383
  %v3385 = vpop.f32.mrb[0].mxu0
  %3386 = vmatprep.mubr.f32.mxu0 0.0
  %3387 = vmatmul.mubr.f32.gmra.mrb[0].mxu0 %v3287
  %v3388 = vpop.f32.mrb[0].mxu0
  %v3389 = vadd.f32 0.0, %v3388
  %v3390 = vpop.f32.mrb[0].mxu0
  %3391 = vmatprep.mubr.f32.mxu0 0.0
  %3392 = vmatmul.mubr.f32.gmra.mrb[0].mxu0 %v3290
  %v3393 = vpop.f32.mrb[0].mxu0
  %v3394 = vadd.f32 0.0, %v3393
  %v3395 = vpop.f32.mrb[0].mxu0
  %3396 = vdwg.mxu0
  %s3397 = scalar_lea.vmem %s6, 480
  %v3398 = vld [vmem:[%s3397] sm:$0xff]
  %v3399 = vld [vmem:[%s3397 + $0x8] sm:$0xff]
  %v3400 = vld [vmem:[%s3397 + $0x10] sm:$0xff]
  %v3401 = vld [vmem:[%s3397 + $0x18] sm:$0xff]
  %v3402 = vld [vmem:[%s3397 + $0x20] sm:$0xff]
  %v3403 = vld [vmem:[%s3397 + $0x28] sm:$0xff]
  %v3404 = vld [vmem:[%s3397 + $0x30] sm:$0xff]
  %v3405 = vld [vmem:[%s3397 + $0x38] sm:$0xff]
  %v3406 = vld [vmem:[%s3397 + $0x40] sm:$0xff]
  %v3407 = vld [vmem:[%s3397 + $0x48] sm:$0xff]
  %v3408 = vld [vmem:[%s3397 + $0x50] sm:$0xff]
  %v3409 = vld [vmem:[%s3397 + $0x58] sm:$0xff]
  %v3410 = vld [vmem:[%s3397 + $0x60] sm:$0xff]
  %v3411 = vld [vmem:[%s3397 + $0x68] sm:$0xff]
  %v3412 = vld [vmem:[%s3397 + $0x70] sm:$0xff]
  %v3413 = vld [vmem:[%s3397 + $0x78] sm:$0xff]
  %v3414 = vld [vmem:[%s3397 + $0x80] sm:$0xff]
  %v3415 = vld [vmem:[%s3397 + $0x88] sm:$0xff]
  %v3416 = vld [vmem:[%s3397 + $0x90] sm:$0xff]
  %v3417 = vld [vmem:[%s3397 + $0x98] sm:$0xff]
  %v3418 = vld [vmem:[%s3397 + $0xa0] sm:$0xff]
  %v3419 = vld [vmem:[%s3397 + $0xa8] sm:$0xff]
  %v3420 = vld [vmem:[%s3397 + $0xb0] sm:$0xff]
  %v3421 = vld [vmem:[%s3397 + $0xb8] sm:$0xff]
  %v3422 = vld [vmem:[%s3397 + $0xc0] sm:$0xff]
  %v3423 = vld [vmem:[%s3397 + $0xc8] sm:$0xff]
  %v3424 = vld [vmem:[%s3397 + $0xd0] sm:$0xff]
  %v3425 = vld [vmem:[%s3397 + $0xd8] sm:$0xff]
  %v3426 = vld [vmem:[%s3397 + $0xe0] sm:$0xff]
  %v3427 = vld [vmem:[%s3397 + $0xe8] sm:$0xff]
  %v3429 = vsel %vm2984, %v3359, 0
  %v3432 = vsel %vm2984, %v3364, 0
  %v3435 = vsel %vm2984, %v3369, 0
  %v3438 = vsel %vm2984, %v3374, 0
  %v3441 = vsel %vm2984, %v3379, 0
  %v3444 = vsel %vm2984, %v3384, 0
  %v3447 = vsel %vm2984, %v3389, 0
  %v3450 = vsel %vm2984, %v3394, 0
  %3452 = vmatprep.subr.mxu0 %v3399
  %3453 = vmatpush1.msra.mxu0 %v3398
  %3454 = vmatprep.subr.mxu0 %v3401
  %3455 = vmatpush1.msra.mxu0 %v3400
  %3456 = vmatprep.subr.mxu0 %v3403
  %3457 = vmatpush1.msra.mxu0 %v3402
  %3458 = vmatprep.subr.mxu0 %v3405
  %3459 = vmatpush1.msra.mxu0 %v3404
  %3460 = vmatprep.subr.mxu0 %v3407
  %3461 = vmatpush1.msra.mxu0 %v3406
  %3462 = vmatprep.subr.mxu0 %v3409
  %3463 = vmatpush1.msra.mxu0 %v3408
  %3464 = vmatprep.subr.mxu0 %v3411
  %3465 = vmatpush1.msra.mxu0 %v3410
  %3466 = vmatprep.subr.mxu0 %v3413
  %3467 = vmatpush1.msra.mxu0 %v3412
  %3468 = vmatprep.subr.mxu0 %v3415
  %3469 = vmatpush1.msra.mxu0 %v3414
  %3470 = vmatprep.subr.mxu0 %v3417
  %3471 = vmatpush1.msra.mxu0 %v3416
  %3472 = vmatprep.subr.mxu0 %v3419
  %3473 = vmatpush1.msra.mxu0 %v3418
  %3474 = vmatprep.subr.mxu0 %v3421
  %3475 = vmatpush1.msra.mxu0 %v3420
  %3476 = vmatprep.subr.mxu0 %v3423
  %3477 = vmatpush1.msra.mxu0 %v3422
  %3478 = vmatprep.subr.mxu0 %v3425
  %3479 = vmatpush1.msra.mxu0 %v3424
  %3480 = vmatprep.subr.mxu0 %v3427
  %3481 = vmatpush1.msra.mxu0 %v3426
  %3482 = vmatprep.subr.mxu0 0.0
  %3483 = vmatpush1.msra.mxu0 0.0
  %3484 = vmatprep.subr.mxu0 0.0
  %3485 = vmatpush1.msra.mxu0 0.0
  %3486 = vmatprep.subr.mxu0 0.0
  %3487 = vmatpush1.msra.mxu0 0.0
  %3488 = vmatprep.subr.mxu0 0.0
  %3489 = vmatpush1.msra.mxu0 0.0
  %3490 = vmatprep.subr.mxu0 0.0
  %3491 = vmatpush1.msra.mxu0 0.0
  %3492 = vmatprep.subr.mxu0 0.0
  %3493 = vmatpush1.msra.mxu0 0.0
  %3494 = vmatprep.subr.mxu0 0.0
  %3495 = vmatpush1.msra.mxu0 0.0
  %3496 = vmatprep.subr.mxu0 0.0
  %3497 = vmatpush1.msra.mxu0 0.0
  %3498 = vmatprep.subr.mxu0 0.0
  %3499 = vmatpush1.msra.mxu0 0.0
  %3500 = vmatprep.subr.mxu0 0.0
  %3501 = vmatpush1.msra.mxu0 0.0
  %3502 = vmatprep.subr.mxu0 0.0
  %3503 = vmatpush1.msra.mxu0 0.0
  %3504 = vmatprep.subr.mxu0 0.0
  %3505 = vmatpush1.msra.mxu0 0.0
  %3506 = vmatprep.subr.mxu0 0.0
  %3507 = vmatpush1.msra.mxu0 0.0
  %3508 = vmatprep.subr.mxu0 0.0
  %3509 = vmatpush1.msra.mxu0 0.0
  %3510 = vmatprep.subr.mxu0 0.0
  %3511 = vmatpush1.msra.mxu0 0.0
  %3512 = vmatprep.subr.mxu0 0.0
  %3513 = vmatpush1.msra.mxu0 0.0
  %3514 = vmatprep.subr.mxu0 0.0
  %3515 = vmatpush1.msra.mxu0 0.0
  %3516 = vmatprep.mubr.f32.mxu0 0.0
  %3517 = vmatmul.mubr.f32.gmra.mrb[0].mxu0 %v3429
  %v3518 = vpop.f32.mrb[0].mxu0
  %v3519 = vadd.f32 0.0, %v3518
  %v3520 = vpop.f32.mrb[0].mxu0
  %v3521 = vadd.f32 0.0, %v3520
  %3522 = vmatprep.mubr.f32.mxu0 0.0
  %3523 = vmatmul.mubr.f32.gmra.mrb[0].mxu0 %v3432
  %v3524 = vpop.f32.mrb[0].mxu0
  %v3525 = vadd.f32 0.0, %v3524
  %v3526 = vpop.f32.mrb[0].mxu0
  %v3527 = vadd.f32 0.0, %v3526
  %3528 = vmatprep.mubr.f32.mxu0 0.0
  %3529 = vmatmul.mubr.f32.gmra.mrb[0].mxu0 %v3435
  %v3530 = vpop.f32.mrb[0].mxu0
  %v3531 = vadd.f32 0.0, %v3530
  %v3532 = vpop.f32.mrb[0].mxu0
  %v3533 = vadd.f32 0.0, %v3532
  %3534 = vmatprep.mubr.f32.mxu0 0.0
  %3535 = vmatmul.mubr.f32.gmra.mrb[0].mxu0 %v3438
  %v3536 = vpop.f32.mrb[0].mxu0
  %v3537 = vadd.f32 0.0, %v3536
  %v3538 = vpop.f32.mrb[0].mxu0
  %v3539 = vadd.f32 0.0, %v3538
  %3540 = vmatprep.mubr.f32.mxu0 0.0
  %3541 = vmatmul.mubr.f32.gmra.mrb[0].mxu0 %v3441
  %v3542 = vpop.f32.mrb[0].mxu0
  %v3543 = vadd.f32 0.0, %v3542
  %v3544 = vpop.f32.mrb[0].mxu0
  %v3545 = vadd.f32 0.0, %v3544
  %3546 = vmatprep.mubr.f32.mxu0 0.0
  %3547 = vmatmul.mubr.f32.gmra.mrb[0].mxu0 %v3444
  %v3548 = vpop.f32.mrb[0].mxu0
  %v3549 = vadd.f32 0.0, %v3548
  %v3550 = vpop.f32.mrb[0].mxu0
  %v3551 = vadd.f32 0.0, %v3550
  %3552 = vmatprep.mubr.f32.mxu0 0.0
  %3553 = vmatmul.mubr.f32.gmra.mrb[0].mxu0 %v3447
  %v3554 = vpop.f32.mrb[0].mxu0
  %v3555 = vadd.f32 0.0, %v3554
  %v3556 = vpop.f32.mrb[0].mxu0
  %v3557 = vadd.f32 0.0, %v3556
  %3558 = vmatprep.mubr.f32.mxu0 0.0
  %3559 = vmatmul.mubr.f32.gmra.mrb[0].mxu0 %v3450
  %v3560 = vpop.f32.mrb[0].mxu0
  %v3561 = vadd.f32 0.0, %v3560
  %v3562 = vpop.f32.mrb[0].mxu0
  %v3563 = vadd.f32 0.0, %v3562
  %3564 = vdwg.mxu0
  %v3565 = vadd.f32 %v3213, %v3519
  %v3566 = vadd.f32 %v3215, %v3521
  %v3567 = vadd.f32 %v3219, %v3525
  %v3568 = vadd.f32 %v3221, %v3527
  %v3569 = vadd.f32 %v3225, %v3531
  %v3570 = vadd.f32 %v3227, %v3533
  %v3571 = vadd.f32 %v3231, %v3537
  %v3572 = vadd.f32 %v3233, %v3539
  %v3573 = vadd.f32 %v3237, %v3543
  %v3574 = vadd.f32 %v3239, %v3545
  %v3575 = vadd.f32 %v3243, %v3549
  %v3576 = vadd.f32 %v3245, %v3551
  %v3577 = vadd.f32 %v3249, %v3555
  %v3578 = vadd.f32 %v3251, %v3557
  %v3579 = vadd.f32 %v3255, %v3561
  %v3580 = vadd.f32 %v3257, %v3563
  %s3581 = scalar_lea.vmem %s5, 192
  %v3582 = vld [vmem:[%s3581] sm:$0xff]
  %v3583 = vld [vmem:[%s3581 + $0x8] sm:$0xff]
  %v3584 = vld [vmem:[%s3581 + $0x10] sm:$0xff]
  %v3585 = vld [vmem:[%s3581 + $0x18] sm:$0xff]
  %v3586 = vld [vmem:[%s3581 + $0x20] sm:$0xff]
  %v3587 = vld [vmem:[%s3581 + $0x28] sm:$0xff]
  %v3588 = vld [vmem:[%s3581 + $0x30] sm:$0xff]
  %v3589 = vld [vmem:[%s3581 + $0x38] sm:$0xff]
  %v3591 = vsel %vm2655, %v3582, 0
  %v3594 = vsel %vm2655, %v3583, 0
  %v3597 = vsel %vm2655, %v3584, 0
  %v3600 = vsel %vm2655, %v3585, 0
  %v3603 = vsel %vm2655, %v3586, 0
  %v3606 = vsel %vm2655, %v3587, 0
  %v3609 = vsel %vm2655, %v3588, 0
  %v3612 = vsel %vm2655, %v3589, 0
  %3614 = vmatprep.subr.mxu0 0.0
  %3615 = vmatpush1.msra.mxu0 %v2635
  %3616 = vmatprep.subr.mxu0 0.0
  %3617 = vmatpush1.msra.mxu0 %v2636
  %3618 = vmatprep.subr.mxu0 0.0
  %3619 = vmatpush1.msra.mxu0 %v2637
  %3620 = vmatprep.subr.mxu0 0.0
  %3621 = vmatpush1.msra.mxu0 %v2638
  %3622 = vmatprep.subr.mxu0 0.0
  %3623 = vmatpush1.msra.mxu0 %v2639
  %3624 = vmatprep.subr.mxu0 0.0
  %3625 = vmatpush1.msra.mxu0 %v2640
  %3626 = vmatprep.subr.mxu0 0.0
  %3627 = vmatpush1.msra.mxu0 %v2641
  %3628 = vmatprep.subr.mxu0 0.0
  %3629 = vmatpush1.msra.mxu0 %v2642
  %3630 = vmatprep.subr.mxu0 0.0
  %3631 = vmatpush1.msra.mxu0 %v2643
  %3632 = vmatprep.subr.mxu0 0.0
  %3633 = vmatpush1.msra.mxu0 %v2644
  %3634 = vmatprep.subr.mxu0 0.0
  %3635 = vmatpush1.msra.mxu0 %v2645
  %3636 = vmatprep.subr.mxu0 0.0
  %3637 = vmatpush1.msra.mxu0 %v2646
  %3638 = vmatprep.subr.mxu0 0.0
  %3639 = vmatpush1.msra.mxu0 0.0
  %3640 = vmatprep.subr.mxu0 0.0
  %3641 = vmatpush1.msra.mxu0 0.0
  %3642 = vmatprep.subr.mxu0 0.0
  %3643 = vmatpush1.msra.mxu0 0.0
  %3644 = vmatprep.subr.mxu0 0.0
  %3645 = vmatpush1.msra.mxu0 0.0
  %3646 = vmatprep.subr.mxu0 0.0
  %3647 = vmatpush1.msra.mxu0 0.0
  %3648 = vmatprep.subr.mxu0 0.0
  %3649 = vmatpush1.msra.mxu0 0.0
  %3650 = vmatprep.subr.mxu0 0.0
  %3651 = vmatpush1.msra.mxu0 0.0
  %3652 = vmatprep.subr.mxu0 0.0
  %3653 = vmatpush1.msra.mxu0 0.0
  %3654 = vmatprep.subr.mxu0 0.0
  %3655 = vmatpush1.msra.mxu0 0.0
  %3656 = vmatprep.subr.mxu0 0.0
  %3657 = vmatpush1.msra.mxu0 0.0
  %3658 = vmatprep.subr.mxu0 0.0
  %3659 = vmatpush1.msra.mxu0 0.0
  %3660 = vmatprep.subr.mxu0 0.0
  %3661 = vmatpush1.msra.mxu0 0.0
  %3662 = vmatprep.subr.mxu0 0.0
  %3663 = vmatpush1.msra.mxu0 0.0
  %3664 = vmatprep.subr.mxu0 0.0
  %3665 = vmatpush1.msra.mxu0 0.0
  %3666 = vmatprep.subr.mxu0 0.0
  %3667 = vmatpush1.msra.mxu0 0.0
  %3668 = vmatprep.subr.mxu0 0.0
  %3669 = vmatpush1.msra.mxu0 0.0
  %3670 = vmatprep.subr.mxu0 0.0
  %3671 = vmatpush1.msra.mxu0 0.0
  %3672 = vmatprep.subr.mxu0 0.0
  %3673 = vmatpush1.msra.mxu0 0.0
  %3674 = vmatprep.subr.mxu0 0.0
  %3675 = vmatpush1.msra.mxu0 0.0
  %3676 = vmatprep.subr.mxu0 0.0
  %3677 = vmatpush1.msra.mxu0 0.0
  %3678 = vmatprep.mubr.f32.mxu0 0.0
  %3679 = vmatmul.mubr.f32.gmra.mrb[0].mxu0 %v3591
  %v3680 = vpop.f32.mrb[0].mxu0
  %v3681 = vadd.f32 0.0, %v3680
  %v3682 = vpop.f32.mrb[0].mxu0
  %3683 = vmatprep.mubr.f32.mxu0 0.0
  %3684 = vmatmul.mubr.f32.gmra.mrb[0].mxu0 %v3594
  %v3685 = vpop.f32.mrb[0].mxu0
  %v3686 = vadd.f32 0.0, %v3685
  %v3687 = vpop.f32.mrb[0].mxu0
  %3688 = vmatprep.mubr.f32.mxu0 0.0
  %3689 = vmatmul.mubr.f32.gmra.mrb[0].mxu0 %v3597
  %v3690 = vpop.f32.mrb[0].mxu0
  %v3691 = vadd.f32 0.0, %v3690
  %v3692 = vpop.f32.mrb[0].mxu0
  %3693 = vmatprep.mubr.f32.mxu0 0.0
  %3694 = vmatmul.mubr.f32.gmra.mrb[0].mxu0 %v3600
  %v3695 = vpop.f32.mrb[0].mxu0
  %v3696 = vadd.f32 0.0, %v3695
  %v3697 = vpop.f32.mrb[0].mxu0
  %3698 = vmatprep.mubr.f32.mxu0 0.0
  %3699 = vmatmul.mubr.f32.gmra.mrb[0].mxu0 %v3603
  %v3700 = vpop.f32.mrb[0].mxu0
  %v3701 = vadd.f32 0.0, %v3700
  %v3702 = vpop.f32.mrb[0].mxu0
  %3703 = vmatprep.mubr.f32.mxu0 0.0
  %3704 = vmatmul.mubr.f32.gmra.mrb[0].mxu0 %v3606
  %v3705 = vpop.f32.mrb[0].mxu0
  %v3706 = vadd.f32 0.0, %v3705
  %v3707 = vpop.f32.mrb[0].mxu0
  %3708 = vmatprep.mubr.f32.mxu0 0.0
  %3709 = vmatmul.mubr.f32.gmra.mrb[0].mxu0 %v3609
  %v3710 = vpop.f32.mrb[0].mxu0
  %v3711 = vadd.f32 0.0, %v3710
  %v3712 = vpop.f32.mrb[0].mxu0
  %3713 = vmatprep.mubr.f32.mxu0 0.0
  %3714 = vmatmul.mubr.f32.gmra.mrb[0].mxu0 %v3612
  %v3715 = vpop.f32.mrb[0].mxu0
  %v3716 = vadd.f32 0.0, %v3715
  %v3717 = vpop.f32.mrb[0].mxu0
  %3718 = vdwg.mxu0
  %s3719 = scalar_lea.vmem %s6, 720
  %v3720 = vld [vmem:[%s3719] sm:$0xff]
  %v3721 = vld [vmem:[%s3719 + $0x8] sm:$0xff]
  %v3722 = vld [vmem:[%s3719 + $0x10] sm:$0xff]
  %v3723 = vld [vmem:[%s3719 + $0x18] sm:$0xff]
  %v3724 = vld [vmem:[%s3719 + $0x20] sm:$0xff]
  %v3725 = vld [vmem:[%s3719 + $0x28] sm:$0xff]
  %v3726 = vld [vmem:[%s3719 + $0x30] sm:$0xff]
  %v3727 = vld [vmem:[%s3719 + $0x38] sm:$0xff]
  %v3728 = vld [vmem:[%s3719 + $0x40] sm:$0xff]
  %v3729 = vld [vmem:[%s3719 + $0x48] sm:$0xff]
  %v3730 = vld [vmem:[%s3719 + $0x50] sm:$0xff]
  %v3731 = vld [vmem:[%s3719 + $0x58] sm:$0xff]
  %v3732 = vld [vmem:[%s3719 + $0x60] sm:$0xff]
  %v3733 = vld [vmem:[%s3719 + $0x68] sm:$0xff]
  %v3734 = vld [vmem:[%s3719 + $0x70] sm:$0xff]
  %v3735 = vld [vmem:[%s3719 + $0x78] sm:$0xff]
  %v3736 = vld [vmem:[%s3719 + $0x80] sm:$0xff]
  %v3737 = vld [vmem:[%s3719 + $0x88] sm:$0xff]
  %v3738 = vld [vmem:[%s3719 + $0x90] sm:$0xff]
  %v3739 = vld [vmem:[%s3719 + $0x98] sm:$0xff]
  %v3740 = vld [vmem:[%s3719 + $0xa0] sm:$0xff]
  %v3741 = vld [vmem:[%s3719 + $0xa8] sm:$0xff]
  %v3742 = vld [vmem:[%s3719 + $0xb0] sm:$0xff]
  %v3743 = vld [vmem:[%s3719 + $0xb8] sm:$0xff]
  %v3744 = vld [vmem:[%s3719 + $0xc0] sm:$0xff]
  %v3745 = vld [vmem:[%s3719 + $0xc8] sm:$0xff]
  %v3746 = vld [vmem:[%s3719 + $0xd0] sm:$0xff]
  %v3747 = vld [vmem:[%s3719 + $0xd8] sm:$0xff]
  %v3748 = vld [vmem:[%s3719 + $0xe0] sm:$0xff]
  %v3749 = vld [vmem:[%s3719 + $0xe8] sm:$0xff]
  %v3751 = vsel %vm2984, %v3681, 0
  %v3754 = vsel %vm2984, %v3686, 0
  %v3757 = vsel %vm2984, %v3691, 0
  %v3760 = vsel %vm2984, %v3696, 0
  %v3763 = vsel %vm2984, %v3701, 0
  %v3766 = vsel %vm2984, %v3706, 0
  %v3769 = vsel %vm2984, %v3711, 0
  %v3772 = vsel %vm2984, %v3716, 0
  %3774 = vmatprep.subr.mxu0 %v3721
  %3775 = vmatpush1.msra.mxu0 %v3720
  %3776 = vmatprep.subr.mxu0 %v3723
  %3777 = vmatpush1.msra.mxu0 %v3722
  %3778 = vmatprep.subr.mxu0 %v3725
  %3779 = vmatpush1.msra.mxu0 %v3724
  %3780 = vmatprep.subr.mxu0 %v3727
  %3781 = vmatpush1.msra.mxu0 %v3726
  %3782 = vmatprep.subr.mxu0 %v3729
  %3783 = vmatpush1.msra.mxu0 %v3728
  %3784 = vmatprep.subr.mxu0 %v3731
  %3785 = vmatpush1.msra.mxu0 %v3730
  %3786 = vmatprep.subr.mxu0 %v3733
  %3787 = vmatpush1.msra.mxu0 %v3732
  %3788 = vmatprep.subr.mxu0 %v3735
  %3789 = vmatpush1.msra.mxu0 %v3734
  %3790 = vmatprep.subr.mxu0 %v3737
  %3791 = vmatpush1.msra.mxu0 %v3736
  %3792 = vmatprep.subr.mxu0 %v3739
  %3793 = vmatpush1.msra.mxu0 %v3738
  %3794 = vmatprep.subr.mxu0 %v3741
  %3795 = vmatpush1.msra.mxu0 %v3740
  %3796 = vmatprep.subr.mxu0 %v3743
  %3797 = vmatpush1.msra.mxu0 %v3742
  %3798 = vmatprep.subr.mxu0 %v3745
  %3799 = vmatpush1.msra.mxu0 %v3744
  %3800 = vmatprep.subr.mxu0 %v3747
  %3801 = vmatpush1.msra.mxu0 %v3746
  %3802 = vmatprep.subr.mxu0 %v3749
  %3803 = vmatpush1.msra.mxu0 %v3748
  %3804 = vmatprep.subr.mxu0 0.0
  %3805 = vmatpush1.msra.mxu0 0.0
  %3806 = vmatprep.subr.mxu0 0.0
  %3807 = vmatpush1.msra.mxu0 0.0
  %3808 = vmatprep.subr.mxu0 0.0
  %3809 = vmatpush1.msra.mxu0 0.0
  %3810 = vmatprep.subr.mxu0 0.0
  %3811 = vmatpush1.msra.mxu0 0.0
  %3812 = vmatprep.subr.mxu0 0.0
  %3813 = vmatpush1.msra.mxu0 0.0
  %3814 = vmatprep.subr.mxu0 0.0
  %3815 = vmatpush1.msra.mxu0 0.0
  %3816 = vmatprep.subr.mxu0 0.0
  %3817 = vmatpush1.msra.mxu0 0.0
  %3818 = vmatprep.subr.mxu0 0.0
  %3819 = vmatpush1.msra.mxu0 0.0
  %3820 = vmatprep.subr.mxu0 0.0
  %3821 = vmatpush1.msra.mxu0 0.0
  %3822 = vmatprep.subr.mxu0 0.0
  %3823 = vmatpush1.msra.mxu0 0.0
  %3824 = vmatprep.subr.mxu0 0.0
  %3825 = vmatpush1.msra.mxu0 0.0
  %3826 = vmatprep.subr.mxu0 0.0
  %3827 = vmatpush1.msra.mxu0 0.0
  %3828 = vmatprep.subr.mxu0 0.0
  %3829 = vmatpush1.msra.mxu0 0.0
  %3830 = vmatprep.subr.mxu0 0.0
  %3831 = vmatpush1.msra.mxu0 0.0
  %3832 = vmatprep.subr.mxu0 0.0
  %3833 = vmatpush1.msra.mxu0 0.0
  %3834 = vmatprep.subr.mxu0 0.0
  %3835 = vmatpush1.msra.mxu0 0.0
  %3836 = vmatprep.subr.mxu0 0.0
  %3837 = vmatpush1.msra.mxu0 0.0
  %3838 = vmatprep.mubr.f32.mxu0 0.0
  %3839 = vmatmul.mubr.f32.gmra.mrb[0].mxu0 %v3751
  %v3840 = vpop.f32.mrb[0].mxu0
  %v3841 = vadd.f32 0.0, %v3840
  %v3842 = vpop.f32.mrb[0].mxu0
  %v3843 = vadd.f32 0.0, %v3842
  %3844 = vmatprep.mubr.f32.mxu0 0.0
  %3845 = vmatmul.mubr.f32.gmra.mrb[0].mxu0 %v3754
  %v3846 = vpop.f32.mrb[0].mxu0
  %v3847 = vadd.f32 0.0, %v3846
  %v3848 = vpop.f32.mrb[0].mxu0
  %v3849 = vadd.f32 0.0, %v3848
  %3850 = vmatprep.mubr.f32.mxu0 0.0
  %3851 = vmatmul.mubr.f32.gmra.mrb[0].mxu0 %v3757
  %v3852 = vpop.f32.mrb[0].mxu0
  %v3853 = vadd.f32 0.0, %v3852
  %v3854 = vpop.f32.mrb[0].mxu0
  %v3855 = vadd.f32 0.0, %v3854
  %3856 = vmatprep.mubr.f32.mxu0 0.0
  %3857 = vmatmul.mubr.f32.gmra.mrb[0].mxu0 %v3760
  %v3858 = vpop.f32.mrb[0].mxu0
  %v3859 = vadd.f32 0.0, %v3858
  %v3860 = vpop.f32.mrb[0].mxu0
  %v3861 = vadd.f32 0.0, %v3860
  %3862 = vmatprep.mubr.f32.mxu0 0.0
  %3863 = vmatmul.mubr.f32.gmra.mrb[0].mxu0 %v3763
  %v3864 = vpop.f32.mrb[0].mxu0
  %v3865 = vadd.f32 0.0, %v3864
  %v3866 = vpop.f32.mrb[0].mxu0
  %v3867 = vadd.f32 0.0, %v3866
  %3868 = vmatprep.mubr.f32.mxu0 0.0
  %3869 = vmatmul.mubr.f32.gmra.mrb[0].mxu0 %v3766
  %v3870 = vpop.f32.mrb[0].mxu0
  %v3871 = vadd.f32 0.0, %v3870
  %v3872 = vpop.f32.mrb[0].mxu0
  %v3873 = vadd.f32 0.0, %v3872
  %3874 = vmatprep.mubr.f32.mxu0 0.0
  %3875 = vmatmul.mubr.f32.gmra.mrb[0].mxu0 %v3769
  %v3876 = vpop.f32.mrb[0].mxu0
  %v3877 = vadd.f32 0.0, %v3876
  %v3878 = vpop.f32.mrb[0].mxu0
  %v3879 = vadd.f32 0.0, %v3878
  %3880 = vmatprep.mubr.f32.mxu0 0.0
  %3881 = vmatmul.mubr.f32.gmra.mrb[0].mxu0 %v3772
  %v3882 = vpop.f32.mrb[0].mxu0
  %v3883 = vadd.f32 0.0, %v3882
  %v3884 = vpop.f32.mrb[0].mxu0
  %v3885 = vadd.f32 0.0, %v3884
  %3886 = vdwg.mxu0
  %v3887 = vadd.f32 %v3565, %v3841
  %v3888 = vadd.f32 %v3566, %v3843
  %v3889 = vadd.f32 %v3567, %v3847
  %v3890 = vadd.f32 %v3568, %v3849
  %v3891 = vadd.f32 %v3569, %v3853
  %v3892 = vadd.f32 %v3570, %v3855
  %v3893 = vadd.f32 %v3571, %v3859
  %v3894 = vadd.f32 %v3572, %v3861
  %v3895 = vadd.f32 %v3573, %v3865
  %v3896 = vadd.f32 %v3574, %v3867
  %v3897 = vadd.f32 %v3575, %v3871
  %v3898 = vadd.f32 %v3576, %v3873
  %v3899 = vadd.f32 %v3577, %v3877
  %v3900 = vadd.f32 %v3578, %v3879
  %v3901 = vadd.f32 %v3579, %v3883
  %v3902 = vadd.f32 %v3580, %v3885
  %s3903 = scalar_lea.vmem %s5, 256
  %v3904 = vld [vmem:[%s3903] sm:$0xff]
  %v3905 = vld [vmem:[%s3903 + $0x8] sm:$0xff]
  %v3906 = vld [vmem:[%s3903 + $0x10] sm:$0xff]
  %v3907 = vld [vmem:[%s3903 + $0x18] sm:$0xff]
  %v3908 = vld [vmem:[%s3903 + $0x20] sm:$0xff]
  %v3909 = vld [vmem:[%s3903 + $0x28] sm:$0xff]
  %v3910 = vld [vmem:[%s3903 + $0x30] sm:$0xff]
  %v3911 = vld [vmem:[%s3903 + $0x38] sm:$0xff]
  %v3913 = vsel %vm2655, %v3904, 0
  %v3916 = vsel %vm2655, %v3905, 0
  %v3919 = vsel %vm2655, %v3906, 0
  %v3922 = vsel %vm2655, %v3907, 0
  %v3925 = vsel %vm2655, %v3908, 0
  %v3928 = vsel %vm2655, %v3909, 0
  %v3931 = vsel %vm2655, %v3910, 0
  %v3934 = vsel %vm2655, %v3911, 0
  %3936 = vmatprep.subr.mxu0 0.0
  %3937 = vmatpush1.msra.mxu0 %v2635
  %3938 = vmatprep.subr.mxu0 0.0
  %3939 = vmatpush1.msra.mxu0 %v2636
  %3940 = vmatprep.subr.mxu0 0.0
  %3941 = vmatpush1.msra.mxu0 %v2637
  %3942 = vmatprep.subr.mxu0 0.0
  %3943 = vmatpush1.msra.mxu0 %v2638
  %3944 = vmatprep.subr.mxu0 0.0
  %3945 = vmatpush1.msra.mxu0 %v2639
  %3946 = vmatprep.subr.mxu0 0.0
  %3947 = vmatpush1.msra.mxu0 %v2640
  %3948 = vmatprep.subr.mxu0 0.0
  %3949 = vmatpush1.msra.mxu0 %v2641
  %3950 = vmatprep.subr.mxu0 0.0
  %3951 = vmatpush1.msra.mxu0 %v2642
  %3952 = vmatprep.subr.mxu0 0.0
  %3953 = vmatpush1.msra.mxu0 %v2643
  %3954 = vmatprep.subr.mxu0 0.0
  %3955 = vmatpush1.msra.mxu0 %v2644
  %3956 = vmatprep.subr.mxu0 0.0
  %3957 = vmatpush1.msra.mxu0 %v2645
  %3958 = vmatprep.subr.mxu0 0.0
  %3959 = vmatpush1.msra.mxu0 %v2646
  %3960 = vmatprep.subr.mxu0 0.0
  %3961 = vmatpush1.msra.mxu0 0.0
  %3962 = vmatprep.subr.mxu0 0.0
  %3963 = vmatpush1.msra.mxu0 0.0
  %3964 = vmatprep.subr.mxu0 0.0
  %3965 = vmatpush1.msra.mxu0 0.0
  %3966 = vmatprep.subr.mxu0 0.0
  %3967 = vmatpush1.msra.mxu0 0.0
  %3968 = vmatprep.subr.mxu0 0.0
  %3969 = vmatpush1.msra.mxu0 0.0
  %3970 = vmatprep.subr.mxu0 0.0
  %3971 = vmatpush1.msra.mxu0 0.0
  %3972 = vmatprep.subr.mxu0 0.0
  %3973 = vmatpush1.msra.mxu0 0.0
  %3974 = vmatprep.subr.mxu0 0.0
  %3975 = vmatpush1.msra.mxu0 0.0
  %3976 = vmatprep.subr.mxu0 0.0
  %3977 = vmatpush1.msra.mxu0 0.0
  %3978 = vmatprep.subr.mxu0 0.0
  %3979 = vmatpush1.msra.mxu0 0.0
  %3980 = vmatprep.subr.mxu0 0.0
  %3981 = vmatpush1.msra.mxu0 0.0
  %3982 = vmatprep.subr.mxu0 0.0
  %3983 = vmatpush1.msra.mxu0 0.0
  %3984 = vmatprep.subr.mxu0 0.0
  %3985 = vmatpush1.msra.mxu0 0.0
  %3986 = vmatprep.subr.mxu0 0.0
  %3987 = vmatpush1.msra.mxu0 0.0
  %3988 = vmatprep.subr.mxu0 0.0
  %3989 = vmatpush1.msra.mxu0 0.0
  %3990 = vmatprep.subr.mxu0 0.0
  %3991 = vmatpush1.msra.mxu0 0.0
  %3992 = vmatprep.subr.mxu0 0.0
  %3993 = vmatpush1.msra.mxu0 0.0
  %3994 = vmatprep.subr.mxu0 0.0
  %3995 = vmatpush1.msra.mxu0 0.0
  %3996 = vmatprep.subr.mxu0 0.0
  %3997 = vmatpush1.msra.mxu0 0.0
  %3998 = vmatprep.subr.mxu0 0.0
  %3999 = vmatpush1.msra.mxu0 0.0
  %4000 = vmatprep.mubr.f32.mxu0 0.0
  %4001 = vmatmul.mubr.f32.gmra.mrb[0].mxu0 %v3913
  %v4002 = vpop.f32.mrb[0].mxu0
  %v4003 = vadd.f32 0.0, %v4002
  %v4004 = vpop.f32.mrb[0].mxu0
  %4005 = vmatprep.mubr.f32.mxu0 0.0
  %4006 = vmatmul.mubr.f32.gmra.mrb[0].mxu0 %v3916
  %v4007 = vpop.f32.mrb[0].mxu0
  %v4008 = vadd.f32 0.0, %v4007
  %v4009 = vpop.f32.mrb[0].mxu0
  %4010 = vmatprep.mubr.f32.mxu0 0.0
  %4011 = vmatmul.mubr.f32.gmra.mrb[0].mxu0 %v3919
  %v4012 = vpop.f32.mrb[0].mxu0
  %v4013 = vadd.f32 0.0, %v4012
  %v4014 = vpop.f32.mrb[0].mxu0
  %4015 = vmatprep.mubr.f32.mxu0 0.0
  %4016 = vmatmul.mubr.f32.gmra.mrb[0].mxu0 %v3922
  %v4017 = vpop.f32.mrb[0].mxu0
  %v4018 = vadd.f32 0.0, %v4017
  %v4019 = vpop.f32.mrb[0].mxu0
  %4020 = vmatprep.mubr.f32.mxu0 0.0
  %4021 = vmatmul.mubr.f32.gmra.mrb[0].mxu0 %v3925
  %v4022 = vpop.f32.mrb[0].mxu0
  %v4023 = vadd.f32 0.0, %v4022
  %v4024 = vpop.f32.mrb[0].mxu0
  %4025 = vmatprep.mubr.f32.mxu0 0.0
  %4026 = vmatmul.mubr.f32.gmra.mrb[0].mxu0 %v3928
  %v4027 = vpop.f32.mrb[0].mxu0
  %v4028 = vadd.f32 0.0, %v4027
  %v4029 = vpop.f32.mrb[0].mxu0
  %4030 = vmatprep.mubr.f32.mxu0 0.0
  %4031 = vmatmul.mubr.f32.gmra.mrb[0].mxu0 %v3931
  %v4032 = vpop.f32.mrb[0].mxu0
  %v4033 = vadd.f32 0.0, %v4032
  %v4034 = vpop.f32.mrb[0].mxu0
  %4035 = vmatprep.mubr.f32.mxu0 0.0
  %4036 = vmatmul.mubr.f32.gmra.mrb[0].mxu0 %v3934
  %v4037 = vpop.f32.mrb[0].mxu0
  %v4038 = vadd.f32 0.0, %v4037
  %v4039 = vpop.f32.mrb[0].mxu0
  %4040 = vdwg.mxu0
  %s4041 = scalar_lea.vmem %s6, 960
  %v4042 = vld [vmem:[%s4041] sm:$0xff]
  %v4043 = vld [vmem:[%s4041 + $0x8] sm:$0xff]
  %v4044 = vld [vmem:[%s4041 + $0x10] sm:$0xff]
  %v4045 = vld [vmem:[%s4041 + $0x18] sm:$0xff]
  %v4046 = vld [vmem:[%s4041 + $0x20] sm:$0xff]
  %v4047 = vld [vmem:[%s4041 + $0x28] sm:$0xff]
  %v4048 = vld [vmem:[%s4041 + $0x30] sm:$0xff]
  %v4049 = vld [vmem:[%s4041 + $0x38] sm:$0xff]
  %v4050 = vld [vmem:[%s4041 + $0x40] sm:$0xff]
  %v4051 = vld [vmem:[%s4041 + $0x48] sm:$0xff]
  %v4052 = vld [vmem:[%s4041 + $0x50] sm:$0xff]
  %v4053 = vld [vmem:[%s4041 + $0x58] sm:$0xff]
  %v4054 = vld [vmem:[%s4041 + $0x60] sm:$0xff]
  %v4055 = vld [vmem:[%s4041 + $0x68] sm:$0xff]
  %v4056 = vld [vmem:[%s4041 + $0x70] sm:$0xff]
  %v4057 = vld [vmem:[%s4041 + $0x78] sm:$0xff]
  %v4058 = vld [vmem:[%s4041 + $0x80] sm:$0xff]
  %v4059 = vld [vmem:[%s4041 + $0x88] sm:$0xff]
  %v4060 = vld [vmem:[%s4041 + $0x90] sm:$0xff]
  %v4061 = vld [vmem:[%s4041 + $0x98] sm:$0xff]
  %v4062 = vld [vmem:[%s4041 + $0xa0] sm:$0xff]
  %v4063 = vld [vmem:[%s4041 + $0xa8] sm:$0xff]
  %v4064 = vld [vmem:[%s4041 + $0xb0] sm:$0xff]
  %v4065 = vld [vmem:[%s4041 + $0xb8] sm:$0xff]
  %v4066 = vld [vmem:[%s4041 + $0xc0] sm:$0xff]
  %v4067 = vld [vmem:[%s4041 + $0xc8] sm:$0xff]
  %v4068 = vld [vmem:[%s4041 + $0xd0] sm:$0xff]
  %v4069 = vld [vmem:[%s4041 + $0xd8] sm:$0xff]
  %v4070 = vld [vmem:[%s4041 + $0xe0] sm:$0xff]
  %v4071 = vld [vmem:[%s4041 + $0xe8] sm:$0xff]
  %v4073 = vsel %vm2984, %v4003, 0
  %v4076 = vsel %vm2984, %v4008, 0
  %v4079 = vsel %vm2984, %v4013, 0
  %v4082 = vsel %vm2984, %v4018, 0
  %v4085 = vsel %vm2984, %v4023, 0
  %v4088 = vsel %vm2984, %v4028, 0
  %v4091 = vsel %vm2984, %v4033, 0
  %v4094 = vsel %vm2984, %v4038, 0
  %4096 = vmatprep.subr.mxu0 %v4043
  %4097 = vmatpush1.msra.mxu0 %v4042
  %4098 = vmatprep.subr.mxu0 %v4045
  %4099 = vmatpush1.msra.mxu0 %v4044
  %4100 = vmatprep.subr.mxu0 %v4047
  %4101 = vmatpush1.msra.mxu0 %v4046
  %4102 = vmatprep.subr.mxu0 %v4049
  %4103 = vmatpush1.msra.mxu0 %v4048
  %4104 = vmatprep.subr.mxu0 %v4051
  %4105 = vmatpush1.msra.mxu0 %v4050
  %4106 = vmatprep.subr.mxu0 %v4053
  %4107 = vmatpush1.msra.mxu0 %v4052
  %4108 = vmatprep.subr.mxu0 %v4055
  %4109 = vmatpush1.msra.mxu0 %v4054
  %4110 = vmatprep.subr.mxu0 %v4057
  %4111 = vmatpush1.msra.mxu0 %v4056
  %4112 = vmatprep.subr.mxu0 %v4059
  %4113 = vmatpush1.msra.mxu0 %v4058
  %4114 = vmatprep.subr.mxu0 %v4061
  %4115 = vmatpush1.msra.mxu0 %v4060
  %4116 = vmatprep.subr.mxu0 %v4063
  %4117 = vmatpush1.msra.mxu0 %v4062
  %4118 = vmatprep.subr.mxu0 %v4065
  %4119 = vmatpush1.msra.mxu0 %v4064
  %4120 = vmatprep.subr.mxu0 %v4067
  %4121 = vmatpush1.msra.mxu0 %v4066
  %4122 = vmatprep.subr.mxu0 %v4069
  %4123 = vmatpush1.msra.mxu0 %v4068
  %4124 = vmatprep.subr.mxu0 %v4071
  %4125 = vmatpush1.msra.mxu0 %v4070
  %4126 = vmatprep.subr.mxu0 0.0
  %4127 = vmatpush1.msra.mxu0 0.0
  %4128 = vmatprep.subr.mxu0 0.0
  %4129 = vmatpush1.msra.mxu0 0.0
  %4130 = vmatprep.subr.mxu0 0.0
  %4131 = vmatpush1.msra.mxu0 0.0
  %4132 = vmatprep.subr.mxu0 0.0
  %4133 = vmatpush1.msra.mxu0 0.0
  %4134 = vmatprep.subr.mxu0 0.0
  %4135 = vmatpush1.msra.mxu0 0.0
  %4136 = vmatprep.subr.mxu0 0.0
  %4137 = vmatpush1.msra.mxu0 0.0
  %4138 = vmatprep.subr.mxu0 0.0
  %4139 = vmatpush1.msra.mxu0 0.0
  %4140 = vmatprep.subr.mxu0 0.0
  %4141 = vmatpush1.msra.mxu0 0.0
  %4142 = vmatprep.subr.mxu0 0.0
  %4143 = vmatpush1.msra.mxu0 0.0
  %4144 = vmatprep.subr.mxu0 0.0
  %4145 = vmatpush1.msra.mxu0 0.0
  %4146 = vmatprep.subr.mxu0 0.0
  %4147 = vmatpush1.msra.mxu0 0.0
  %4148 = vmatprep.subr.mxu0 0.0
  %4149 = vmatpush1.msra.mxu0 0.0
  %4150 = vmatprep.subr.mxu0 0.0
  %4151 = vmatpush1.msra.mxu0 0.0
  %4152 = vmatprep.subr.mxu0 0.0
  %4153 = vmatpush1.msra.mxu0 0.0
  %4154 = vmatprep.subr.mxu0 0.0
  %4155 = vmatpush1.msra.mxu0 0.0
  %4156 = vmatprep.subr.mxu0 0.0
  %4157 = vmatpush1.msra.mxu0 0.0
  %4158 = vmatprep.subr.mxu0 0.0
  %4159 = vmatpush1.msra.mxu0 0.0
  %4160 = vmatprep.mubr.f32.mxu0 0.0
  %4161 = vmatmul.mubr.f32.gmra.mrb[0].mxu0 %v4073
  %v4162 = vpop.f32.mrb[0].mxu0
  %v4163 = vadd.f32 0.0, %v4162
  %v4164 = vpop.f32.mrb[0].mxu0
  %v4165 = vadd.f32 0.0, %v4164
  %4166 = vmatprep.mubr.f32.mxu0 0.0
  %4167 = vmatmul.mubr.f32.gmra.mrb[0].mxu0 %v4076
  %v4168 = vpop.f32.mrb[0].mxu0
  %v4169 = vadd.f32 0.0, %v4168
  %v4170 = vpop.f32.mrb[0].mxu0
  %v4171 = vadd.f32 0.0, %v4170
  %4172 = vmatprep.mubr.f32.mxu0 0.0
  %4173 = vmatmul.mubr.f32.gmra.mrb[0].mxu0 %v4079
  %v4174 = vpop.f32.mrb[0].mxu0
  %v4175 = vadd.f32 0.0, %v4174
  %v4176 = vpop.f32.mrb[0].mxu0
  %v4177 = vadd.f32 0.0, %v4176
  %4178 = vmatprep.mubr.f32.mxu0 0.0
  %4179 = vmatmul.mubr.f32.gmra.mrb[0].mxu0 %v4082
  %v4180 = vpop.f32.mrb[0].mxu0
  %v4181 = vadd.f32 0.0, %v4180
  %v4182 = vpop.f32.mrb[0].mxu0
  %v4183 = vadd.f32 0.0, %v4182
  %4184 = vmatprep.mubr.f32.mxu0 0.0
  %4185 = vmatmul.mubr.f32.gmra.mrb[0].mxu0 %v4085
  %v4186 = vpop.f32.mrb[0].mxu0
  %v4187 = vadd.f32 0.0, %v4186
  %v4188 = vpop.f32.mrb[0].mxu0
  %v4189 = vadd.f32 0.0, %v4188
  %4190 = vmatprep.mubr.f32.mxu0 0.0
  %4191 = vmatmul.mubr.f32.gmra.mrb[0].mxu0 %v4088
  %v4192 = vpop.f32.mrb[0].mxu0
  %v4193 = vadd.f32 0.0, %v4192
  %v4194 = vpop.f32.mrb[0].mxu0
  %v4195 = vadd.f32 0.0, %v4194
  %4196 = vmatprep.mubr.f32.mxu0 0.0
  %4197 = vmatmul.mubr.f32.gmra.mrb[0].mxu0 %v4091
  %v4198 = vpop.f32.mrb[0].mxu0
  %v4199 = vadd.f32 0.0, %v4198
  %v4200 = vpop.f32.mrb[0].mxu0
  %v4201 = vadd.f32 0.0, %v4200
  %4202 = vmatprep.mubr.f32.mxu0 0.0
  %4203 = vmatmul.mubr.f32.gmra.mrb[0].mxu0 %v4094
  %v4204 = vpop.f32.mrb[0].mxu0
  %v4205 = vadd.f32 0.0, %v4204
  %v4206 = vpop.f32.mrb[0].mxu0
  %v4207 = vadd.f32 0.0, %v4206
  %4208 = vdwg.mxu0
  %v4209 = vadd.f32 %v3887, %v4163
  %v4210 = vadd.f32 %v3888, %v4165
  %v4211 = vadd.f32 %v3889, %v4169
  %v4212 = vadd.f32 %v3890, %v4171
  %v4213 = vadd.f32 %v3891, %v4175
  %v4214 = vadd.f32 %v3892, %v4177
  %v4215 = vadd.f32 %v3893, %v4181
  %v4216 = vadd.f32 %v3894, %v4183
  %v4217 = vadd.f32 %v3895, %v4187
  %v4218 = vadd.f32 %v3896, %v4189
  %v4219 = vadd.f32 %v3897, %v4193
  %v4220 = vadd.f32 %v3898, %v4195
  %v4221 = vadd.f32 %v3899, %v4199
  %v4222 = vadd.f32 %v3900, %v4201
  %v4223 = vadd.f32 %v3901, %v4205
  %v4224 = vadd.f32 %v3902, %v4207
  %v4225 = vld [vmem:[%s7] sm:$0x3]
  %v4227 = vlaneseq
  %v4228 = vshrl.u32 %v4227, 7
  %v4229 = vsub.s32 0, %v4228
  %v4230 = vrot.slane %v4225, %v4229
  %v4231 = vlaneseq
  %v4232 = vshrl.u32 %v4231, 7
  %v4233 = vsub.s32 1, %v4232
  %v4234 = vrot.slane %v4225, %v4233
  %v4237 = vadd.f32 %v4209, %v4230
  %v4238 = vadd.f32 %v4210, %v4234
  %v4239 = vadd.f32 %v4211, %v4230
  %v4240 = vadd.f32 %v4212, %v4234
  %v4241 = vadd.f32 %v4213, %v4230
  %v4242 = vadd.f32 %v4214, %v4234
  %v4243 = vadd.f32 %v4215, %v4230
  %v4244 = vadd.f32 %v4216, %v4234
  %v4245 = vadd.f32 %v4217, %v4230
  %v4246 = vadd.f32 %v4218, %v4234
  %v4247 = vadd.f32 %v4219, %v4230
  %v4248 = vadd.f32 %v4220, %v4234
  %v4249 = vadd.f32 %v4221, %v4230
  %v4250 = vadd.f32 %v4222, %v4234
  %v4251 = vadd.f32 %v4223, %v4230
  %v4252 = vadd.f32 %v4224, %v4234
  %v4253 = vld [vmem:[%s8] sm:$0xff]
  %v4254 = vld [vmem:[%s8 + $0x8] sm:$0xff]
  %v4255 = vld [vmem:[%s8 + $0x10] sm:$0xff]
  %v4256 = vld [vmem:[%s8 + $0x18] sm:$0xff]
  %v4258 = vsel %vm1879, %v4253, 0
  %v4261 = vsel %vm1879, %v4254, 0
  %v4264 = vsel %vm1879, %v4255, 0
  %v4267 = vsel %vm1879, %v4256, 0
  %4269 = vmatprep.subr.mxu0 %v4238
  %4270 = vmatpush1.msra.mxu0 %v4237
  %4271 = vmatprep.subr.mxu0 %v4240
  %4272 = vmatpush1.msra.mxu0 %v4239
  %4273 = vmatprep.subr.mxu0 %v4242
  %4274 = vmatpush1.msra.mxu0 %v4241
  %4275 = vmatprep.subr.mxu0 %v4244
  %4276 = vmatpush1.msra.mxu0 %v4243
  %4277 = vmatprep.subr.mxu0 %v4246
  %4278 = vmatpush1.msra.mxu0 %v4245
  %4279 = vmatprep.subr.mxu0 %v4248
  %4280 = vmatpush1.msra.mxu0 %v4247
  %4281 = vmatprep.subr.mxu0 %v4250
  %4282 = vmatpush1.msra.mxu0 %v4249
  %4283 = vmatprep.subr.mxu0 %v4252
  %4284 = vmatpush1.msra.mxu0 %v4251
  %4285 = vmatprep.subr.mxu0 0.0
  %4286 = vmatpush1.msra.mxu0 0.0
  %4287 = vmatprep.subr.mxu0 0.0
  %4288 = vmatpush1.msra.mxu0 0.0
  %4289 = vmatprep.subr.mxu0 0.0
  %4290 = vmatpush1.msra.mxu0 0.0
  %4291 = vmatprep.subr.mxu0 0.0
  %4292 = vmatpush1.msra.mxu0 0.0
  %4293 = vmatprep.subr.mxu0 0.0
  %4294 = vmatpush1.msra.mxu0 0.0
  %4295 = vmatprep.subr.mxu0 0.0
  %4296 = vmatpush1.msra.mxu0 0.0
  %4297 = vmatprep.subr.mxu0 0.0
  %4298 = vmatpush1.msra.mxu0 0.0
  %4299 = vmatprep.subr.mxu0 0.0
  %4300 = vmatpush1.msra.mxu0 0.0
  %4301 = vmatprep.subr.mxu0 0.0
  %4302 = vmatpush1.msra.mxu0 0.0
  %4303 = vmatprep.subr.mxu0 0.0
  %4304 = vmatpush1.msra.mxu0 0.0
  %4305 = vmatprep.subr.mxu0 0.0
  %4306 = vmatpush1.msra.mxu0 0.0
  %4307 = vmatprep.subr.mxu0 0.0
  %4308 = vmatpush1.msra.mxu0 0.0
  %4309 = vmatprep.subr.mxu0 0.0
  %4310 = vmatpush1.msra.mxu0 0.0
  %4311 = vmatprep.subr.mxu0 0.0
  %4312 = vmatpush1.msra.mxu0 0.0
  %4313 = vmatprep.subr.mxu0 0.0
  %4314 = vmatpush1.msra.mxu0 0.0
  %4315 = vmatprep.subr.mxu0 0.0
  %4316 = vmatpush1.msra.mxu0 0.0
  %4317 = vmatprep.subr.mxu0 0.0
  %4318 = vmatpush1.msra.mxu0 0.0
  %4319 = vmatprep.subr.mxu0 0.0
  %4320 = vmatpush1.msra.mxu0 0.0
  %4321 = vmatprep.subr.mxu0 0.0
  %4322 = vmatpush1.msra.mxu0 0.0
  %4323 = vmatprep.subr.mxu0 0.0
  %4324 = vmatpush1.msra.mxu0 0.0
  %4325 = vmatprep.subr.mxu0 0.0
  %4326 = vmatpush1.msra.mxu0 0.0
  %4327 = vmatprep.subr.mxu0 0.0
  %4328 = vmatpush1.msra.mxu0 0.0
  %4329 = vmatprep.subr.mxu0 0.0
  %4330 = vmatpush1.msra.mxu0 0.0
  %4331 = vmatprep.subr.mxu0 0.0
  %4332 = vmatpush1.msra.mxu0 0.0
  %4333 = vmatprep.mubr.f32.mxu0 0.0
  %4334 = vmatmul.mubr.f32.gmra.mrb[0].mxu0 %v4258
  %v4335 = vpop.f32.mrb[0].mxu0
  %v4336 = vadd.f32 0.0, %v4335
  %v4337 = vpop.f32.mrb[0].mxu0
  %v4338 = vadd.f32 0.0, %v4337
  %4339 = vmatprep.mubr.f32.mxu0 0.0
  %4340 = vmatmul.mubr.f32.gmra.mrb[0].mxu0 %v4261
  %v4341 = vpop.f32.mrb[0].mxu0
  %v4342 = vadd.f32 0.0, %v4341
  %v4343 = vpop.f32.mrb[0].mxu0
  %v4344 = vadd.f32 0.0, %v4343
  %4345 = vmatprep.mubr.f32.mxu0 0.0
  %4346 = vmatmul.mubr.f32.gmra.mrb[0].mxu0 %v4264
  %v4347 = vpop.f32.mrb[0].mxu0
  %v4348 = vadd.f32 0.0, %v4347
  %v4349 = vpop.f32.mrb[0].mxu0
  %v4350 = vadd.f32 0.0, %v4349
  %4351 = vmatprep.mubr.f32.mxu0 0.0
  %4352 = vmatmul.mubr.f32.gmra.mrb[0].mxu0 %v4267
  %v4353 = vpop.f32.mrb[0].mxu0
  %v4354 = vadd.f32 0.0, %v4353
  %v4355 = vpop.f32.mrb[0].mxu0
  %v4356 = vadd.f32 0.0, %v4355
  %4357 = vdwg.mxu0
  %s4358 = scalar_lea.vmem %s8, 32
  %v4359 = vld [vmem:[%s4358] sm:$0xff]
  %v4360 = vld [vmem:[%s4358 + $0x8] sm:$0xff]
  %v4361 = vld [vmem:[%s4358 + $0x10] sm:$0xff]
  %v4362 = vld [vmem:[%s4358 + $0x18] sm:$0xff]
  %v4364 = vsel %vm1879, %v4359, 0
  %v4367 = vsel %vm1879, %v4360, 0
  %v4370 = vsel %vm1879, %v4361, 0
  %v4373 = vsel %vm1879, %v4362, 0
  %4375 = vmatprep.subr.mxu0 %v4238
  %4376 = vmatpush1.msra.mxu0 %v4237
  %4377 = vmatprep.subr.mxu0 %v4240
  %4378 = vmatpush1.msra.mxu0 %v4239
  %4379 = vmatprep.subr.mxu0 %v4242
  %4380 = vmatpush1.msra.mxu0 %v4241
  %4381 = vmatprep.subr.mxu0 %v4244
  %4382 = vmatpush1.msra.mxu0 %v4243
  %4383 = vmatprep.subr.mxu0 %v4246
  %4384 = vmatpush1.msra.mxu0 %v4245
  %4385 = vmatprep.subr.mxu0 %v4248
  %4386 = vmatpush1.msra.mxu0 %v4247
  %4387 = vmatprep.subr.mxu0 %v4250
  %4388 = vmatpush1.msra.mxu0 %v4249
  %4389 = vmatprep.subr.mxu0 %v4252
  %4390 = vmatpush1.msra.mxu0 %v4251
  %4391 = vmatprep.subr.mxu0 0.0
  %4392 = vmatpush1.msra.mxu0 0.0
  %4393 = vmatprep.subr.mxu0 0.0
  %4394 = vmatpush1.msra.mxu0 0.0
  %4395 = vmatprep.subr.mxu0 0.0
  %4396 = vmatpush1.msra.mxu0 0.0
  %4397 = vmatprep.subr.mxu0 0.0
  %4398 = vmatpush1.msra.mxu0 0.0
  %4399 = vmatprep.subr.mxu0 0.0
  %4400 = vmatpush1.msra.mxu0 0.0
  %4401 = vmatprep.subr.mxu0 0.0
  %4402 = vmatpush1.msra.mxu0 0.0
  %4403 = vmatprep.subr.mxu0 0.0
  %4404 = vmatpush1.msra.mxu0 0.0
  %4405 = vmatprep.subr.mxu0 0.0
  %4406 = vmatpush1.msra.mxu0 0.0
  %4407 = vmatprep.subr.mxu0 0.0
  %4408 = vmatpush1.msra.mxu0 0.0
  %4409 = vmatprep.subr.mxu0 0.0
  %4410 = vmatpush1.msra.mxu0 0.0
  %4411 = vmatprep.subr.mxu0 0.0
  %4412 = vmatpush1.msra.mxu0 0.0
  %4413 = vmatprep.subr.mxu0 0.0
  %4414 = vmatpush1.msra.mxu0 0.0
  %4415 = vmatprep.subr.mxu0 0.0
  %4416 = vmatpush1.msra.mxu0 0.0
  %4417 = vmatprep.subr.mxu0 0.0
  %4418 = vmatpush1.msra.mxu0 0.0
  %4419 = vmatprep.subr.mxu0 0.0
  %4420 = vmatpush1.msra.mxu0 0.0
  %4421 = vmatprep.subr.mxu0 0.0
  %4422 = vmatpush1.msra.mxu0 0.0
  %4423 = vmatprep.subr.mxu0 0.0
  %4424 = vmatpush1.msra.mxu0 0.0
  %4425 = vmatprep.subr.mxu0 0.0
  %4426 = vmatpush1.msra.mxu0 0.0
  %4427 = vmatprep.subr.mxu0 0.0
  %4428 = vmatpush1.msra.mxu0 0.0
  %4429 = vmatprep.subr.mxu0 0.0
  %4430 = vmatpush1.msra.mxu0 0.0
  %4431 = vmatprep.subr.mxu0 0.0
  %4432 = vmatpush1.msra.mxu0 0.0
  %4433 = vmatprep.subr.mxu0 0.0
  %4434 = vmatpush1.msra.mxu0 0.0
  %4435 = vmatprep.subr.mxu0 0.0
  %4436 = vmatpush1.msra.mxu0 0.0
  %4437 = vmatprep.subr.mxu0 0.0
  %4438 = vmatpush1.msra.mxu0 0.0
  %4439 = vmatprep.mubr.f32.mxu0 0.0
  %4440 = vmatmul.mubr.f32.gmra.mrb[0].mxu0 %v4364
  %v4441 = vpop.f32.mrb[0].mxu0
  %v4442 = vadd.f32 0.0, %v4441
  %v4443 = vpop.f32.mrb[0].mxu0
  %v4444 = vadd.f32 0.0, %v4443
  %4445 = vmatprep.mubr.f32.mxu0 0.0
  %4446 = vmatmul.mubr.f32.gmra.mrb[0].mxu0 %v4367
  %v4447 = vpop.f32.mrb[0].mxu0
  %v4448 = vadd.f32 0.0, %v4447
  %v4449 = vpop.f32.mrb[0].mxu0
  %v4450 = vadd.f32 0.0, %v4449
  %4451 = vmatprep.mubr.f32.mxu0 0.0
  %4452 = vmatmul.mubr.f32.gmra.mrb[0].mxu0 %v4370
  %v4453 = vpop.f32.mrb[0].mxu0
  %v4454 = vadd.f32 0.0, %v4453
  %v4455 = vpop.f32.mrb[0].mxu0
  %v4456 = vadd.f32 0.0, %v4455
  %4457 = vmatprep.mubr.f32.mxu0 0.0
  %4458 = vmatmul.mubr.f32.gmra.mrb[0].mxu0 %v4373
  %v4459 = vpop.f32.mrb[0].mxu0
  %v4460 = vadd.f32 0.0, %v4459
  %v4461 = vpop.f32.mrb[0].mxu0
  %v4462 = vadd.f32 0.0, %v4461
  %4463 = vdwg.mxu0
  %v4464 = vmax.f32 %v4336, %v4442
  %v4465 = vmax.f32 %v4338, %v4444
  %v4466 = vmax.f32 %v4342, %v4448
  %v4467 = vmax.f32 %v4344, %v4450
  %v4468 = vmax.f32 %v4348, %v4454
  %v4469 = vmax.f32 %v4350, %v4456
  %v4470 = vmax.f32 %v4354, %v4460
  %v4471 = vmax.f32 %v4356, %v4462
  %v4472 = vld [vmem:[%s9] sm:$0xff]
  %v4473 = vld [vmem:[%s9 + $0x8] sm:$0xff]
  %v4474 = vld [vmem:[%s9 + $0x10] sm:$0xff]
  %v4475 = vld [vmem:[%s9 + $0x18] sm:$0xff]
  %v4476 = vld [vmem:[%s9 + $0x20] sm:$0xff]
  %v4477 = vld [vmem:[%s9 + $0x28] sm:$0xff]
  %v4478 = vld [vmem:[%s9 + $0x30] sm:$0xff]
  %v4479 = vld [vmem:[%s9 + $0x38] sm:$0xff]
  %v4480 = vld [vmem:[%s9 + $0x40] sm:$0xff]
  %v4481 = vld [vmem:[%s9 + $0x48] sm:$0xff]
  %v4482 = vld [vmem:[%s9 + $0x50] sm:$0xff]
  %v4483 = vld [vmem:[%s9 + $0x58] sm:$0xff]
  %v4484 = vld [vmem:[%s9 + $0x60] sm:$0xff]
  %v4485 = vld [vmem:[%s9 + $0x68] sm:$0xff]
  %v4486 = vld [vmem:[%s9 + $0x70] sm:$0xff]
  %v4487 = vld [vmem:[%s9 + $0x78] sm:$0xff]
  %v4488 = vld [vmem:[%s9 + $0x80] sm:$0xff]
  %v4489 = vld [vmem:[%s9 + $0x88] sm:$0xff]
  %v4490 = vld [vmem:[%s9 + $0x90] sm:$0xff]
  %v4491 = vld [vmem:[%s9 + $0x98] sm:$0xff]
  %vm4492 = vcmask 261120
  %v4494 = vsel %vm4492, %v4465, 0
  %v4497 = vsel %vm4492, %v4467, 0
  %v4500 = vsel %vm4492, %v4469, 0
  %v4503 = vsel %vm4492, %v4471, 0
  %4505 = vmatprep.subr.mxu0 0.0
  %4506 = vmatpush1.msra.mxu0 %v4472
  %4507 = vmatprep.subr.mxu0 0.0
  %4508 = vmatpush1.msra.mxu0 %v4473
  %4509 = vmatprep.subr.mxu0 0.0
  %4510 = vmatpush1.msra.mxu0 %v4474
  %4511 = vmatprep.subr.mxu0 0.0
  %4512 = vmatpush1.msra.mxu0 %v4475
  %4513 = vmatprep.subr.mxu0 0.0
  %4514 = vmatpush1.msra.mxu0 %v4476
  %4515 = vmatprep.subr.mxu0 0.0
  %4516 = vmatpush1.msra.mxu0 %v4477
  %4517 = vmatprep.subr.mxu0 0.0
  %4518 = vmatpush1.msra.mxu0 %v4478
  %4519 = vmatprep.subr.mxu0 0.0
  %4520 = vmatpush1.msra.mxu0 %v4479
  %4521 = vmatprep.subr.mxu0 0.0
  %4522 = vmatpush1.msra.mxu0 %v4480
  %4523 = vmatprep.subr.mxu0 0.0
  %4524 = vmatpush1.msra.mxu0 %v4481
  %4525 = vmatprep.subr.mxu0 0.0
  %4526 = vmatpush1.msra.mxu0 %v4482
  %4527 = vmatprep.subr.mxu0 0.0
  %4528 = vmatpush1.msra.mxu0 %v4483
  %4529 = vmatprep.subr.mxu0 0.0
  %4530 = vmatpush1.msra.mxu0 %v4484
  %4531 = vmatprep.subr.mxu0 0.0
  %4532 = vmatpush1.msra.mxu0 %v4485
  %4533 = vmatprep.subr.mxu0 0.0
  %4534 = vmatpush1.msra.mxu0 %v4486
  %4535 = vmatprep.subr.mxu0 0.0
  %4536 = vmatpush1.msra.mxu0 %v4487
  %4537 = vmatprep.subr.mxu0 0.0
  %4538 = vmatpush1.msra.mxu0 %v4488
  %4539 = vmatprep.subr.mxu0 0.0
  %4540 = vmatpush1.msra.mxu0 %v4489
  %4541 = vmatprep.subr.mxu0 0.0
  %4542 = vmatpush1.msra.mxu0 %v4490
  %4543 = vmatprep.subr.mxu0 0.0
  %4544 = vmatpush1.msra.mxu0 %v4491
  %4545 = vmatprep.subr.mxu0 0.0
  %4546 = vmatpush1.msra.mxu0 0.0
  %4547 = vmatprep.subr.mxu0 0.0
  %4548 = vmatpush1.msra.mxu0 0.0
  %4549 = vmatprep.subr.mxu0 0.0
  %4550 = vmatpush1.msra.mxu0 0.0
  %4551 = vmatprep.subr.mxu0 0.0
  %4552 = vmatpush1.msra.mxu0 0.0
  %4553 = vmatprep.subr.mxu0 0.0
  %4554 = vmatpush1.msra.mxu0 0.0
  %4555 = vmatprep.subr.mxu0 0.0
  %4556 = vmatpush1.msra.mxu0 0.0
  %4557 = vmatprep.subr.mxu0 0.0
  %4558 = vmatpush1.msra.mxu0 0.0
  %4559 = vmatprep.subr.mxu0 0.0
  %4560 = vmatpush1.msra.mxu0 0.0
  %4561 = vmatprep.subr.mxu0 0.0
  %4562 = vmatpush1.msra.mxu0 0.0
  %4563 = vmatprep.subr.mxu0 0.0
  %4564 = vmatpush1.msra.mxu0 0.0
  %4565 = vmatprep.subr.mxu0 0.0
  %4566 = vmatpush1.msra.mxu0 0.0
  %4567 = vmatprep.subr.mxu0 0.0
  %4568 = vmatpush1.msra.mxu0 0.0
  %4569 = vmatprep.mubr.f32.mxu0 %v4494
  %4570 = vmatmul.mubr.f32.gmra.mrb[0].mxu0 %v4464
  %v4571 = vpop.f32.mrb[0].mxu0
  %v4572 = vadd.f32 0.0, %v4571
  %v4573 = vpop.f32.mrb[0].mxu0
  %4574 = vmatprep.mubr.f32.mxu0 %v4497
  %4575 = vmatmul.mubr.f32.gmra.mrb[0].mxu0 %v4466
  %v4576 = vpop.f32.mrb[0].mxu0
  %v4577 = vadd.f32 0.0, %v4576
  %v4578 = vpop.f32.mrb[0].mxu0
  %4579 = vmatprep.mubr.f32.mxu0 %v4500
  %4580 = vmatmul.mubr.f32.gmra.mrb[0].mxu0 %v4468
  %v4581 = vpop.f32.mrb[0].mxu0
  %v4582 = vadd.f32 0.0, %v4581
  %v4583 = vpop.f32.mrb[0].mxu0
  %4584 = vmatprep.mubr.f32.mxu0 %v4503
  %4585 = vmatmul.mubr.f32.gmra.mrb[0].mxu0 %v4470
  %v4586 = vpop.f32.mrb[0].mxu0
  %v4587 = vadd.f32 0.0, %v4586
  %v4588 = vpop.f32.mrb[0].mxu0
  %4589 = vdwg.mxu0
  %s4590 = scalar_lea.vmem %s9, 160
  %v4591 = vld [vmem:[%s4590] sm:$0xff]
  %v4592 = vld [vmem:[%s4590 + $0x8] sm:$0xff]
  %v4593 = vld [vmem:[%s4590 + $0x10] sm:$0xff]
  %v4594 = vld [vmem:[%s4590 + $0x18] sm:$0xff]
  %v4595 = vld [vmem:[%s4590 + $0x20] sm:$0xff]
  %v4596 = vld [vmem:[%s4590 + $0x28] sm:$0xff]
  %v4597 = vld [vmem:[%s4590 + $0x30] sm:$0xff]
  %v4598 = vld [vmem:[%s4590 + $0x38] sm:$0xff]
  %v4599 = vld [vmem:[%s4590 + $0x40] sm:$0xff]
  %v4600 = vld [vmem:[%s4590 + $0x48] sm:$0xff]
  %v4601 = vld [vmem:[%s4590 + $0x50] sm:$0xff]
  %v4602 = vld [vmem:[%s4590 + $0x58] sm:$0xff]
  %v4603 = vld [vmem:[%s4590 + $0x60] sm:$0xff]
  %v4604 = vld [vmem:[%s4590 + $0x68] sm:$0xff]
  %v4605 = vld [vmem:[%s4590 + $0x70] sm:$0xff]
  %v4606 = vld [vmem:[%s4590 + $0x78] sm:$0xff]
  %v4607 = vld [vmem:[%s4590 + $0x80] sm:$0xff]
  %v4608 = vld [vmem:[%s4590 + $0x88] sm:$0xff]
  %v4609 = vld [vmem:[%s4590 + $0x90] sm:$0xff]
  %v4610 = vld [vmem:[%s4590 + $0x98] sm:$0xff]
  %4611 = vmatprep.subr.mxu0 0.0
  %4612 = vmatpush1.msra.mxu0 %v4591
  %4613 = vmatprep.subr.mxu0 0.0
  %4614 = vmatpush1.msra.mxu0 %v4592
  %4615 = vmatprep.subr.mxu0 0.0
  %4616 = vmatpush1.msra.mxu0 %v4593
  %4617 = vmatprep.subr.mxu0 0.0
  %4618 = vmatpush1.msra.mxu0 %v4594
  %4619 = vmatprep.subr.mxu0 0.0
  %4620 = vmatpush1.msra.mxu0 %v4595
  %4621 = vmatprep.subr.mxu0 0.0
  %4622 = vmatpush1.msra.mxu0 %v4596
  %4623 = vmatprep.subr.mxu0 0.0
  %4624 = vmatpush1.msra.mxu0 %v4597
  %4625 = vmatprep.subr.mxu0 0.0
  %4626 = vmatpush1.msra.mxu0 %v4598
  %4627 = vmatprep.subr.mxu0 0.0
  %4628 = vmatpush1.msra.mxu0 %v4599
  %4629 = vmatprep.subr.mxu0 0.0
  %4630 = vmatpush1.msra.mxu0 %v4600
  %4631 = vmatprep.subr.mxu0 0.0
  %4632 = vmatpush1.msra.mxu0 %v4601
  %4633 = vmatprep.subr.mxu0 0.0
  %4634 = vmatpush1.msra.mxu0 %v4602
  %4635 = vmatprep.subr.mxu0 0.0
  %4636 = vmatpush1.msra.mxu0 %v4603
  %4637 = vmatprep.subr.mxu0 0.0
  %4638 = vmatpush1.msra.mxu0 %v4604
  %4639 = vmatprep.subr.mxu0 0.0
  %4640 = vmatpush1.msra.mxu0 %v4605
  %4641 = vmatprep.subr.mxu0 0.0
  %4642 = vmatpush1.msra.mxu0 %v4606
  %4643 = vmatprep.subr.mxu0 0.0
  %4644 = vmatpush1.msra.mxu0 %v4607
  %4645 = vmatprep.subr.mxu0 0.0
  %4646 = vmatpush1.msra.mxu0 %v4608
  %4647 = vmatprep.subr.mxu0 0.0
  %4648 = vmatpush1.msra.mxu0 %v4609
  %4649 = vmatprep.subr.mxu0 0.0
  %4650 = vmatpush1.msra.mxu0 %v4610
  %4651 = vmatprep.subr.mxu0 0.0
  %4652 = vmatpush1.msra.mxu0 0.0
  %4653 = vmatprep.subr.mxu0 0.0
  %4654 = vmatpush1.msra.mxu0 0.0
  %4655 = vmatprep.subr.mxu0 0.0
  %4656 = vmatpush1.msra.mxu0 0.0
  %4657 = vmatprep.subr.mxu0 0.0
  %4658 = vmatpush1.msra.mxu0 0.0
  %4659 = vmatprep.subr.mxu0 0.0
  %4660 = vmatpush1.msra.mxu0 0.0
  %4661 = vmatprep.subr.mxu0 0.0
  %4662 = vmatpush1.msra.mxu0 0.0
  %4663 = vmatprep.subr.mxu0 0.0
  %4664 = vmatpush1.msra.mxu0 0.0
  %4665 = vmatprep.subr.mxu0 0.0
  %4666 = vmatpush1.msra.mxu0 0.0
  %4667 = vmatprep.subr.mxu0 0.0
  %4668 = vmatpush1.msra.mxu0 0.0
  %4669 = vmatprep.subr.mxu0 0.0
  %4670 = vmatpush1.msra.mxu0 0.0
  %4671 = vmatprep.subr.mxu0 0.0
  %4672 = vmatpush1.msra.mxu0 0.0
  %4673 = vmatprep.subr.mxu0 0.0
  %4674 = vmatpush1.msra.mxu0 0.0
  %4675 = vmatprep.mubr.f32.mxu0 %v4494
  %4676 = vmatmul.mubr.f32.gmra.mrb[0].mxu0 %v4464
  %v4677 = vpop.f32.mrb[0].mxu0
  %v4678 = vadd.f32 0.0, %v4677
  %v4679 = vpop.f32.mrb[0].mxu0
  %4680 = vmatprep.mubr.f32.mxu0 %v4497
  %4681 = vmatmul.mubr.f32.gmra.mrb[0].mxu0 %v4466
  %v4682 = vpop.f32.mrb[0].mxu0
  %v4683 = vadd.f32 0.0, %v4682
  %v4684 = vpop.f32.mrb[0].mxu0
  %4685 = vmatprep.mubr.f32.mxu0 %v4500
  %4686 = vmatmul.mubr.f32.gmra.mrb[0].mxu0 %v4468
  %v4687 = vpop.f32.mrb[0].mxu0
  %v4688 = vadd.f32 0.0, %v4687
  %v4689 = vpop.f32.mrb[0].mxu0
  %4690 = vmatprep.mubr.f32.mxu0 %v4503
  %4691 = vmatmul.mubr.f32.gmra.mrb[0].mxu0 %v4470
  %v4692 = vpop.f32.mrb[0].mxu0
  %v4693 = vadd.f32 0.0, %v4692
  %v4694 = vpop.f32.mrb[0].mxu0
  %4695 = vdwg.mxu0
  %v4696 = vmax.f32 %v4572, %v4678
  %v4697 = vmax.f32 %v4577, %v4683
  %v4698 = vmax.f32 %v4582, %v4688
  %v4699 = vmax.f32 %v4587, %v4693
  %v4700 = vmax.f32 %v4696, 0.0
  %v4701 = vmax.f32 %v4697, 0.0
  %v4702 = vmax.f32 %v4698, 0.0
  %v4703 = vmax.f32 %v4699, 0.0
  %v4704 = vld [vmem:[%s10] sm:$0xff]
  %v4706 = vsel %vm4492, %v4704, 0
  %4708 = vmatprep.subr.mxu0 0.0
  %4709 = vmatpush1.msra.mxu0 %v4700
  %4710 = vmatprep.subr.mxu0 0.0
  %4711 = vmatpush1.msra.mxu0 %v4701
  %4712 = vmatprep.subr.mxu0 0.0
  %4713 = vmatpush1.msra.mxu0 %v4702
  %4714 = vmatprep.subr.mxu0 0.0
  %4715 = vmatpush1.msra.mxu0 %v4703
  %4716 = vmatprep.subr.mxu0 0.0
  %4717 = vmatpush1.msra.mxu0 0.0
  %4718 = vmatprep.subr.mxu0 0.0
  %4719 = vmatpush1.msra.mxu0 0.0
  %4720 = vmatprep.subr.mxu0 0.0
  %4721 = vmatpush1.msra.mxu0 0.0
  %4722 = vmatprep.subr.mxu0 0.0
  %4723 = vmatpush1.msra.mxu0 0.0
  %4724 = vmatprep.subr.mxu0 0.0
  %4725 = vmatpush1.msra.mxu0 0.0
  %4726 = vmatprep.subr.mxu0 0.0
  %4727 = vmatpush1.msra.mxu0 0.0
  %4728 = vmatprep.subr.mxu0 0.0
  %4729 = vmatpush1.msra.mxu0 0.0
  %4730 = vmatprep.subr.mxu0 0.0
  %4731 = vmatpush1.msra.mxu0 0.0
  %4732 = vmatprep.subr.mxu0 0.0
  %4733 = vmatpush1.msra.mxu0 0.0
  %4734 = vmatprep.subr.mxu0 0.0
  %4735 = vmatpush1.msra.mxu0 0.0
  %4736 = vmatprep.subr.mxu0 0.0
  %4737 = vmatpush1.msra.mxu0 0.0
  %4738 = vmatprep.subr.mxu0 0.0
  %4739 = vmatpush1.msra.mxu0 0.0
  %4740 = vmatprep.subr.mxu0 0.0
  %4741 = vmatpush1.msra.mxu0 0.0
  %4742 = vmatprep.subr.mxu0 0.0
  %4743 = vmatpush1.msra.mxu0 0.0
  %4744 = vmatprep.subr.mxu0 0.0
  %4745 = vmatpush1.msra.mxu0 0.0
  %4746 = vmatprep.subr.mxu0 0.0
  %4747 = vmatpush1.msra.mxu0 0.0
  %4748 = vmatprep.subr.mxu0 0.0
  %4749 = vmatpush1.msra.mxu0 0.0
  %4750 = vmatprep.subr.mxu0 0.0
  %4751 = vmatpush1.msra.mxu0 0.0
  %4752 = vmatprep.subr.mxu0 0.0
  %4753 = vmatpush1.msra.mxu0 0.0
  %4754 = vmatprep.subr.mxu0 0.0
  %4755 = vmatpush1.msra.mxu0 0.0
  %4756 = vmatprep.subr.mxu0 0.0
  %4757 = vmatpush1.msra.mxu0 0.0
  %4758 = vmatprep.subr.mxu0 0.0
  %4759 = vmatpush1.msra.mxu0 0.0
  %4760 = vmatprep.subr.mxu0 0.0
  %4761 = vmatpush1.msra.mxu0 0.0
  %4762 = vmatprep.subr.mxu0 0.0
  %4763 = vmatpush1.msra.mxu0 0.0
  %4764 = vmatprep.subr.mxu0 0.0
  %4765 = vmatpush1.msra.mxu0 0.0
  %4766 = vmatprep.subr.mxu0 0.0
  %4767 = vmatpush1.msra.mxu0 0.0
  %4768 = vmatprep.subr.mxu0 0.0
  %4769 = vmatpush1.msra.mxu0 0.0
  %4770 = vmatprep.subr.mxu0 0.0
  %4771 = vmatpush1.msra.mxu0 0.0
  %4772 = vmatprep.mubr.f32.mxu0 0.0
  %4773 = vmatmul.mubr.f32.gmra.mrb[0].mxu0 %v4706
  %v4774 = vpop.f32.mrb[0].mxu0
  %v4775 = vadd.f32 0.0, %v4774
  %v4776 = vpop.f32.mrb[0].mxu0
  %4777 = vdwg.mxu0
  %v4778 = vld [vmem:[%s11] sm:$0xff]
  %v4779 = vld [vmem:[%s11 + $0x8] sm:$0xff]
  %v4780 = vld [vmem:[%s11 + $0x10] sm:$0xff]
  %v4781 = vld [vmem:[%s11 + $0x18] sm:$0xff]
  %v4782 = vld [vmem:[%s11 + $0x20] sm:$0xff]
  %v4783 = vld [vmem:[%s11 + $0x28] sm:$0xff]
  %v4784 = vld [vmem:[%s11 + $0x30] sm:$0xff]
  %v4785 = vld [vmem:[%s11 + $0x38] sm:$0xff]
  %v4786 = vld [vmem:[%s11 + $0x40] sm:$0xff]
  %v4787 = vld [vmem:[%s11 + $0x48] sm:$0xff]
  %s4788 = scalar_lea.vmem %s10, 8
  %v4789 = vld [vmem:[%s4788] sm:$0xff]
  %v4791 = vsel %vm4492, %v4789, 0
  %4793 = vmatprep.subr.mxu0 0.0
  %4794 = vmatpush1.msra.mxu0 %v4700
  %4795 = vmatprep.subr.mxu0 0.0
  %4796 = vmatpush1.msra.mxu0 %v4701
  %4797 = vmatprep.subr.mxu0 0.0
  %4798 = vmatpush1.msra.mxu0 %v4702
  %4799 = vmatprep.subr.mxu0 0.0
  %4800 = vmatpush1.msra.mxu0 %v4703
  %4801 = vmatprep.subr.mxu0 0.0
  %4802 = vmatpush1.msra.mxu0 0.0
  %4803 = vmatprep.subr.mxu0 0.0
  %4804 = vmatpush1.msra.mxu0 0.0
  %4805 = vmatprep.subr.mxu0 0.0
  %4806 = vmatpush1.msra.mxu0 0.0
  %4807 = vmatprep.subr.mxu0 0.0
  %4808 = vmatpush1.msra.mxu0 0.0
  %4809 = vmatprep.subr.mxu0 0.0
  %4810 = vmatpush1.msra.mxu0 0.0
  %4811 = vmatprep.subr.mxu0 0.0
  %4812 = vmatpush1.msra.mxu0 0.0
  %4813 = vmatprep.subr.mxu0 0.0
  %4814 = vmatpush1.msra.mxu0 0.0
  %4815 = vmatprep.subr.mxu0 0.0
  %4816 = vmatpush1.msra.mxu0 0.0
  %4817 = vmatprep.subr.mxu0 0.0
  %4818 = vmatpush1.msra.mxu0 0.0
  %4819 = vmatprep.subr.mxu0 0.0
  %4820 = vmatpush1.msra.mxu0 0.0
  %4821 = vmatprep.subr.mxu0 0.0
  %4822 = vmatpush1.msra.mxu0 0.0
  %4823 = vmatprep.subr.mxu0 0.0
  %4824 = vmatpush1.msra.mxu0 0.0
  %4825 = vmatprep.subr.mxu0 0.0
  %4826 = vmatpush1.msra.mxu0 0.0
  %4827 = vmatprep.subr.mxu0 0.0
  %4828 = vmatpush1.msra.mxu0 0.0
  %4829 = vmatprep.subr.mxu0 0.0
  %4830 = vmatpush1.msra.mxu0 0.0
  %4831 = vmatprep.subr.mxu0 0.0
  %4832 = vmatpush1.msra.mxu0 0.0
  %4833 = vmatprep.subr.mxu0 0.0
  %4834 = vmatpush1.msra.mxu0 0.0
  %4835 = vmatprep.subr.mxu0 0.0
  %4836 = vmatpush1.msra.mxu0 0.0
  %4837 = vmatprep.subr.mxu0 0.0
  %4838 = vmatpush1.msra.mxu0 0.0
  %4839 = vmatprep.subr.mxu0 0.0
  %4840 = vmatpush1.msra.mxu0 0.0
  %4841 = vmatprep.subr.mxu0 0.0
  %4842 = vmatpush1.msra.mxu0 0.0
  %4843 = vmatprep.subr.mxu0 0.0
  %4844 = vmatpush1.msra.mxu0 0.0
  %4845 = vmatprep.subr.mxu0 0.0
  %4846 = vmatpush1.msra.mxu0 0.0
  %4847 = vmatprep.subr.mxu0 0.0
  %4848 = vmatpush1.msra.mxu0 0.0
  %4849 = vmatprep.subr.mxu0 0.0
  %4850 = vmatpush1.msra.mxu0 0.0
  %4851 = vmatprep.subr.mxu0 0.0
  %4852 = vmatpush1.msra.mxu0 0.0
  %4853 = vmatprep.subr.mxu0 0.0
  %4854 = vmatpush1.msra.mxu0 0.0
  %4855 = vmatprep.subr.mxu0 0.0
  %4856 = vmatpush1.msra.mxu0 0.0
  %4857 = vmatprep.mubr.f32.mxu0 0.0
  %4858 = vmatmul.mubr.f32.gmra.mrb[0].mxu0 %v4791
  %v4859 = vpop.f32.mrb[0].mxu0
  %v4860 = vadd.f32 0.0, %v4859
  %v4861 = vpop.f32.mrb[0].mxu0
  %4862 = vdwg.mxu0
  %s4863 = scalar_lea.vmem %s11, 80
  %v4864 = vld [vmem:[%s4863] sm:$0xff]
  %v4865 = vld [vmem:[%s4863 + $0x8] sm:$0xff]
  %v4866 = vld [vmem:[%s4863 + $0x10] sm:$0xff]
  %v4867 = vld [vmem:[%s4863 + $0x18] sm:$0xff]
  %v4868 = vld [vmem:[%s4863 + $0x20] sm:$0xff]
  %v4869 = vld [vmem:[%s4863 + $0x28] sm:$0xff]
  %v4870 = vld [vmem:[%s4863 + $0x30] sm:$0xff]
  %v4871 = vld [vmem:[%s4863 + $0x38] sm:$0xff]
  %v4872 = vld [vmem:[%s4863 + $0x40] sm:$0xff]
  %v4873 = vld [vmem:[%s4863 + $0x48] sm:$0xff]
  %vm4874 = vcmask 654336
  %v4876 = vsel %vm4874, %v4860, 0
  %4878 = vmatprep.subr.mxu0 0.0
  %4879 = vmatpush1.msra.mxu0 %v4864
  %4880 = vmatprep.subr.mxu0 0.0
  %4881 = vmatpush1.msra.mxu0 %v4865
  %4882 = vmatprep.subr.mxu0 0.0
  %4883 = vmatpush1.msra.mxu0 %v4866
  %4884 = vmatprep.subr.mxu0 0.0
  %4885 = vmatpush1.msra.mxu0 %v4867
  %4886 = vmatprep.subr.mxu0 0.0
  %4887 = vmatpush1.msra.mxu0 %v4868
  %4888 = vmatprep.subr.mxu0 0.0
  %4889 = vmatpush1.msra.mxu0 %v4869
  %4890 = vmatprep.subr.mxu0 0.0
  %4891 = vmatpush1.msra.mxu0 %v4870
  %4892 = vmatprep.subr.mxu0 0.0
  %4893 = vmatpush1.msra.mxu0 %v4871
  %4894 = vmatprep.subr.mxu0 0.0
  %4895 = vmatpush1.msra.mxu0 %v4872
  %4896 = vmatprep.subr.mxu0 0.0
  %4897 = vmatpush1.msra.mxu0 %v4873
  %4898 = vmatprep.subr.mxu0 0.0
  %4899 = vmatpush1.msra.mxu0 0.0
  %4900 = vmatprep.subr.mxu0 0.0
  %4901 = vmatpush1.msra.mxu0 0.0
  %4902 = vmatprep.subr.mxu0 0.0
  %4903 = vmatpush1.msra.mxu0 0.0
  %4904 = vmatprep.subr.mxu0 0.0
  %4905 = vmatpush1.msra.mxu0 0.0
  %4906 = vmatprep.subr.mxu0 0.0
  %4907 = vmatpush1.msra.mxu0 0.0
  %4908 = vmatprep.subr.mxu0 0.0
  %4909 = vmatpush1.msra.mxu0 0.0
  %4910 = vmatprep.subr.mxu0 0.0
  %4911 = vmatpush1.msra.mxu0 0.0
  %4912 = vmatprep.subr.mxu0 0.0
  %4913 = vmatpush1.msra.mxu0 0.0
  %4914 = vmatprep.subr.mxu0 0.0
  %4915 = vmatpush1.msra.mxu0 0.0
  %4916 = vmatprep.subr.mxu0 0.0
  %4917 = vmatpush1.msra.mxu0 0.0
  %4918 = vmatprep.subr.mxu0 0.0
  %4919 = vmatpush1.msra.mxu0 0.0
  %4920 = vmatprep.subr.mxu0 0.0
  %4921 = vmatpush1.msra.mxu0 0.0
  %4922 = vmatprep.subr.mxu0 0.0
  %4923 = vmatpush1.msra.mxu0 0.0
  %4924 = vmatprep.subr.mxu0 0.0
  %4925 = vmatpush1.msra.mxu0 0.0
  %4926 = vmatprep.subr.mxu0 0.0
  %4927 = vmatpush1.msra.mxu0 0.0
  %4928 = vmatprep.subr.mxu0 0.0
  %4929 = vmatpush1.msra.mxu0 0.0
  %4930 = vmatprep.subr.mxu0 0.0
  %4931 = vmatpush1.msra.mxu0 0.0
  %4932 = vmatprep.subr.mxu0 0.0
  %4933 = vmatpush1.msra.mxu0 0.0
  %4934 = vmatprep.subr.mxu0 0.0
  %4935 = vmatpush1.msra.mxu0 0.0
  %4936 = vmatprep.subr.mxu0 0.0
  %4937 = vmatpush1.msra.mxu0 0.0
  %4938 = vmatprep.subr.mxu0 0.0
  %4939 = vmatpush1.msra.mxu0 0.0
  %4940 = vmatprep.subr.mxu0 0.0
  %4941 = vmatpush1.msra.mxu0 0.0
  %4942 = vmatprep.mubr.f32.mxu0 0.0
  %4943 = vmatmul.mubr.f32.gmra.mrb[0].mxu0 %v4876
  %v4944 = vpop.f32.mrb[0].mxu0
  %v4945 = vadd.f32 0.0, %v4944
  %v4946 = vpop.f32.mrb[0].mxu0
  %4947 = vdwg.mxu0
  %v4949 = vsel %vm4874, %v4775, 0
  %4951 = vmatprep.subr.mxu0 0.0
  %4952 = vmatpush1.msra.mxu0 %v4778
  %4953 = vmatprep.subr.mxu0 0.0
  %4954 = vmatpush1.msra.mxu0 %v4779
  %4955 = vmatprep.subr.mxu0 0.0
  %4956 = vmatpush1.msra.mxu0 %v4780
  %4957 = vmatprep.subr.mxu0 0.0
  %4958 = vmatpush1.msra.mxu0 %v4781
  %4959 = vmatprep.subr.mxu0 0.0
  %4960 = vmatpush1.msra.mxu0 %v4782
  %4961 = vmatprep.subr.mxu0 0.0
  %4962 = vmatpush1.msra.mxu0 %v4783
  %4963 = vmatprep.subr.mxu0 0.0
  %4964 = vmatpush1.msra.mxu0 %v4784
  %4965 = vmatprep.subr.mxu0 0.0
  %4966 = vmatpush1.msra.mxu0 %v4785
  %4967 = vmatprep.subr.mxu0 0.0
  %4968 = vmatpush1.msra.mxu0 %v4786
  %4969 = vmatprep.subr.mxu0 0.0
  %4970 = vmatpush1.msra.mxu0 %v4787
  %4971 = vmatprep.subr.mxu0 0.0
  %4972 = vmatpush1.msra.mxu0 0.0
  %4973 = vmatprep.subr.mxu0 0.0
  %4974 = vmatpush1.msra.mxu0 0.0
  %4975 = vmatprep.subr.mxu0 0.0
  %4976 = vmatpush1.msra.mxu0 0.0
  %4977 = vmatprep.subr.mxu0 0.0
  %4978 = vmatpush1.msra.mxu0 0.0
  %4979 = vmatprep.subr.mxu0 0.0
  %4980 = vmatpush1.msra.mxu0 0.0
  %4981 = vmatprep.subr.mxu0 0.0
  %4982 = vmatpush1.msra.mxu0 0.0
  %4983 = vmatprep.subr.mxu0 0.0
  %4984 = vmatpush1.msra.mxu0 0.0
  %4985 = vmatprep.subr.mxu0 0.0
  %4986 = vmatpush1.msra.mxu0 0.0
  %4987 = vmatprep.subr.mxu0 0.0
  %4988 = vmatpush1.msra.mxu0 0.0
  %4989 = vmatprep.subr.mxu0 0.0
  %4990 = vmatpush1.msra.mxu0 0.0
  %4991 = vmatprep.subr.mxu0 0.0
  %4992 = vmatpush1.msra.mxu0 0.0
  %4993 = vmatprep.subr.mxu0 0.0
  %4994 = vmatpush1.msra.mxu0 0.0
  %4995 = vmatprep.subr.mxu0 0.0
  %4996 = vmatpush1.msra.mxu0 0.0
  %4997 = vmatprep.subr.mxu0 0.0
  %4998 = vmatpush1.msra.mxu0 0.0
  %4999 = vmatprep.subr.mxu0 0.0
  %5000 = vmatpush1.msra.mxu0 0.0
  %5001 = vmatprep.subr.mxu0 0.0
  %5002 = vmatpush1.msra.mxu0 0.0
  %5003 = vmatprep.subr.mxu0 0.0
  %5004 = vmatpush1.msra.mxu0 0.0
  %5005 = vmatprep.subr.mxu0 0.0
  %5006 = vmatpush1.msra.mxu0 0.0
  %5007 = vmatprep.subr.mxu0 0.0
  %5008 = vmatpush1.msra.mxu0 0.0
  %5009 = vmatprep.subr.mxu0 0.0
  %5010 = vmatpush1.msra.mxu0 0.0
  %5011 = vmatprep.subr.mxu0 0.0
  %5012 = vmatpush1.msra.mxu0 0.0
  %5013 = vmatprep.subr.mxu0 0.0
  %5014 = vmatpush1.msra.mxu0 0.0
  %5015 = vmatprep.mubr.f32.mxu0 0.0
  %5016 = vmatmul.mubr.f32.gmra.mrb[0].mxu0 %v4949
  %v5017 = vpop.f32.mrb[0].mxu0
  %v5018 = vadd.f32 %v4945, %v5017
  %v5019 = vpop.f32.mrb[0].mxu0
  %5020 = vdwg.mxu0
  %s5021 = scalar_lea.vmem %s10, 16
  %v5022 = vld [vmem:[%s5021] sm:$0xff]
  %v5024 = vsel %vm4492, %v5022, 0
  %5026 = vmatprep.subr.mxu0 0.0
  %5027 = vmatpush1.msra.mxu0 %v4700
  %5028 = vmatprep.subr.mxu0 0.0
  %5029 = vmatpush1.msra.mxu0 %v4701
  %5030 = vmatprep.subr.mxu0 0.0
  %5031 = vmatpush1.msra.mxu0 %v4702
  %5032 = vmatprep.subr.mxu0 0.0
  %5033 = vmatpush1.msra.mxu0 %v4703
  %5034 = vmatprep.subr.mxu0 0.0
  %5035 = vmatpush1.msra.mxu0 0.0
  %5036 = vmatprep.subr.mxu0 0.0
  %5037 = vmatpush1.msra.mxu0 0.0
  %5038 = vmatprep.subr.mxu0 0.0
  %5039 = vmatpush1.msra.mxu0 0.0
  %5040 = vmatprep.subr.mxu0 0.0
  %5041 = vmatpush1.msra.mxu0 0.0
  %5042 = vmatprep.subr.mxu0 0.0
  %5043 = vmatpush1.msra.mxu0 0.0
  %5044 = vmatprep.subr.mxu0 0.0
  %5045 = vmatpush1.msra.mxu0 0.0
  %5046 = vmatprep.subr.mxu0 0.0
  %5047 = vmatpush1.msra.mxu0 0.0
  %5048 = vmatprep.subr.mxu0 0.0
  %5049 = vmatpush1.msra.mxu0 0.0
  %5050 = vmatprep.subr.mxu0 0.0
  %5051 = vmatpush1.msra.mxu0 0.0
  %5052 = vmatprep.subr.mxu0 0.0
  %5053 = vmatpush1.msra.mxu0 0.0
  %5054 = vmatprep.subr.mxu0 0.0
  %5055 = vmatpush1.msra.mxu0 0.0
  %5056 = vmatprep.subr.mxu0 0.0
  %5057 = vmatpush1.msra.mxu0 0.0
  %5058 = vmatprep.subr.mxu0 0.0
  %5059 = vmatpush1.msra.mxu0 0.0
  %5060 = vmatprep.subr.mxu0 0.0
  %5061 = vmatpush1.msra.mxu0 0.0
  %5062 = vmatprep.subr.mxu0 0.0
  %5063 = vmatpush1.msra.mxu0 0.0
  %5064 = vmatprep.subr.mxu0 0.0
  %5065 = vmatpush1.msra.mxu0 0.0
  %5066 = vmatprep.subr.mxu0 0.0
  %5067 = vmatpush1.msra.mxu0 0.0
  %5068 = vmatprep.subr.mxu0 0.0
  %5069 = vmatpush1.msra.mxu0 0.0
  %5070 = vmatprep.subr.mxu0 0.0
  %5071 = vmatpush1.msra.mxu0 0.0
  %5072 = vmatprep.subr.mxu0 0.0
  %5073 = vmatpush1.msra.mxu0 0.0
  %5074 = vmatprep.subr.mxu0 0.0
  %5075 = vmatpush1.msra.mxu0 0.0
  %5076 = vmatprep.subr.mxu0 0.0
  %5077 = vmatpush1.msra.mxu0 0.0
  %5078 = vmatprep.subr.mxu0 0.0
  %5079 = vmatpush1.msra.mxu0 0.0
  %5080 = vmatprep.subr.mxu0 0.0
  %5081 = vmatpush1.msra.mxu0 0.0
  %5082 = vmatprep.subr.mxu0 0.0
  %5083 = vmatpush1.msra.mxu0 0.0
  %5084 = vmatprep.subr.mxu0 0.0
  %5085 = vmatpush1.msra.mxu0 0.0
  %5086 = vmatprep.subr.mxu0 0.0
  %5087 = vmatpush1.msra.mxu0 0.0
  %5088 = vmatprep.subr.mxu0 0.0
  %5089 = vmatpush1.msra.mxu0 0.0
  %5090 = vmatprep.mubr.f32.mxu0 0.0
  %5091 = vmatmul.mubr.f32.gmra.mrb[0].mxu0 %v5024
  %v5092 = vpop.f32.mrb[0].mxu0
  %v5093 = vadd.f32 0.0, %v5092
  %v5094 = vpop.f32.mrb[0].mxu0
  %5095 = vdwg.mxu0
  %s5096 = scalar_lea.vmem %s11, 160
  %v5097 = vld [vmem:[%s5096] sm:$0xff]
  %v5098 = vld [vmem:[%s5096 + $0x8] sm:$0xff]
  %v5099 = vld [vmem:[%s5096 + $0x10] sm:$0xff]
  %v5100 = vld [vmem:[%s5096 + $0x18] sm:$0xff]
  %v5101 = vld [vmem:[%s5096 + $0x20] sm:$0xff]
  %v5102 = vld [vmem:[%s5096 + $0x28] sm:$0xff]
  %v5103 = vld [vmem:[%s5096 + $0x30] sm:$0xff]
  %v5104 = vld [vmem:[%s5096 + $0x38] sm:$0xff]
  %v5105 = vld [vmem:[%s5096 + $0x40] sm:$0xff]
  %v5106 = vld [vmem:[%s5096 + $0x48] sm:$0xff]
  %v5108 = vsel %vm4874, %v5093, 0
  %5110 = vmatprep.subr.mxu0 0.0
  %5111 = vmatpush1.msra.mxu0 %v5097
  %5112 = vmatprep.subr.mxu0 0.0
  %5113 = vmatpush1.msra.mxu0 %v5098
  %5114 = vmatprep.subr.mxu0 0.0
  %5115 = vmatpush1.msra.mxu0 %v5099
  %5116 = vmatprep.subr.mxu0 0.0
  %5117 = vmatpush1.msra.mxu0 %v5100
  %5118 = vmatprep.subr.mxu0 0.0
  %5119 = vmatpush1.msra.mxu0 %v5101
  %5120 = vmatprep.subr.mxu0 0.0
  %5121 = vmatpush1.msra.mxu0 %v5102
  %5122 = vmatprep.subr.mxu0 0.0
  %5123 = vmatpush1.msra.mxu0 %v5103
  %5124 = vmatprep.subr.mxu0 0.0
  %5125 = vmatpush1.msra.mxu0 %v5104
  %5126 = vmatprep.subr.mxu0 0.0
  %5127 = vmatpush1.msra.mxu0 %v5105
  %5128 = vmatprep.subr.mxu0 0.0
  %5129 = vmatpush1.msra.mxu0 %v5106
  %5130 = vmatprep.subr.mxu0 0.0
  %5131 = vmatpush1.msra.mxu0 0.0
  %5132 = vmatprep.subr.mxu0 0.0
  %5133 = vmatpush1.msra.mxu0 0.0
  %5134 = vmatprep.subr.mxu0 0.0
  %5135 = vmatpush1.msra.mxu0 0.0
  %5136 = vmatprep.subr.mxu0 0.0
  %5137 = vmatpush1.msra.mxu0 0.0
  %5138 = vmatprep.subr.mxu0 0.0
  %5139 = vmatpush1.msra.mxu0 0.0
  %5140 = vmatprep.subr.mxu0 0.0
  %5141 = vmatpush1.msra.mxu0 0.0
  %5142 = vmatprep.subr.mxu0 0.0
  %5143 = vmatpush1.msra.mxu0 0.0
  %5144 = vmatprep.subr.mxu0 0.0
  %5145 = vmatpush1.msra.mxu0 0.0
  %5146 = vmatprep.subr.mxu0 0.0
  %5147 = vmatpush1.msra.mxu0 0.0
  %5148 = vmatprep.subr.mxu0 0.0
  %5149 = vmatpush1.msra.mxu0 0.0
  %5150 = vmatprep.subr.mxu0 0.0
  %5151 = vmatpush1.msra.mxu0 0.0
  %5152 = vmatprep.subr.mxu0 0.0
  %5153 = vmatpush1.msra.mxu0 0.0
  %5154 = vmatprep.subr.mxu0 0.0
  %5155 = vmatpush1.msra.mxu0 0.0
  %5156 = vmatprep.subr.mxu0 0.0
  %5157 = vmatpush1.msra.mxu0 0.0
  %5158 = vmatprep.subr.mxu0 0.0
  %5159 = vmatpush1.msra.mxu0 0.0
  %5160 = vmatprep.subr.mxu0 0.0
  %5161 = vmatpush1.msra.mxu0 0.0
  %5162 = vmatprep.subr.mxu0 0.0
  %5163 = vmatpush1.msra.mxu0 0.0
  %5164 = vmatprep.subr.mxu0 0.0
  %5165 = vmatpush1.msra.mxu0 0.0
  %5166 = vmatprep.subr.mxu0 0.0
  %5167 = vmatpush1.msra.mxu0 0.0
  %5168 = vmatprep.subr.mxu0 0.0
  %5169 = vmatpush1.msra.mxu0 0.0
  %5170 = vmatprep.subr.mxu0 0.0
  %5171 = vmatpush1.msra.mxu0 0.0
  %5172 = vmatprep.subr.mxu0 0.0
  %5173 = vmatpush1.msra.mxu0 0.0
  %5174 = vmatprep.mubr.f32.mxu0 0.0
  %5175 = vmatmul.mubr.f32.gmra.mrb[0].mxu0 %v5108
  %v5176 = vpop.f32.mrb[0].mxu0
  %v5177 = vadd.f32 0.0, %v5176
  %v5178 = vpop.f32.mrb[0].mxu0
  %5179 = vdwg.mxu0
  %v5180 = vadd.f32 %v5018, %v5177
  %s5181 = scalar_lea.vmem %s10, 24
  %v5182 = vld [vmem:[%s5181] sm:$0xff]
  %v5184 = vsel %vm4492, %v5182, 0
  %5186 = vmatprep.subr.mxu0 0.0
  %5187 = vmatpush1.msra.mxu0 %v4700
  %5188 = vmatprep.subr.mxu0 0.0
  %5189 = vmatpush1.msra.mxu0 %v4701
  %5190 = vmatprep.subr.mxu0 0.0
  %5191 = vmatpush1.msra.mxu0 %v4702
  %5192 = vmatprep.subr.mxu0 0.0
  %5193 = vmatpush1.msra.mxu0 %v4703
  %5194 = vmatprep.subr.mxu0 0.0
  %5195 = vmatpush1.msra.mxu0 0.0
  %5196 = vmatprep.subr.mxu0 0.0
  %5197 = vmatpush1.msra.mxu0 0.0
  %5198 = vmatprep.subr.mxu0 0.0
  %5199 = vmatpush1.msra.mxu0 0.0
  %5200 = vmatprep.subr.mxu0 0.0
  %5201 = vmatpush1.msra.mxu0 0.0
  %5202 = vmatprep.subr.mxu0 0.0
  %5203 = vmatpush1.msra.mxu0 0.0
  %5204 = vmatprep.subr.mxu0 0.0
  %5205 = vmatpush1.msra.mxu0 0.0
  %5206 = vmatprep.subr.mxu0 0.0
  %5207 = vmatpush1.msra.mxu0 0.0
  %5208 = vmatprep.subr.mxu0 0.0
  %5209 = vmatpush1.msra.mxu0 0.0
  %5210 = vmatprep.subr.mxu0 0.0
  %5211 = vmatpush1.msra.mxu0 0.0
  %5212 = vmatprep.subr.mxu0 0.0
  %5213 = vmatpush1.msra.mxu0 0.0
  %5214 = vmatprep.subr.mxu0 0.0
  %5215 = vmatpush1.msra.mxu0 0.0
  %5216 = vmatprep.subr.mxu0 0.0
  %5217 = vmatpush1.msra.mxu0 0.0
  %5218 = vmatprep.subr.mxu0 0.0
  %5219 = vmatpush1.msra.mxu0 0.0
  %5220 = vmatprep.subr.mxu0 0.0
  %5221 = vmatpush1.msra.mxu0 0.0
  %5222 = vmatprep.subr.mxu0 0.0
  %5223 = vmatpush1.msra.mxu0 0.0
  %5224 = vmatprep.subr.mxu0 0.0
  %5225 = vmatpush1.msra.mxu0 0.0
  %5226 = vmatprep.subr.mxu0 0.0
  %5227 = vmatpush1.msra.mxu0 0.0
  %5228 = vmatprep.subr.mxu0 0.0
  %5229 = vmatpush1.msra.mxu0 0.0
  %5230 = vmatprep.subr.mxu0 0.0
  %5231 = vmatpush1.msra.mxu0 0.0
  %5232 = vmatprep.subr.mxu0 0.0
  %5233 = vmatpush1.msra.mxu0 0.0
  %5234 = vmatprep.subr.mxu0 0.0
  %5235 = vmatpush1.msra.mxu0 0.0
  %5236 = vmatprep.subr.mxu0 0.0
  %5237 = vmatpush1.msra.mxu0 0.0
  %5238 = vmatprep.subr.mxu0 0.0
  %5239 = vmatpush1.msra.mxu0 0.0
  %5240 = vmatprep.subr.mxu0 0.0
  %5241 = vmatpush1.msra.mxu0 0.0
  %5242 = vmatprep.subr.mxu0 0.0
  %5243 = vmatpush1.msra.mxu0 0.0
  %5244 = vmatprep.subr.mxu0 0.0
  %5245 = vmatpush1.msra.mxu0 0.0
  %5246 = vmatprep.subr.mxu0 0.0
  %5247 = vmatpush1.msra.mxu0 0.0
  %5248 = vmatprep.subr.mxu0 0.0
  %5249 = vmatpush1.msra.mxu0 0.0
  %5250 = vmatprep.mubr.f32.mxu0 0.0
  %5251 = vmatmul.mubr.f32.gmra.mrb[0].mxu0 %v5184
  %v5252 = vpop.f32.mrb[0].mxu0
  %v5253 = vadd.f32 0.0, %v5252
  %v5254 = vpop.f32.mrb[0].mxu0
  %5255 = vdwg.mxu0
  %s5256 = scalar_lea.vmem %s11, 240
  %v5257 = vld [vmem:[%s5256] sm:$0xff]
  %v5258 = vld [vmem:[%s5256 + $0x8] sm:$0xff]
  %v5259 = vld [vmem:[%s5256 + $0x10] sm:$0xff]
  %v5260 = vld [vmem:[%s5256 + $0x18] sm:$0xff]
  %v5261 = vld [vmem:[%s5256 + $0x20] sm:$0xff]
  %v5262 = vld [vmem:[%s5256 + $0x28] sm:$0xff]
  %v5263 = vld [vmem:[%s5256 + $0x30] sm:$0xff]
  %v5264 = vld [vmem:[%s5256 + $0x38] sm:$0xff]
  %v5265 = vld [vmem:[%s5256 + $0x40] sm:$0xff]
  %v5266 = vld [vmem:[%s5256 + $0x48] sm:$0xff]
  %v5268 = vsel %vm4874, %v5253, 0
  %5270 = vmatprep.subr.mxu0 0.0
  %5271 = vmatpush1.msra.mxu0 %v5257
  %5272 = vmatprep.subr.mxu0 0.0
  %5273 = vmatpush1.msra.mxu0 %v5258
  %5274 = vmatprep.subr.mxu0 0.0
  %5275 = vmatpush1.msra.mxu0 %v5259
  %5276 = vmatprep.subr.mxu0 0.0
  %5277 = vmatpush1.msra.mxu0 %v5260
  %5278 = vmatprep.subr.mxu0 0.0
  %5279 = vmatpush1.msra.mxu0 %v5261
  %5280 = vmatprep.subr.mxu0 0.0
  %5281 = vmatpush1.msra.mxu0 %v5262
  %5282 = vmatprep.subr.mxu0 0.0
  %5283 = vmatpush1.msra.mxu0 %v5263
  %5284 = vmatprep.subr.mxu0 0.0
  %5285 = vmatpush1.msra.mxu0 %v5264
  %5286 = vmatprep.subr.mxu0 0.0
  %5287 = vmatpush1.msra.mxu0 %v5265
  %5288 = vmatprep.subr.mxu0 0.0
  %5289 = vmatpush1.msra.mxu0 %v5266
  %5290 = vmatprep.subr.mxu0 0.0
  %5291 = vmatpush1.msra.mxu0 0.0
  %5292 = vmatprep.subr.mxu0 0.0
  %5293 = vmatpush1.msra.mxu0 0.0
  %5294 = vmatprep.subr.mxu0 0.0
  %5295 = vmatpush1.msra.mxu0 0.0
  %5296 = vmatprep.subr.mxu0 0.0
  %5297 = vmatpush1.msra.mxu0 0.0
  %5298 = vmatprep.subr.mxu0 0.0
  %5299 = vmatpush1.msra.mxu0 0.0
  %5300 = vmatprep.subr.mxu0 0.0
  %5301 = vmatpush1.msra.mxu0 0.0
  %5302 = vmatprep.subr.mxu0 0.0
  %5303 = vmatpush1.msra.mxu0 0.0
  %5304 = vmatprep.subr.mxu0 0.0
  %5305 = vmatpush1.msra.mxu0 0.0
  %5306 = vmatprep.subr.mxu0 0.0
  %5307 = vmatpush1.msra.mxu0 0.0
  %5308 = vmatprep.subr.mxu0 0.0
  %5309 = vmatpush1.msra.mxu0 0.0
  %5310 = vmatprep.subr.mxu0 0.0
  %5311 = vmatpush1.msra.mxu0 0.0
  %5312 = vmatprep.subr.mxu0 0.0
  %5313 = vmatpush1.msra.mxu0 0.0
  %5314 = vmatprep.subr.mxu0 0.0
  %5315 = vmatpush1.msra.mxu0 0.0
  %5316 = vmatprep.subr.mxu0 0.0
  %5317 = vmatpush1.msra.mxu0 0.0
  %5318 = vmatprep.subr.mxu0 0.0
  %5319 = vmatpush1.msra.mxu0 0.0
  %5320 = vmatprep.subr.mxu0 0.0
  %5321 = vmatpush1.msra.mxu0 0.0
  %5322 = vmatprep.subr.mxu0 0.0
  %5323 = vmatpush1.msra.mxu0 0.0
  %5324 = vmatprep.subr.mxu0 0.0
  %5325 = vmatpush1.msra.mxu0 0.0
  %5326 = vmatprep.subr.mxu0 0.0
  %5327 = vmatpush1.msra.mxu0 0.0
  %5328 = vmatprep.subr.mxu0 0.0
  %5329 = vmatpush1.msra.mxu0 0.0
  %5330 = vmatprep.subr.mxu0 0.0
  %5331 = vmatpush1.msra.mxu0 0.0
  %5332 = vmatprep.subr.mxu0 0.0
  %5333 = vmatpush1.msra.mxu0 0.0
  %5334 = vmatprep.mubr.f32.mxu0 0.0
  %5335 = vmatmul.mubr.f32.gmra.mrb[0].mxu0 %v5268
  %v5336 = vpop.f32.mrb[0].mxu0
  %v5337 = vadd.f32 0.0, %v5336
  %v5338 = vpop.f32.mrb[0].mxu0
  %5339 = vdwg.mxu0
  %v5340 = vadd.f32 %v5180, %v5337
  %v5341 = vld [vmem:[%s12] sm:$0x1]
  %v5343 = vlaneseq
  %v5344 = vshrl.u32 %v5343, 7
  %v5345 = vsub.s32 0, %v5344
  %v5346 = vrot.slane %v5341, %v5345
  %v5348 = vadd.f32 %v5340, %v5346
  %v5349 = vmax.f32 %v5348, 0.0
  %v5350 = vld [vmem:[%s13] sm:$0xff]
  %v5351 = vld [vmem:[%s13 + $0x8] sm:$0xff]
  %v5352 = vld [vmem:[%s13 + $0x10] sm:$0xff]
  %v5353 = vld [vmem:[%s13 + $0x18] sm:$0xff]
  %v5354 = vld [vmem:[%s13 + $0x20] sm:$0xff]
  %v5355 = vld [vmem:[%s13 + $0x28] sm:$0xff]
  %v5356 = vld [vmem:[%s13 + $0x30] sm:$0x3]
  %v5357 = vld [vmem:[%s14] sm:$0x1]
  %v5359 = vlaneseq
  %v5360 = vshrl.u32 %v5359, 7
  %v5361 = vsub.s32 0, %v5360
  %v5362 = vrot.slane %v5357, %v5361
  %vm5364 = vcmask 408576
  %v5366 = vsel %vm5364, %v5349, 0
  %vm5368 = vcmask 1041408
  %v5370 = vsel %vm5368, %v5356, 0
  %5372 = vmatprep.subr.mxu0 0.0
  %5373 = vmatpush1.msra.mxu0 %v5350
  %5374 = vmatprep.subr.mxu0 0.0
  %5375 = vmatpush1.msra.mxu0 %v5351
  %5376 = vmatprep.subr.mxu0 0.0
  %5377 = vmatpush1.msra.mxu0 %v5352
  %5378 = vmatprep.subr.mxu0 0.0
  %5379 = vmatpush1.msra.mxu0 %v5353
  %5380 = vmatprep.subr.mxu0 0.0
  %5381 = vmatpush1.msra.mxu0 %v5354
  %5382 = vmatprep.subr.mxu0 0.0
  %5383 = vmatpush1.msra.mxu0 %v5355
  %5384 = vmatprep.subr.mxu0 0.0
  %5385 = vmatpush1.msra.mxu0 %v5370
  %5386 = vmatprep.subr.mxu0 0.0
  %5387 = vmatpush1.msra.mxu0 0.0
  %5388 = vmatprep.subr.mxu0 0.0
  %5389 = vmatpush1.msra.mxu0 0.0
  %5390 = vmatprep.subr.mxu0 0.0
  %5391 = vmatpush1.msra.mxu0 0.0
  %5392 = vmatprep.subr.mxu0 0.0
  %5393 = vmatpush1.msra.mxu0 0.0
  %5394 = vmatprep.subr.mxu0 0.0
  %5395 = vmatpush1.msra.mxu0 0.0
  %5396 = vmatprep.subr.mxu0 0.0
  %5397 = vmatpush1.msra.mxu0 0.0
  %5398 = vmatprep.subr.mxu0 0.0
  %5399 = vmatpush1.msra.mxu0 0.0
  %5400 = vmatprep.subr.mxu0 0.0
  %5401 = vmatpush1.msra.mxu0 0.0
  %5402 = vmatprep.subr.mxu0 0.0
  %5403 = vmatpush1.msra.mxu0 0.0
  %5404 = vmatprep.subr.mxu0 0.0
  %5405 = vmatpush1.msra.mxu0 0.0
  %5406 = vmatprep.subr.mxu0 0.0
  %5407 = vmatpush1.msra.mxu0 0.0
  %5408 = vmatprep.subr.mxu0 0.0
  %5409 = vmatpush1.msra.mxu0 0.0
  %5410 = vmatprep.subr.mxu0 0.0
  %5411 = vmatpush1.msra.mxu0 0.0
  %5412 = vmatprep.subr.mxu0 0.0
  %5413 = vmatpush1.msra.mxu0 0.0
  %5414 = vmatprep.subr.mxu0 0.0
  %5415 = vmatpush1.msra.mxu0 0.0
  %5416 = vmatprep.subr.mxu0 0.0
  %5417 = vmatpush1.msra.mxu0 0.0
  %5418 = vmatprep.subr.mxu0 0.0
  %5419 = vmatpush1.msra.mxu0 0.0
  %5420 = vmatprep.subr.mxu0 0.0
  %5421 = vmatpush1.msra.mxu0 0.0
  %5422 = vmatprep.subr.mxu0 0.0
  %5423 = vmatpush1.msra.mxu0 0.0
  %5424 = vmatprep.subr.mxu0 0.0
  %5425 = vmatpush1.msra.mxu0 0.0
  %5426 = vmatprep.subr.mxu0 0.0
  %5427 = vmatpush1.msra.mxu0 0.0
  %5428 = vmatprep.subr.mxu0 0.0
  %5429 = vmatpush1.msra.mxu0 0.0
  %5430 = vmatprep.subr.mxu0 0.0
  %5431 = vmatpush1.msra.mxu0 0.0
  %5432 = vmatprep.subr.mxu0 0.0
  %5433 = vmatpush1.msra.mxu0 0.0
  %5434 = vmatprep.subr.mxu0 0.0
  %5435 = vmatpush1.msra.mxu0 0.0
  %5436 = vmatprep.mubr.f32.mxu0 0.0
  %5437 = vmatmul.mubr.f32.gmra.mrb[0].mxu0 %v5366
  %v5438 = vpop.f32.mrb[0].mxu0
  %v5439 = vadd.f32 %v5362, %v5438
  %v5440 = vpop.f32.mrb[0].mxu0
  %5441 = vdwg.mxu0
  %vm5442 = vcmask 80896
  %v5443 = vsel %vm5442, %v5439, -inf
  %5444 = vmax.xlane.f32.xlu0 %v5443
  %v5445 = vpop.xlane.xlu0 %5444
  %v5446 = vsub.f32 %v5439, %v5445
  %v5447 = vmul.f32 %v5446, 1.442695
  %v5448 = vpow.pop %v5447
  %v5449 = vsel %vm5442, %v5448, 0.0
  %5450 = vadd.xlane.f32.xlu0 %v5449
  %v5451 = vpop.xlane.xlu0 %5450
  %v5452 = vlog2.pop %v5451
  %v5453 = vmul.f32 %v5452, 0.6931472
  %v5454 = vsub.f32 %v5446, %v5453
  %5455 = vst.msk [vmem:[%s15] sm:$0xff] %vm5442, %v5454
  // Predicated region
  $region62: #{net_forward.1} parent=0 // pred_check
    _
  $region63: #{net_forward.1} parent=0 // pred_check_branch
    %5457 = sbr.rel (0) target = $region65
  $region64: #{net_forward.1} parent=0 // pred_region
    _
  $region65: #{net_forward.1} parent=0 // pred_fallthru
    _
  // Predicated region
  $region66: #{net_forward.1} parent=0 // pred_check
    _
  $region67: #{net_forward.1} parent=0 // pred_check_branch
    %5459 = sbr.rel (0) target = $region69
  $region68: #{net_forward.1} parent=0 // pred_region
    _
  $region69: #{net_forward.1} parent=0 // pred_fallthru
    _

</llo_original>
